<compile_context>
chip_gen: v7x
topology: tpu7x:2x2x1
jax: 0.10.0
libtpu: 0.0.40
codegen_flags: <defaults>
</compile_context>

<pallas_src>
import functools

import jax
import jax.numpy as jnp
from jax import lax
from jax.experimental import pallas as pl
from jax.experimental.pallas import tpu as pltpu


def _round_up(x, m):
    return ((x + m - 1) // m) * m


def volume_render_kernel(depth_ref, density_ref, feat_ref, out_ref, *, n_feat):
    depth = depth_ref[...]            # (R, P) f32
    density = density_ref[...]        # (R, P) f32
    R, P = depth.shape

    # Neighbour-difference matrix D[i, j] = +1 if i == j+1, -1 if i == j, so
    # dot(depth, D)[:, j] = depth[:, j+1] - depth[:, j].  Column P-1 is overridden
    # with 1e10 (last real sample absorbs everything), matching the PyTorch cat.
    # Built in-kernel (tiny VPU work) -> no extra DMA stream; uses the MXU (which
    # has plenty of slack) instead of XLU roll / lane-slice concat.
    ri = lax.broadcasted_iota(jnp.int32, (P, P), 0)
    ci = lax.broadcasted_iota(jnp.int32, (P, P), 1)
    diff_mat = (ri == ci + 1).astype(jnp.float32) - (ri == ci).astype(jnp.float32)
    depth_diff = jnp.dot(depth, diff_mat,
                         preferred_element_type=jnp.float32,
                         precision=lax.Precision.HIGHEST)

    col = lax.broadcasted_iota(jnp.int32, (R, P), 1)
    deltas = jnp.where(col == P - 1, jnp.float32(1e10), depth_diff)

    sigma_delta = density * deltas                  # (R, P)
    alpha = 1.0 - jnp.exp(-sigma_delta)

    # Strictly-lower-triangular mask (i < j): dot(sigma_delta, mask) is the exclusive
    # cumulative sum along samples, so exp(-cumsum) == exclusive cumprod(exp(-sd)).
    # The 1e10 last-sample delta never leaks into real columns (mask row P-1 is 0).
    excl_mask = (ri < ci).astype(jnp.float32)
    cum_excl = jnp.dot(sigma_delta, excl_mask,
                       preferred_element_type=jnp.float32,
                       precision=lax.Precision.HIGHEST)
    transmittance = jnp.exp(-cum_excl)

    weights = transmittance * alpha                 # (R, P)

    # Aggregate over samples (lane reduces) and emit one lane-dense (F+1, R) slab.
    # Direct per-row stores: no jnp.stack -> no sublane concat/relayout.
    # TODO(synk): if the XLU (lane reduces) ever binds on v7x once HBM time drops,
    # move this reduction onto the MXU (dot of the stacked weighted maps against a
    # ones RHS) -- the MXU has large slack here.
    for f in range(n_feat):
        out_ref[f, :] = jnp.sum(weights * feat_ref[f].astype(jnp.float32), axis=-1)
    out_ref[n_feat, :] = jnp.sum(weights * depth, axis=-1)


@functools.partial(jax.jit, static_argnames=("max_rows_per_tile",))
def volume_render(depth_values, density, feature, *, max_rows_per_tile=4096):
    """Equivalent of VolumeRenderer.forward given per-sample density/feature.

    depth_values: (N, P) f32, density: (N, P), feature: (N, P, F).
    The grid axis over ray tiles plays the role of the PyTorch chunk loop.
    """
    N, P = depth_values.shape
    F = feature.shape[-1]

    # Ray tiling: multiples of 128, capped by max_rows_per_tile; guarantee >= 2 grid
    # tiles whenever N allows so both v7x TensorCores get work.
    n128 = _round_up(N, 128)
    tile_r = min(_round_up(max_rows_per_tile, 128), n128)
    if n128 // tile_r < 2 and n128 >= 256:
        tile_r = _round_up(n128 // 2, 128)
    Np = _round_up(N, tile_r)

    # No sample-axis padding (only ray padding to the tile multiple; padded rays have
    # zero density => exactly zero weights => zero outputs, sliced off below).
    depth_p = jnp.pad(depth_values.astype(jnp.float32), ((0, Np - N), (0, 0)))
    density_p = jnp.pad(density.astype(jnp.float32), ((0, Np - N), (0, 0)))
    # Feature: bf16 channel-major (F, N, P).  Cast before the (one-off) transpose so
    # the relayout inside this jit moves half the bytes.
    feat_cm = jnp.pad(jnp.transpose(feature.astype(jnp.bfloat16), (2, 0, 1)),
                      ((0, 0), (0, Np - N), (0, 0)))

    # VMEM budget: double-buffered input/output tiles + body temporaries, clamped
    # under v7x's 64 MiB/TC (v5e/v6e have 128 MiB so this is always safe there).
    in_tile_bytes = tile_r * P * (4 + 4) + F * tile_r * P * 2
    out_tile_bytes = (F + 1) * tile_r * 4
    body_scratch = 8 * tile_r * max(P, 128) * 4
    vmem_limit = min(
        max(2 * (in_tile_bytes + out_tile_bytes) + body_scratch + (8 << 20), 16 << 20),
        56 << 20)

    cost = pl.CostEstimate(
        flops=4 * Np * P * P + 10 * Np * P,
        transcendentals=2 * Np * P,
        bytes_accessed=Np * P * 8 + F * Np * P * 2 + (F + 1) * Np * 4)

    kernel = functools.partial(volume_render_kernel, n_feat=F)
    out = pl.pallas_call(
        kernel,
        out_shape=jax.ShapeDtypeStruct((F + 1, Np), jnp.float32),
        grid_spec=pltpu.PrefetchScalarGridSpec(
            num_scalar_prefetch=0,
            grid=(Np // tile_r,),
            in_specs=[
                pl.BlockSpec((tile_r, P), lambda i: (i, 0)),        # depth   f32
                pl.BlockSpec((tile_r, P), lambda i: (i, 0)),        # density f32
                pl.BlockSpec((F, tile_r, P), lambda i: (0, i, 0)),  # feature bf16, ch-major
            ],
            out_specs=pl.BlockSpec((F + 1, tile_r), lambda i: (0, i)),
        ),
        compiler_params=pltpu.CompilerParams(
            dimension_semantics=("parallel",),
            vmem_limit_bytes=vmem_limit),
        cost_estimate=cost,
    )(depth_p, density_p, feat_cm)

    feat_out = jnp.transpose(out[:F, :N])       # (N, F)
    depth_out = out[F, :N][:, None]             # (N, 1)
    return {"feature": feat_out, "depth": depth_out}


def _reference(depth, density, feat):
    """Plain-jnp mirror of the PyTorch math (cumprod form) for verification."""
    deltas = jnp.concatenate(
        [depth[:, 1:] - depth[:, :-1], 1e10 * jnp.ones_like(depth[:, :1])], axis=-1)
    sd = density * deltas
    et = jnp.exp(-sd)
    trans = jnp.cumprod(
        jnp.concatenate([jnp.ones_like(et[:, :1]), et[:, :-1]], axis=-1), axis=-1)
    w = trans * (1.0 - et)
    f = jnp.sum(w[:, :, None] * feat, axis=1)
    d = jnp.sum(w * depth, axis=1, keepdims=True)
    return f, d


if __name__ == "__main__":
    key = jax.random.PRNGKey(0)
    k1, k2, k3 = jax.random.split(key, 3)

    N_rays, P, F = 256, 64, 3       # rays, samples per ray, feature dim (RGB)

    near, far = 0.1, 5.0
    base = jnp.linspace(near, far, P)
    jitter = jax.random.uniform(k1, (N_rays, P)) * ((far - near) / P)
    depth_values = (base[None, :] + jitter).astype(jnp.float32)
    density = jax.nn.relu(jax.random.normal(k2, (N_rays, P))).astype(jnp.float32)
    feature = jax.nn.sigmoid(jax.random.normal(k3, (N_rays, P, F))).astype(jnp.float32)

    out = volume_render(depth_values, density, feature)
    jax.block_until_ready(out)

    f_ref, d_ref = _reference(depth_values, density, feature)
    assert out["feature"].shape == (N_rays, F)
    assert out["depth"].shape == (N_rays, 1)
    # Feature is carried in bf16 -> looser tolerance; depth/weights stay f32-accurate.
    assert jnp.allclose(out["feature"], f_ref, atol=2e-2, rtol=2e-2)
    assert jnp.allclose(out["depth"], d_ref, atol=1e-3, rtol=1e-3)

    print("KERNEL_OK")
</pallas_src>

<mosaic_0001>
module attributes {stable_mosaic.version = 11 : i64} {
  func.func @volume_render_kernel(%arg0: i32, %arg1: memref<128x64xf32, #tpu.memory_space<vmem>>, %arg2: memref<128x64xf32, #tpu.memory_space<vmem>>, %arg3: memref<3x128x64xbf16, #tpu.memory_space<vmem>>, %arg4: memref<4x128xf32, #tpu.memory_space<vmem>>) attributes {dimension_semantics = [#tpu.dimension_semantics<parallel>], iteration_bounds = array<i64: 2>, scalar_prefetch = 0 : i64, scratch_operands = 0 : i64, tpu.core_type = #tpu.core_type<tc>, window_params = [{transform_indices = @transform_0, window_bounds = array<i64: 128, 64>}, {transform_indices = @transform_1, window_bounds = array<i64: 128, 64>}, {transform_indices = @transform_2, window_bounds = array<i64: 3, 128, 64>}, {transform_indices = @transform_3, window_bounds = array<i64: 4, 128>}]} {
    %c0 = arith.constant 0 : index
    %c0_0 = arith.constant 0 : index
    %0 = vector.load %arg1[%c0, %c0_0] : memref<128x64xf32, #tpu.memory_space<vmem>>, vector<128x64xf32>
    %c0_1 = arith.constant 0 : index
    %c0_2 = arith.constant 0 : index
    %1 = vector.load %arg2[%c0_1, %c0_2] : memref<128x64xf32, #tpu.memory_space<vmem>>, vector<128x64xf32>
    %2 = tpu.iota {dimensions = array<i32: 0>} : vector<64x64xi32>
    %3 = tpu.iota {dimensions = array<i32: 1>} : vector<64x64xi32>
    %c1_i32 = arith.constant 1 : i32
    %4 = vector.broadcast %c1_i32 : i32 to vector<64x64xi32>
    %5 = arith.addi %3, %4 : vector<64x64xi32>
    %6 = arith.cmpi eq, %2, %5 : vector<64x64xi32>
    %7 = arith.extui %6 : vector<64x64xi1> to vector<64x64xi32>
    %8 = arith.sitofp %7 : vector<64x64xi32> to vector<64x64xf32>
    %9 = arith.cmpi eq, %2, %3 : vector<64x64xi32>
    %10 = arith.extui %9 : vector<64x64xi1> to vector<64x64xi32>
    %11 = arith.sitofp %10 : vector<64x64xi32> to vector<64x64xf32>
    %12 = arith.subf %8, %11 : vector<64x64xf32>
    %cst = arith.constant dense<0.000000e+00> : vector<128x64xf32>
    %13 = tpu.matmul %0, %12, %cst {dimension_numbers = #tpu.dot_dimension_numbers<[1], [0], [0], [1], [0, 0, 1, 1], [], []>, precision = #tpu.contract_precision<fp32>} : vector<128x64xf32>, vector<64x64xf32>, vector<128x64xf32> -> vector<128x64xf32>
    %14 = tpu.iota {dimensions = array<i32: 1>} : vector<128x64xi32>
    %c63_i32 = arith.constant 63 : i32
    %15 = vector.broadcast %c63_i32 : i32 to vector<128x64xi32>
    %16 = arith.cmpi eq, %14, %15 : vector<128x64xi32>
    %cst_3 = arith.constant 1.000000e+10 : f32
    %17 = vector.broadcast %cst_3 : f32 to vector<128x64xf32>
    %18 = arith.select %16, %17, %13 : vector<128x64xi1>, vector<128x64xf32>
    %19 = arith.mulf %1, %18 : vector<128x64xf32>
    %cst_4 = arith.constant 0.000000e+00 : f32
    %20 = vector.broadcast %cst_4 : f32 to vector<128x64xf32>
    %21 = arith.subf %20, %19 : vector<128x64xf32>
    %22 = math.exp %21 : vector<128x64xf32>
    %cst_5 = arith.constant 1.000000e+00 : f32
    %23 = vector.broadcast %cst_5 : f32 to vector<128x64xf32>
    %24 = arith.subf %23, %22 : vector<128x64xf32>
    %25 = arith.cmpi slt, %2, %3 : vector<64x64xi32>
    %26 = arith.extui %25 : vector<64x64xi1> to vector<64x64xi32>
    %27 = arith.sitofp %26 : vector<64x64xi32> to vector<64x64xf32>
    %cst_6 = arith.constant dense<0.000000e+00> : vector<128x64xf32>
    %28 = tpu.matmul %19, %27, %cst_6 {dimension_numbers = #tpu.dot_dimension_numbers<[1], [0], [0], [1], [0, 0, 1, 1], [], []>, precision = #tpu.contract_precision<fp32>} : vector<128x64xf32>, vector<64x64xf32>, vector<128x64xf32> -> vector<128x64xf32>
    %cst_7 = arith.constant 0.000000e+00 : f32
    %29 = vector.broadcast %cst_7 : f32 to vector<128x64xf32>
    %30 = arith.subf %29, %28 : vector<128x64xf32>
    %31 = math.exp %30 : vector<128x64xf32>
    %32 = arith.mulf %31, %24 : vector<128x64xf32>
    %c0_8 = arith.constant 0 : index
    %c0_9 = arith.constant 0 : index
    %c0_10 = arith.constant 0 : index
    %33 = vector.load %arg3[%c0_8, %c0_9, %c0_10] : memref<3x128x64xbf16, #tpu.memory_space<vmem>>, vector<1x128x64xbf16>
    %34 = vector.shape_cast %33 : vector<1x128x64xbf16> to vector<128x64xbf16>
    %35 = arith.extf %34 : vector<128x64xbf16> to vector<128x64xf32>
    %36 = arith.mulf %32, %35 : vector<128x64xf32>
    %cst_11 = arith.constant dense<0.000000e+00> : vector<128xf32>
    %37 = vector.multi_reduction <add>, %36, %cst_11 [1] : vector<128x64xf32> to vector<128xf32>
    %c0_12 = arith.constant 0 : index
    %c0_13 = arith.constant 0 : index
    %38 = vector.load %arg4[%c0_12, %c0_13] : memref<4x128xf32, #tpu.memory_space<vmem>>, vector<1x128xf32>
    %39 = vector.shape_cast %38 : vector<1x128xf32> to vector<128xf32>
    %40 = vector.shape_cast %37 : vector<128xf32> to vector<1x128xf32>
    tpu.vector_store %arg4[%c0_12, %c0_13], %40 {strides = array<i32>} : memref<4x128xf32, #tpu.memory_space<vmem>>, vector<1x128xf32>,
    %c1 = arith.constant 1 : index
    %c0_14 = arith.constant 0 : index
    %c0_15 = arith.constant 0 : index
    %41 = vector.load %arg3[%c1, %c0_14, %c0_15] : memref<3x128x64xbf16, #tpu.memory_space<vmem>>, vector<1x128x64xbf16>
    %42 = vector.shape_cast %41 : vector<1x128x64xbf16> to vector<128x64xbf16>
    %43 = arith.extf %42 : vector<128x64xbf16> to vector<128x64xf32>
    %44 = arith.mulf %32, %43 : vector<128x64xf32>
    %cst_16 = arith.constant dense<0.000000e+00> : vector<128xf32>
    %45 = vector.multi_reduction <add>, %44, %cst_16 [1] : vector<128x64xf32> to vector<128xf32>
    %c1_17 = arith.constant 1 : index
    %c0_18 = arith.constant 0 : index
    %46 = vector.load %arg4[%c1_17, %c0_18] : memref<4x128xf32, #tpu.memory_space<vmem>>, vector<1x128xf32>
    %47 = vector.shape_cast %46 : vector<1x128xf32> to vector<128xf32>
    %48 = vector.shape_cast %45 : vector<128xf32> to vector<1x128xf32>
    tpu.vector_store %arg4[%c1_17, %c0_18], %48 {strides = array<i32>} : memref<4x128xf32, #tpu.memory_space<vmem>>, vector<1x128xf32>,
    %c2 = arith.constant 2 : index
    %c0_19 = arith.constant 0 : index
    %c0_20 = arith.constant 0 : index
    %49 = vector.load %arg3[%c2, %c0_19, %c0_20] : memref<3x128x64xbf16, #tpu.memory_space<vmem>>, vector<1x128x64xbf16>
    %50 = vector.shape_cast %49 : vector<1x128x64xbf16> to vector<128x64xbf16>
    %51 = arith.extf %50 : vector<128x64xbf16> to vector<128x64xf32>
    %52 = arith.mulf %32, %51 : vector<128x64xf32>
    %cst_21 = arith.constant dense<0.000000e+00> : vector<128xf32>
    %53 = vector.multi_reduction <add>, %52, %cst_21 [1] : vector<128x64xf32> to vector<128xf32>
    %c2_22 = arith.constant 2 : index
    %c0_23 = arith.constant 0 : index
    %54 = vector.load %arg4[%c2_22, %c0_23] : memref<4x128xf32, #tpu.memory_space<vmem>>, vector<1x128xf32>
    %55 = vector.shape_cast %54 : vector<1x128xf32> to vector<128xf32>
    %56 = vector.shape_cast %53 : vector<128xf32> to vector<1x128xf32>
    tpu.vector_store %arg4[%c2_22, %c0_23], %56 {strides = array<i32>} : memref<4x128xf32, #tpu.memory_space<vmem>>, vector<1x128xf32>,
    %57 = arith.mulf %32, %0 : vector<128x64xf32>
    %cst_24 = arith.constant dense<0.000000e+00> : vector<128xf32>
    %58 = vector.multi_reduction <add>, %57, %cst_24 [1] : vector<128x64xf32> to vector<128xf32>
    %c3 = arith.constant 3 : index
    %c0_25 = arith.constant 0 : index
    %59 = vector.load %arg4[%c3, %c0_25] : memref<4x128xf32, #tpu.memory_space<vmem>>, vector<1x128xf32>
    %60 = vector.shape_cast %59 : vector<1x128xf32> to vector<128xf32>
    %61 = vector.shape_cast %58 : vector<128xf32> to vector<1x128xf32>
    tpu.vector_store %arg4[%c3, %c0_25], %61 {strides = array<i32>} : memref<4x128xf32, #tpu.memory_space<vmem>>, vector<1x128xf32>,
    return
  }
  func.func @transform_0(%arg0: i32) -> (i32, i32) {
    %c0_i32 = arith.constant 0 : i32
    %c0_i32_0 = arith.constant 0 : i32
    return %arg0, %c0_i32 : i32, i32
  }
  func.func @transform_1(%arg0: i32) -> (i32, i32) {
    %c0_i32 = arith.constant 0 : i32
    %c0_i32_0 = arith.constant 0 : i32
    return %arg0, %c0_i32 : i32, i32
  }
  func.func @transform_2(%arg0: i32) -> (i32, i32, i32) {
    %c0_i32 = arith.constant 0 : i32
    %c0_i32_0 = arith.constant 0 : i32
    %c0_i32_1 = arith.constant 0 : i32
    return %c0_i32, %arg0, %c0_i32_0 : i32, i32, i32
  }
  func.func @transform_3(%arg0: i32) -> (i32, i32) {
    %c0_i32 = arith.constant 0 : i32
    %c0_i32_0 = arith.constant 0 : i32
    return %c0_i32, %arg0 : i32, i32
  }
}

</mosaic_0001>

<llo_original>
// kernel: volume_render.1
$region0: #{volume_render.1}
  #allocation0 [shape = 'u32[]', space=smem, size = 0x4, offset = 0x4, fixed_abs, tag = 'smem constant byte address 0x4 - core index']
  #allocation1 [shape = 'u32[144,128]{1,0:T(1,128)}', space=vmem, size = 0x12000, scoped, tag = 'internal scratch']
  %s0 = inlined_call_operand.vmem [shape: f32[256,64], index: 0, kind: input, shape index: {}]
  %s1 = inlined_call_operand.vmem [shape: f32[256,64], index: 1, kind: input, shape index: {}]
  %s2 = inlined_call_operand.vmem [shape: bf16[3,256,64], index: 2, kind: input, shape index: {}]
  %s3 = inlined_call_operand.vmem [shape: f32[4,256], index: 3, kind: output, shape index: {}]
  %s4 = sld [smem:[#allocation0]]
  $region86: #{volume_render.1} parent=0
    _
  %s6 = ssub.s32 1, %s4
  %s7 = scalar_select 0, %s6, %s4
  $region1: #{volume_render.1} parent=0
    #allocation2 [shape = 'u8[196608]{0}', space=vmem, size = 0x30000, scoped, tag = 'input window, operand 2']
    loop: start=0, step=1, limit=4
    $region2: #{volume_render.1} parent=1 // loop_pre_header
      _
    $region3: #{volume_render.1} parent=1 // loop_header
      %s9 = sphi 0, %s13
      %p10 = scmp.ge.s32.totalorder %s9, 4
      %s19 = sphi 0, %s21
      %s22 = sphi 0, %s19
      %s23 = sphi 0, %s22
      %s39 = sphi 0, %s23
      %s45 = sphi 0, %s47
      %s48 = sphi 0, %s45
      %s49 = sphi 0, %s48
      %s65 = sphi 0, %s49
      %s71 = sphi 0, %s73
      %s74 = sphi 0, %s71
      %s75 = sphi 0, %s74
      %s91 = sphi 0, %s75
      %s97 = sphi 0, %s99
      %s100 = sphi 0, %s97
      %s101 = sphi 0, %s100
      %s117 = sphi 0, %s101
    $region4: #{volume_render.1} parent=1 // loop_header_branch
      %12 = sbr.rel (%p10) target = $region8
    $region5: #{volume_render.1} parent=1 // loop_body
      %s14 = ssub.s32 %s9, 1
      %s15 = ssub.s32 %s9, 2
      %s16 = sadd.s32 %s9, 1
      %s17 = ssub.s32 %s9, %s16
      %p18 = scmp.eq.s32.totalorder %s17, 0
      %s20 = sadd.s32 %s19, 1
      %s21 = scalar_select %p18, %s19, %s20
      %p24 = pneg %p18
      %p25 = scmp.eq.s32.totalorder %s9, 1
      %p26 = por %p24, %p25
      %p27 = scmp.ne.s32.totalorder %s19, %s22
      %p28 = scmp.eq.s32.totalorder %s9, 0
      %p29 = por %p27, %p28
      %p30 = scmp.ne.s32.totalorder %s19, %s22
      %p31 = scmp.eq.s32.totalorder %s14, 1
      %p32 = por %p30, %p31
      %p33 = scmp.ne.s32.totalorder %s22, %s23
      %p34 = scmp.eq.s32.totalorder %s14, 0
      %p35 = por %p33, %p34
      %p36 = scmp.ne.s32.totalorder %s22, %s23
      %p37 = scmp.eq.s32.totalorder %s15, 1
      %p38 = por %p36, %p37
      %p40 = scmp.ne.s32.totalorder %s23, %s39
      %p41 = scmp.eq.s32.totalorder %s15, 0
      %p42 = por %p40, %p41
      %s43 = ssub.s32 %s9, %s16
      %p44 = scmp.eq.s32.totalorder %s43, 0
      %s46 = sadd.s32 %s45, 1
      %s47 = scalar_select %p44, %s45, %s46
      %p50 = pneg %p44
      %p51 = scmp.eq.s32.totalorder %s9, 1
      %p52 = por %p50, %p51
      %p53 = scmp.ne.s32.totalorder %s45, %s48
      %p54 = scmp.eq.s32.totalorder %s9, 0
      %p55 = por %p53, %p54
      %p56 = scmp.ne.s32.totalorder %s45, %s48
      %p57 = scmp.eq.s32.totalorder %s14, 1
      %p58 = por %p56, %p57
      %p59 = scmp.ne.s32.totalorder %s48, %s49
      %p60 = scmp.eq.s32.totalorder %s14, 0
      %p61 = por %p59, %p60
      %p62 = scmp.ne.s32.totalorder %s48, %s49
      %p63 = scmp.eq.s32.totalorder %s15, 1
      %p64 = por %p62, %p63
      %p66 = scmp.ne.s32.totalorder %s49, %s65
      %p67 = scmp.eq.s32.totalorder %s15, 0
      %p68 = por %p66, %p67
      %s69 = ssub.s32 %s9, %s16
      %p70 = scmp.eq.s32.totalorder %s69, 0
      %s72 = sadd.s32 %s71, 1
      %s73 = scalar_select %p70, %s71, %s72
      %p76 = pneg %p70
      %p77 = scmp.eq.s32.totalorder %s9, 1
      %p78 = por %p76, %p77
      %p79 = scmp.ne.s32.totalorder %s71, %s74
      %p80 = scmp.eq.s32.totalorder %s9, 0
      %p81 = por %p79, %p80
      %p82 = scmp.ne.s32.totalorder %s71, %s74
      %p83 = scmp.eq.s32.totalorder %s14, 1
      %p84 = por %p82, %p83
      %p85 = scmp.ne.s32.totalorder %s74, %s75
      %p86 = scmp.eq.s32.totalorder %s14, 0
      %p87 = por %p85, %p86
      %p88 = scmp.ne.s32.totalorder %s74, %s75
      %p89 = scmp.eq.s32.totalorder %s15, 1
      %p90 = por %p88, %p89
      %p92 = scmp.ne.s32.totalorder %s75, %s91
      %p93 = scmp.eq.s32.totalorder %s15, 0
      %p94 = por %p92, %p93
      %s95 = ssub.s32 %s9, %s16
      %p96 = scmp.eq.s32.totalorder %s95, 0
      %s98 = sadd.s32 %s97, 1
      %s99 = scalar_select %p96, %s97, %s98
      %p102 = pneg %p96
      %p103 = scmp.eq.s32.totalorder %s9, 1
      %p104 = por %p102, %p103
      %p105 = scmp.ne.s32.totalorder %s97, %s100
      %p106 = scmp.eq.s32.totalorder %s9, 0
      %p107 = por %p105, %p106
      %p108 = scmp.ne.s32.totalorder %s97, %s100
      %p109 = scmp.eq.s32.totalorder %s14, 1
      %p110 = por %p108, %p109
      %p111 = scmp.ne.s32.totalorder %s100, %s101
      %p112 = scmp.eq.s32.totalorder %s14, 0
      %p113 = por %p111, %p112
      %p114 = scmp.ne.s32.totalorder %s100, %s101
      %p115 = scmp.eq.s32.totalorder %s15, 1
      %p116 = por %p114, %p115
      %p118 = scmp.ne.s32.totalorder %s101, %s117
      %p119 = scmp.eq.s32.totalorder %s15, 0
      %p120 = por %p118, %p119
      %p121 = scmp.le.s32.totalorder 1, %s9
      %p122 = scmp.lt.s32.totalorder %s9, 3
      %p123 = pnand %p121, %p122
      %p124 = pneg %p123
      // Predicated region
      $region9: #{volume_render.1} parent=5 // pred_check
        _
      $region10: #{volume_render.1} parent=5 // pred_check_branch
        %126 = sbr.rel (%p123) target = $region12
      $region11: #{volume_render.1} parent=5 // pred_region
        %s127 = ssub.s32 %s9, 1
      $region12: #{volume_render.1} parent=5 // pred_fallthru
        _
      %p128 = scmp.lt.s32.totalorder %s9, 2
      // Predicated region
      $region13: #{volume_render.1} parent=5 // pred_check
        %p129 = pneg %p128
      $region14: #{volume_render.1} parent=5 // pred_check_branch
        %131 = sbr.rel (%p129) target = $region16
      $region15: #{volume_render.1} parent=5 // pred_region
        // Predicated region
        $region17: #{volume_render.1} parent=15 // pred_check
          %p132 = pneg %p29
        $region18: #{volume_render.1} parent=15 // pred_check_branch
          %134 = sbr.rel (%p132) target = $region20
        $region19: #{volume_render.1} parent=15 // pred_region
          %s135 = smul.u32 16, %s9
          %p136 = scmp.lt.s32.totalorder %s135, 31
          %s137 = scalar_select %p136, %s135, 31
          %s138 = smul.addr %s137, 8
          %s139 = scalar_lea.vmem %s0, %s138
          %s140 = smul.u32 16, %s9
        $region20: #{volume_render.1} parent=15 // pred_fallthru
          _
        // Predicated region
        $region21: #{volume_render.1} parent=15 // pred_check
          %p141 = pneg %p55
        $region22: #{volume_render.1} parent=15 // pred_check_branch
          %143 = sbr.rel (%p141) target = $region24
        $region23: #{volume_render.1} parent=15 // pred_region
          %s144 = smul.u32 16, %s9
          %p145 = scmp.lt.s32.totalorder %s144, 31
          %s146 = scalar_select %p145, %s144, 31
          %s147 = smul.addr %s146, 8
          %s148 = scalar_lea.vmem %s1, %s147
          %s149 = smul.u32 16, %s9
        $region24: #{volume_render.1} parent=15 // pred_fallthru
          _
        // Predicated region
        $region25: #{volume_render.1} parent=15 // pred_check
          %p150 = pneg %p81
        $region26: #{volume_render.1} parent=15 // pred_check_branch
          %152 = sbr.rel (%p150) target = $region28
        $region27: #{volume_render.1} parent=15 // pred_region
          %s153 = sand.u32 %s71, 1
          %s154 = sand.u32 %s71, 1
          %s155 = smul.addr %s154, 192
          %s156 = scalar_lea.vmem [#allocation2], %s155
          %s157 = smul.u32 16, %s9
          %s158 = smul.addr %s157, 4
          %s159 = scalar_lea.vmem %s2, %s158
          // Predicated region
          $region29: #{volume_render.1} parent=27 // pred_check
            _
          $region30: #{volume_render.1} parent=27 // pred_check_branch
            %161 = sbr.rel (0) target = $region32
          $region31: #{volume_render.1} parent=27 // pred_region
            // Predicated region
            $region33: #{volume_render.1} parent=31 // pred_check
              _
            $region34: #{volume_render.1} parent=31 // pred_check_branch
              %163 = sbr.rel target = $region36
            $region35: #{volume_render.1} parent=31 // pred_region
              // Predicated region
              $region48: #{volume_render.1} parent=35 // pred_check
                _
              $region49: #{volume_render.1} parent=35 // pred_check_branch
                %272 = sbr.rel (0) target = $region51
              $region50: #{volume_render.1} parent=35 // pred_region
                loop: start=0, step=1, limit=1
                $region52: #{volume_render.1} parent=50 // loop_pre_header
                  _
                $region53: #{volume_render.1} parent=50 // loop_header
                  %s274 = sphi 0, %s278
                  %p275 = scmp.ge.s32.totalorder %s274, 1
                  %s279 = sphi %s159, %s159
                  %s280 = sphi %s156, %s156
                $region54: #{volume_render.1} parent=50 // loop_header_branch
                  %277 = sbr.rel (%p275) target = $region58
                $region55: #{volume_render.1} parent=50 // loop_body
                  _
                $region56: #{volume_render.1} parent=50 // loop_footer
                  %s278 = sadd.s32 1, %s274
                $region57: #{volume_render.1} parent=50 // loop_footer_branch
                  %273 = sbr.rel target = $region53
                $region58: #{volume_render.1} parent=50 // loop_exit
                  _
                loop: start=0, step=1, limit=1
                $region59: #{volume_render.1} parent=50 // loop_pre_header
                  _
                $region60: #{volume_render.1} parent=50 // loop_header
                  %s283 = sphi 0, %s287
                  %p284 = scmp.ge.s32.totalorder %s283, 1
                  %s288 = sphi %s159, %s159
                  %s289 = sphi %s156, %s156
                $region61: #{volume_render.1} parent=50 // loop_header_branch
                  %286 = sbr.rel (%p284) target = $region65
                $region62: #{volume_render.1} parent=50 // loop_body
                  %v290 = vld [vmem:[%s288] sm:$0xf]
                  %291 = vst [vmem:[%s289] sm:$0xf] %v290
                  %v292 = vld [vmem:[%s288 + $0x4] sm:$0xf]
                  %293 = vst [vmem:[%s289 + $0x4] sm:$0xf] %v292
                  %v294 = vld [vmem:[%s288 + $0x8] sm:$0xf]
                  %295 = vst [vmem:[%s289 + $0x8] sm:$0xf] %v294
                  %v296 = vld [vmem:[%s288 + $0xc] sm:$0xf]
                  %297 = vst [vmem:[%s289 + $0xc] sm:$0xf] %v296
                  %v298 = vld [vmem:[%s288 + $0x10] sm:$0xf]
                  %299 = vst [vmem:[%s289 + $0x10] sm:$0xf] %v298
                  %v300 = vld [vmem:[%s288 + $0x14] sm:$0xf]
                  %301 = vst [vmem:[%s289 + $0x14] sm:$0xf] %v300
                  %v302 = vld [vmem:[%s288 + $0x18] sm:$0xf]
                  %303 = vst [vmem:[%s289 + $0x18] sm:$0xf] %v302
                  %v304 = vld [vmem:[%s288 + $0x1c] sm:$0xf]
                  %305 = vst [vmem:[%s289 + $0x1c] sm:$0xf] %v304
                  %v306 = vld [vmem:[%s288 + $0x20] sm:$0xf]
                  %307 = vst [vmem:[%s289 + $0x20] sm:$0xf] %v306
                  %v308 = vld [vmem:[%s288 + $0x24] sm:$0xf]
                  %309 = vst [vmem:[%s289 + $0x24] sm:$0xf] %v308
                  %v310 = vld [vmem:[%s288 + $0x28] sm:$0xf]
                  %311 = vst [vmem:[%s289 + $0x28] sm:$0xf] %v310
                  %v312 = vld [vmem:[%s288 + $0x2c] sm:$0xf]
                  %313 = vst [vmem:[%s289 + $0x2c] sm:$0xf] %v312
                  %v314 = vld [vmem:[%s288 + $0x30] sm:$0xf]
                  %315 = vst [vmem:[%s289 + $0x30] sm:$0xf] %v314
                  %v316 = vld [vmem:[%s288 + $0x34] sm:$0xf]
                  %317 = vst [vmem:[%s289 + $0x34] sm:$0xf] %v316
                  %v318 = vld [vmem:[%s288 + $0x38] sm:$0xf]
                  %319 = vst [vmem:[%s289 + $0x38] sm:$0xf] %v318
                  %v320 = vld [vmem:[%s288 + $0x3c] sm:$0xf]
                  %321 = vst [vmem:[%s289 + $0x3c] sm:$0xf] %v320
                  %v322 = vld [vmem:[%s288 + $0x80] sm:$0xf]
                  %323 = vst [vmem:[%s289 + $0x40] sm:$0xf] %v322
                  %v324 = vld [vmem:[%s288 + $0x84] sm:$0xf]
                  %325 = vst [vmem:[%s289 + $0x44] sm:$0xf] %v324
                  %v326 = vld [vmem:[%s288 + $0x88] sm:$0xf]
                  %327 = vst [vmem:[%s289 + $0x48] sm:$0xf] %v326
                  %v328 = vld [vmem:[%s288 + $0x8c] sm:$0xf]
                  %329 = vst [vmem:[%s289 + $0x4c] sm:$0xf] %v328
                  %v330 = vld [vmem:[%s288 + $0x90] sm:$0xf]
                  %331 = vst [vmem:[%s289 + $0x50] sm:$0xf] %v330
                  %v332 = vld [vmem:[%s288 + $0x94] sm:$0xf]
                  %333 = vst [vmem:[%s289 + $0x54] sm:$0xf] %v332
                  %v334 = vld [vmem:[%s288 + $0x98] sm:$0xf]
                  %335 = vst [vmem:[%s289 + $0x58] sm:$0xf] %v334
                  %v336 = vld [vmem:[%s288 + $0x9c] sm:$0xf]
                  %337 = vst [vmem:[%s289 + $0x5c] sm:$0xf] %v336
                  %v338 = vld [vmem:[%s288 + $0xa0] sm:$0xf]
                  %339 = vst [vmem:[%s289 + $0x60] sm:$0xf] %v338
                  %v340 = vld [vmem:[%s288 + $0xa4] sm:$0xf]
                  %341 = vst [vmem:[%s289 + $0x64] sm:$0xf] %v340
                  %v342 = vld [vmem:[%s288 + $0xa8] sm:$0xf]
                  %343 = vst [vmem:[%s289 + $0x68] sm:$0xf] %v342
                  %v344 = vld [vmem:[%s288 + $0xac] sm:$0xf]
                  %345 = vst [vmem:[%s289 + $0x6c] sm:$0xf] %v344
                  %v346 = vld [vmem:[%s288 + $0xb0] sm:$0xf]
                  %347 = vst [vmem:[%s289 + $0x70] sm:$0xf] %v346
                  %v348 = vld [vmem:[%s288 + $0xb4] sm:$0xf]
                  %349 = vst [vmem:[%s289 + $0x74] sm:$0xf] %v348
                  %v350 = vld [vmem:[%s288 + $0xb8] sm:$0xf]
                  %351 = vst [vmem:[%s289 + $0x78] sm:$0xf] %v350
                  %v352 = vld [vmem:[%s288 + $0xbc] sm:$0xf]
                  %353 = vst [vmem:[%s289 + $0x7c] sm:$0xf] %v352
                  %v354 = vld [vmem:[%s288 + $0x100] sm:$0xf]
                  %355 = vst [vmem:[%s289 + $0x80] sm:$0xf] %v354
                  %v356 = vld [vmem:[%s288 + $0x104] sm:$0xf]
                  %357 = vst [vmem:[%s289 + $0x84] sm:$0xf] %v356
                  %v358 = vld [vmem:[%s288 + $0x108] sm:$0xf]
                  %359 = vst [vmem:[%s289 + $0x88] sm:$0xf] %v358
                  %v360 = vld [vmem:[%s288 + $0x10c] sm:$0xf]
                  %361 = vst [vmem:[%s289 + $0x8c] sm:$0xf] %v360
                  %v362 = vld [vmem:[%s288 + $0x110] sm:$0xf]
                  %363 = vst [vmem:[%s289 + $0x90] sm:$0xf] %v362
                  %v364 = vld [vmem:[%s288 + $0x114] sm:$0xf]
                  %365 = vst [vmem:[%s289 + $0x94] sm:$0xf] %v364
                  %v366 = vld [vmem:[%s288 + $0x118] sm:$0xf]
                  %367 = vst [vmem:[%s289 + $0x98] sm:$0xf] %v366
                  %v368 = vld [vmem:[%s288 + $0x11c] sm:$0xf]
                  %369 = vst [vmem:[%s289 + $0x9c] sm:$0xf] %v368
                  %v370 = vld [vmem:[%s288 + $0x120] sm:$0xf]
                  %371 = vst [vmem:[%s289 + $0xa0] sm:$0xf] %v370
                  %v372 = vld [vmem:[%s288 + $0x124] sm:$0xf]
                  %373 = vst [vmem:[%s289 + $0xa4] sm:$0xf] %v372
                  %v374 = vld [vmem:[%s288 + $0x128] sm:$0xf]
                  %375 = vst [vmem:[%s289 + $0xa8] sm:$0xf] %v374
                  %v376 = vld [vmem:[%s288 + $0x12c] sm:$0xf]
                  %377 = vst [vmem:[%s289 + $0xac] sm:$0xf] %v376
                  %v378 = vld [vmem:[%s288 + $0x130] sm:$0xf]
                  %379 = vst [vmem:[%s289 + $0xb0] sm:$0xf] %v378
                  %v380 = vld [vmem:[%s288 + $0x134] sm:$0xf]
                  %381 = vst [vmem:[%s289 + $0xb4] sm:$0xf] %v380
                  %v382 = vld [vmem:[%s288 + $0x138] sm:$0xf]
                  %383 = vst [vmem:[%s289 + $0xb8] sm:$0xf] %v382
                  %v384 = vld [vmem:[%s288 + $0x13c] sm:$0xf]
                  %385 = vst [vmem:[%s289 + $0xbc] sm:$0xf] %v384
                $region63: #{volume_render.1} parent=50 // loop_footer
                  %s287 = sadd.s32 1, %s283
                $region64: #{volume_render.1} parent=50 // loop_footer_branch
                  %282 = sbr.rel target = $region60
                $region65: #{volume_render.1} parent=50 // loop_exit
                  _
              $region51: #{volume_render.1} parent=35 // pred_fallthru
                _
            $region36: #{volume_render.1} parent=31 // pred_fallthru
              _
            // Predicated region
            $region37: #{volume_render.1} parent=31 // pred_check
              _
            $region38: #{volume_render.1} parent=31 // pred_check_branch
              %165 = sbr.rel (0) target = $region40
            $region39: #{volume_render.1} parent=31 // pred_region
              loop: start=0, step=1, limit=1
              $region41: #{volume_render.1} parent=39 // loop_pre_header
                _
              $region42: #{volume_render.1} parent=39 // loop_header
                %s168 = sphi 0, %s172
                %p169 = scmp.ge.s32.totalorder %s168, 1
                %s173 = sphi %s159, %s159
                %s174 = sphi %s156, %s156
              $region43: #{volume_render.1} parent=39 // loop_header_branch
                %171 = sbr.rel (%p169) target = $region47
              $region44: #{volume_render.1} parent=39 // loop_body
                %v175 = vld [vmem:[%s173] sm:$0xf]
                %176 = vst [vmem:[%s174] sm:$0xf] %v175
                %v177 = vld [vmem:[%s173 + $0x4] sm:$0xf]
                %178 = vst [vmem:[%s174 + $0x4] sm:$0xf] %v177
                %v179 = vld [vmem:[%s173 + $0x8] sm:$0xf]
                %180 = vst [vmem:[%s174 + $0x8] sm:$0xf] %v179
                %v181 = vld [vmem:[%s173 + $0xc] sm:$0xf]
                %182 = vst [vmem:[%s174 + $0xc] sm:$0xf] %v181
                %v183 = vld [vmem:[%s173 + $0x10] sm:$0xf]
                %184 = vst [vmem:[%s174 + $0x10] sm:$0xf] %v183
                %v185 = vld [vmem:[%s173 + $0x14] sm:$0xf]
                %186 = vst [vmem:[%s174 + $0x14] sm:$0xf] %v185
                %v187 = vld [vmem:[%s173 + $0x18] sm:$0xf]
                %188 = vst [vmem:[%s174 + $0x18] sm:$0xf] %v187
                %v189 = vld [vmem:[%s173 + $0x1c] sm:$0xf]
                %190 = vst [vmem:[%s174 + $0x1c] sm:$0xf] %v189
                %v191 = vld [vmem:[%s173 + $0x20] sm:$0xf]
                %192 = vst [vmem:[%s174 + $0x20] sm:$0xf] %v191
                %v193 = vld [vmem:[%s173 + $0x24] sm:$0xf]
                %194 = vst [vmem:[%s174 + $0x24] sm:$0xf] %v193
                %v195 = vld [vmem:[%s173 + $0x28] sm:$0xf]
                %196 = vst [vmem:[%s174 + $0x28] sm:$0xf] %v195
                %v197 = vld [vmem:[%s173 + $0x2c] sm:$0xf]
                %198 = vst [vmem:[%s174 + $0x2c] sm:$0xf] %v197
                %v199 = vld [vmem:[%s173 + $0x30] sm:$0xf]
                %200 = vst [vmem:[%s174 + $0x30] sm:$0xf] %v199
                %v201 = vld [vmem:[%s173 + $0x34] sm:$0xf]
                %202 = vst [vmem:[%s174 + $0x34] sm:$0xf] %v201
                %v203 = vld [vmem:[%s173 + $0x38] sm:$0xf]
                %204 = vst [vmem:[%s174 + $0x38] sm:$0xf] %v203
                %v205 = vld [vmem:[%s173 + $0x3c] sm:$0xf]
                %206 = vst [vmem:[%s174 + $0x3c] sm:$0xf] %v205
                %v207 = vld [vmem:[%s173 + $0x80] sm:$0xf]
                %208 = vst [vmem:[%s174 + $0x40] sm:$0xf] %v207
                %v209 = vld [vmem:[%s173 + $0x84] sm:$0xf]
                %210 = vst [vmem:[%s174 + $0x44] sm:$0xf] %v209
                %v211 = vld [vmem:[%s173 + $0x88] sm:$0xf]
                %212 = vst [vmem:[%s174 + $0x48] sm:$0xf] %v211
                %v213 = vld [vmem:[%s173 + $0x8c] sm:$0xf]
                %214 = vst [vmem:[%s174 + $0x4c] sm:$0xf] %v213
                %v215 = vld [vmem:[%s173 + $0x90] sm:$0xf]
                %216 = vst [vmem:[%s174 + $0x50] sm:$0xf] %v215
                %v217 = vld [vmem:[%s173 + $0x94] sm:$0xf]
                %218 = vst [vmem:[%s174 + $0x54] sm:$0xf] %v217
                %v219 = vld [vmem:[%s173 + $0x98] sm:$0xf]
                %220 = vst [vmem:[%s174 + $0x58] sm:$0xf] %v219
                %v221 = vld [vmem:[%s173 + $0x9c] sm:$0xf]
                %222 = vst [vmem:[%s174 + $0x5c] sm:$0xf] %v221
                %v223 = vld [vmem:[%s173 + $0xa0] sm:$0xf]
                %224 = vst [vmem:[%s174 + $0x60] sm:$0xf] %v223
                %v225 = vld [vmem:[%s173 + $0xa4] sm:$0xf]
                %226 = vst [vmem:[%s174 + $0x64] sm:$0xf] %v225
                %v227 = vld [vmem:[%s173 + $0xa8] sm:$0xf]
                %228 = vst [vmem:[%s174 + $0x68] sm:$0xf] %v227
                %v229 = vld [vmem:[%s173 + $0xac] sm:$0xf]
                %230 = vst [vmem:[%s174 + $0x6c] sm:$0xf] %v229
                %v231 = vld [vmem:[%s173 + $0xb0] sm:$0xf]
                %232 = vst [vmem:[%s174 + $0x70] sm:$0xf] %v231
                %v233 = vld [vmem:[%s173 + $0xb4] sm:$0xf]
                %234 = vst [vmem:[%s174 + $0x74] sm:$0xf] %v233
                %v235 = vld [vmem:[%s173 + $0xb8] sm:$0xf]
                %236 = vst [vmem:[%s174 + $0x78] sm:$0xf] %v235
                %v237 = vld [vmem:[%s173 + $0xbc] sm:$0xf]
                %238 = vst [vmem:[%s174 + $0x7c] sm:$0xf] %v237
                %v239 = vld [vmem:[%s173 + $0x100] sm:$0xf]
                %240 = vst [vmem:[%s174 + $0x80] sm:$0xf] %v239
                %v241 = vld [vmem:[%s173 + $0x104] sm:$0xf]
                %242 = vst [vmem:[%s174 + $0x84] sm:$0xf] %v241
                %v243 = vld [vmem:[%s173 + $0x108] sm:$0xf]
                %244 = vst [vmem:[%s174 + $0x88] sm:$0xf] %v243
                %v245 = vld [vmem:[%s173 + $0x10c] sm:$0xf]
                %246 = vst [vmem:[%s174 + $0x8c] sm:$0xf] %v245
                %v247 = vld [vmem:[%s173 + $0x110] sm:$0xf]
                %248 = vst [vmem:[%s174 + $0x90] sm:$0xf] %v247
                %v249 = vld [vmem:[%s173 + $0x114] sm:$0xf]
                %250 = vst [vmem:[%s174 + $0x94] sm:$0xf] %v249
                %v251 = vld [vmem:[%s173 + $0x118] sm:$0xf]
                %252 = vst [vmem:[%s174 + $0x98] sm:$0xf] %v251
                %v253 = vld [vmem:[%s173 + $0x11c] sm:$0xf]
                %254 = vst [vmem:[%s174 + $0x9c] sm:$0xf] %v253
                %v255 = vld [vmem:[%s173 + $0x120] sm:$0xf]
                %256 = vst [vmem:[%s174 + $0xa0] sm:$0xf] %v255
                %v257 = vld [vmem:[%s173 + $0x124] sm:$0xf]
                %258 = vst [vmem:[%s174 + $0xa4] sm:$0xf] %v257
                %v259 = vld [vmem:[%s173 + $0x128] sm:$0xf]
                %260 = vst [vmem:[%s174 + $0xa8] sm:$0xf] %v259
                %v261 = vld [vmem:[%s173 + $0x12c] sm:$0xf]
                %262 = vst [vmem:[%s174 + $0xac] sm:$0xf] %v261
                %v263 = vld [vmem:[%s173 + $0x130] sm:$0xf]
                %264 = vst [vmem:[%s174 + $0xb0] sm:$0xf] %v263
                %v265 = vld [vmem:[%s173 + $0x134] sm:$0xf]
                %266 = vst [vmem:[%s174 + $0xb4] sm:$0xf] %v265
                %v267 = vld [vmem:[%s173 + $0x138] sm:$0xf]
                %268 = vst [vmem:[%s174 + $0xb8] sm:$0xf] %v267
                %v269 = vld [vmem:[%s173 + $0x13c] sm:$0xf]
                %270 = vst [vmem:[%s174 + $0xbc] sm:$0xf] %v269
              $region45: #{volume_render.1} parent=39 // loop_footer
                %s172 = sadd.s32 1, %s168
              $region46: #{volume_render.1} parent=39 // loop_footer_branch
                %167 = sbr.rel target = $region42
              $region47: #{volume_render.1} parent=39 // loop_exit
                _
            $region40: #{volume_render.1} parent=31 // pred_fallthru
              _
          $region32: #{volume_render.1} parent=27 // pred_fallthru
            _
          %386 = vnop
        $region28: #{volume_render.1} parent=15 // pred_fallthru
          _
      $region16: #{volume_render.1} parent=5 // pred_fallthru
        _
      %p387 = scmp.le.s32.totalorder 1, %s9
      %p388 = scmp.lt.s32.totalorder %s9, 3
      %p389 = pnand %p387, %p388
      %p390 = pneg %p389
      // Predicated region
      $region66: #{volume_render.1} parent=5 // pred_check
        _
      $region67: #{volume_render.1} parent=5 // pred_check_branch
        %392 = sbr.rel (%p389) target = $region69
      $region68: #{volume_render.1} parent=5 // pred_region
        %s393 = ssub.s32 %s9, 1
        %s394 = sand.u32 %s74, 1
        %s395 = sand.u32 %s74, 1
        %s396 = smul.addr %s395, 192
        %s397 = scalar_lea.vmem [#allocation2], %s396
        // Predicated region
        $region70: #{volume_render.1} parent=68 // pred_check
          %p398 = pneg %p87
        $region71: #{volume_render.1} parent=68 // pred_check_branch
          %400 = sbr.rel (%p398) target = $region73
        $region72: #{volume_render.1} parent=68 // pred_region
          _
        $region73: #{volume_render.1} parent=68 // pred_fallthru
          _
        %s401 = smul.u32 16, %s14
        %p402 = scmp.lt.s32.totalorder %s401, 31
        %s403 = scalar_select %p402, %s401, 31
        %s404 = smul.addr %s403, 8
        %s405 = scalar_lea.vmem %s0, %s404
        %p406 = pneg %p35
        %p407 = pneg %p32
        %s408 = smul.u32 16, %s14
        %p409 = scmp.lt.s32.totalorder %s408, 31
        %s410 = scalar_select %p409, %s408, 31
        %s411 = smul.addr %s410, 8
        %s412 = scalar_lea.vmem %s1, %s411
        %p413 = pneg %p61
        %p414 = pneg %p58
        %s415 = sand.u32 %s74, 1
        %s416 = sand.u32 %s74, 1
        %s417 = smul.addr %s416, 192
        %s418 = scalar_lea.vmem [#allocation2], %s417
        %p419 = pneg %p87
        %p420 = pneg %p84
        %p421 = pneg %p113
        %p422 = pneg %p110
        %p423 = scmp.lt.s32.totalorder %s14, 1
        %s424 = scalar_select %p423, %s14, 1
        %s425 = smul.addr %s424, 4
        %s426 = scalar_lea.vmem %s3, %s425
        %s427 = smul.u32 16, %s14
        %p428 = scmp.lt.s32.totalorder %s427, 31
        %s429 = scalar_select %p428, %s427, 31
        %s430 = smul.addr %s429, 8
        %s431 = scalar_lea.vmem %s0, %s430
        %s432 = smul.u32 16, %s14
        %s433 = smul.u32 16, %s14
        %p434 = scmp.lt.s32.totalorder %s433, 31
        %s435 = scalar_select %p434, %s433, 31
        %s436 = smul.addr %s435, 8
        %s437 = scalar_lea.vmem %s1, %s436
        %s438 = smul.u32 16, %s14
        %s439 = smul.u32 16, %s14
        %p440 = scmp.lt.s32.totalorder %s14, 1
        %s441 = scalar_select %p440, %s14, 1
        %s442 = smul.addr %s441, 4
        %s443 = scalar_lea.vmem %s3, %s442
        %v444 = vld [vmem:[%s431] sm:$0xff]
        %v445 = vld [vmem:[%s431 + $0x8] sm:$0xff]
        %v446 = vld [vmem:[%s431 + $0x10] sm:$0xff]
        %v447 = vld [vmem:[%s431 + $0x18] sm:$0xff]
        %v448 = vld [vmem:[%s431 + $0x20] sm:$0xff]
        %v449 = vld [vmem:[%s431 + $0x28] sm:$0xff]
        %v450 = vld [vmem:[%s431 + $0x30] sm:$0xff]
        %v451 = vld [vmem:[%s431 + $0x38] sm:$0xff]
        %v452 = vld [vmem:[%s431 + $0x40] sm:$0xff]
        %v453 = vld [vmem:[%s431 + $0x48] sm:$0xff]
        %v454 = vld [vmem:[%s431 + $0x50] sm:$0xff]
        %v455 = vld [vmem:[%s431 + $0x58] sm:$0xff]
        %v456 = vld [vmem:[%s431 + $0x60] sm:$0xff]
        %v457 = vld [vmem:[%s431 + $0x68] sm:$0xff]
        %v458 = vld [vmem:[%s431 + $0x70] sm:$0xff]
        %v459 = vld [vmem:[%s431 + $0x78] sm:$0xff]
        %v460 = vld [vmem:[%s437] sm:$0xff]
        %v461 = vld [vmem:[%s437 + $0x8] sm:$0xff]
        %v462 = vld [vmem:[%s437 + $0x10] sm:$0xff]
        %v463 = vld [vmem:[%s437 + $0x18] sm:$0xff]
        %v464 = vld [vmem:[%s437 + $0x20] sm:$0xff]
        %v465 = vld [vmem:[%s437 + $0x28] sm:$0xff]
        %v466 = vld [vmem:[%s437 + $0x30] sm:$0xff]
        %v467 = vld [vmem:[%s437 + $0x38] sm:$0xff]
        %v468 = vld [vmem:[%s437 + $0x40] sm:$0xff]
        %v469 = vld [vmem:[%s437 + $0x48] sm:$0xff]
        %v470 = vld [vmem:[%s437 + $0x50] sm:$0xff]
        %v471 = vld [vmem:[%s437 + $0x58] sm:$0xff]
        %v472 = vld [vmem:[%s437 + $0x60] sm:$0xff]
        %v473 = vld [vmem:[%s437 + $0x68] sm:$0xff]
        %v474 = vld [vmem:[%s437 + $0x70] sm:$0xff]
        %v475 = vld [vmem:[%s437 + $0x78] sm:$0xff]
        %v476 = vlaneseq
        %v477 = vshrl.u32 %v476, 7
        %v478 = vadd.s32 %v477, 8
        %v479 = vadd.s32 %v477, 16
        %v480 = vadd.s32 %v477, 24
        %v481 = vadd.s32 %v477, 32
        %v482 = vadd.s32 %v477, 40
        %v483 = vadd.s32 %v477, 48
        %v484 = vadd.s32 %v477, 56
        %v485 = vlaneseq
        %v486 = vand.u32 %v485, 127
        %v487 = vadd.s32 %v486, 1
        %vm488 = vcmp.eq.s32.totalorder %v477, %v487
        %vm489 = vcmp.eq.s32.totalorder %v478, %v487
        %vm490 = vcmp.eq.s32.totalorder %v479, %v487
        %vm491 = vcmp.eq.s32.totalorder %v480, %v487
        %vm492 = vcmp.eq.s32.totalorder %v481, %v487
        %vm493 = vcmp.eq.s32.totalorder %v482, %v487
        %vm494 = vcmp.eq.s32.totalorder %v483, %v487
        %vm495 = vcmp.eq.s32.totalorder %v484, %v487
        %v496 = vsel %vm488, 1, 0
        %v497 = vsel %vm489, 1, 0
        %v498 = vsel %vm490, 1, 0
        %v499 = vsel %vm491, 1, 0
        %v500 = vsel %vm492, 1, 0
        %v501 = vsel %vm493, 1, 0
        %v502 = vsel %vm494, 1, 0
        %v503 = vsel %vm495, 1, 0
        %v504 = vcvt.s32.f32 %v496
        %v505 = vcvt.s32.f32 %v497
        %v506 = vcvt.s32.f32 %v498
        %v507 = vcvt.s32.f32 %v499
        %v508 = vcvt.s32.f32 %v500
        %v509 = vcvt.s32.f32 %v501
        %v510 = vcvt.s32.f32 %v502
        %v511 = vcvt.s32.f32 %v503
        %vm512 = vcmp.eq.s32.totalorder %v477, %v486
        %vm513 = vcmp.eq.s32.totalorder %v478, %v486
        %vm514 = vcmp.eq.s32.totalorder %v479, %v486
        %vm515 = vcmp.eq.s32.totalorder %v480, %v486
        %vm516 = vcmp.eq.s32.totalorder %v481, %v486
        %vm517 = vcmp.eq.s32.totalorder %v482, %v486
        %vm518 = vcmp.eq.s32.totalorder %v483, %v486
        %vm519 = vcmp.eq.s32.totalorder %v484, %v486
        %v520 = vsel %vm512, 1, 0
        %v521 = vsel %vm513, 1, 0
        %v522 = vsel %vm514, 1, 0
        %v523 = vsel %vm515, 1, 0
        %v524 = vsel %vm516, 1, 0
        %v525 = vsel %vm517, 1, 0
        %v526 = vsel %vm518, 1, 0
        %v527 = vsel %vm519, 1, 0
        %v528 = vcvt.s32.f32 %v520
        %v529 = vcvt.s32.f32 %v521
        %v530 = vcvt.s32.f32 %v522
        %v531 = vcvt.s32.f32 %v523
        %v532 = vcvt.s32.f32 %v524
        %v533 = vcvt.s32.f32 %v525
        %v534 = vcvt.s32.f32 %v526
        %v535 = vcvt.s32.f32 %v527
        %v536 = vsub.f32 %v504, %v528
        %v537 = vsub.f32 %v505, %v529
        %v538 = vsub.f32 %v506, %v530
        %v539 = vsub.f32 %v507, %v531
        %v540 = vsub.f32 %v508, %v532
        %v541 = vsub.f32 %v509, %v533
        %v542 = vsub.f32 %v510, %v534
        %v543 = vsub.f32 %v511, %v535
        %vm544 = vcmask 523264
        %v546 = vsel %vm544, %v444, 0
        %v549 = vsel %vm544, %v445, 0
        %v552 = vsel %vm544, %v446, 0
        %v555 = vsel %vm544, %v447, 0
        %v558 = vsel %vm544, %v448, 0
        %v561 = vsel %vm544, %v449, 0
        %v564 = vsel %vm544, %v450, 0
        %v567 = vsel %vm544, %v451, 0
        %v570 = vsel %vm544, %v452, 0
        %v573 = vsel %vm544, %v453, 0
        %v576 = vsel %vm544, %v454, 0
        %v579 = vsel %vm544, %v455, 0
        %v582 = vsel %vm544, %v456, 0
        %v585 = vsel %vm544, %v457, 0
        %v588 = vsel %vm544, %v458, 0
        %v591 = vsel %vm544, %v459, 0
        %593 = vmatprep.subr.mxu0 0.0
        %v594 = vand.u32 %v536, 4294901760
        %595 = vmatpush1.msra.mxu0 %v594
        %596 = vmatprep.subr.mxu0 0.0
        %v597 = vand.u32 %v537, 4294901760
        %598 = vmatpush1.msra.mxu0 %v597
        %599 = vmatprep.subr.mxu0 0.0
        %v600 = vand.u32 %v538, 4294901760
        %601 = vmatpush1.msra.mxu0 %v600
        %602 = vmatprep.subr.mxu0 0.0
        %v603 = vand.u32 %v539, 4294901760
        %604 = vmatpush1.msra.mxu0 %v603
        %605 = vmatprep.subr.mxu0 0.0
        %v606 = vand.u32 %v540, 4294901760
        %607 = vmatpush1.msra.mxu0 %v606
        %608 = vmatprep.subr.mxu0 0.0
        %v609 = vand.u32 %v541, 4294901760
        %610 = vmatpush1.msra.mxu0 %v609
        %611 = vmatprep.subr.mxu0 0.0
        %v612 = vand.u32 %v542, 4294901760
        %613 = vmatpush1.msra.mxu0 %v612
        %614 = vmatprep.subr.mxu0 0.0
        %v615 = vand.u32 %v543, 4294901760
        %616 = vmatpush1.msra.mxu0 %v615
        %617 = vmatprep.subr.mxu0 0.0
        %618 = vmatpush1.msra.mxu0 0.0
        %619 = vmatprep.subr.mxu0 0.0
        %620 = vmatpush1.msra.mxu0 0.0
        %621 = vmatprep.subr.mxu0 0.0
        %622 = vmatpush1.msra.mxu0 0.0
        %623 = vmatprep.subr.mxu0 0.0
        %624 = vmatpush1.msra.mxu0 0.0
        %625 = vmatprep.subr.mxu0 0.0
        %626 = vmatpush1.msra.mxu0 0.0
        %627 = vmatprep.subr.mxu0 0.0
        %628 = vmatpush1.msra.mxu0 0.0
        %629 = vmatprep.subr.mxu0 0.0
        %630 = vmatpush1.msra.mxu0 0.0
        %631 = vmatprep.subr.mxu0 0.0
        %632 = vmatpush1.msra.mxu0 0.0
        %633 = vmatprep.subr.mxu0 0.0
        %634 = vmatpush1.msra.mxu0 0.0
        %635 = vmatprep.subr.mxu0 0.0
        %636 = vmatpush1.msra.mxu0 0.0
        %637 = vmatprep.subr.mxu0 0.0
        %638 = vmatpush1.msra.mxu0 0.0
        %639 = vmatprep.subr.mxu0 0.0
        %640 = vmatpush1.msra.mxu0 0.0
        %641 = vmatprep.subr.mxu0 0.0
        %642 = vmatpush1.msra.mxu0 0.0
        %643 = vmatprep.subr.mxu0 0.0
        %644 = vmatpush1.msra.mxu0 0.0
        %645 = vmatprep.subr.mxu0 0.0
        %646 = vmatpush1.msra.mxu0 0.0
        %647 = vmatprep.subr.mxu0 0.0
        %648 = vmatpush1.msra.mxu0 0.0
        %649 = vmatprep.subr.mxu0 0.0
        %650 = vmatpush1.msra.mxu0 0.0
        %651 = vmatprep.subr.mxu0 0.0
        %652 = vmatpush1.msra.mxu0 0.0
        %653 = vmatprep.subr.mxu0 0.0
        %654 = vmatpush1.msra.mxu0 0.0
        %655 = vmatprep.subr.mxu0 0.0
        %656 = vmatpush1.msra.mxu0 0.0
        %657 = vmatprep.subr.mxu0 0.0
        %658 = vmatpush1.msra.mxu0 0.0
        %659 = vmatprep.subr.mxu0 0.0
        %660 = vmatpush1.msra.mxu0 0.0
        %661 = vmatprep.subr.mxu0 0.0
        %662 = vmatpush1.msra.mxu0 0.0
        %663 = vmatprep.subr.mxu0 0.0
        %664 = vmatpush1.msra.mxu0 0.0
        %665 = vmatprep.mubr.f32.mxu0 0.0
        %v666 = vand.u32 %v546, 4294901760
        %v667 = vsub.f32 %v546, %v666
        %v668 = vand.u32 %v667, 4294901760
        %v669 = vsub.f32 %v667, %v668
        %v670 = vand.u32 %v669, 4294901760
        %671 = vmatmul.mubr.f32.gmra.mrb[0].mxu0 %v670
        %v672 = vpop.f32.mrb[0].mxu0
        %v673 = vadd.f32 0.0, %v672
        %v674 = vpop.f32.mrb[0].mxu0
        %675 = vmatprep.mubr.f32.mxu0 0.0
        %v676 = vand.u32 %v549, 4294901760
        %v677 = vsub.f32 %v549, %v676
        %v678 = vand.u32 %v677, 4294901760
        %v679 = vsub.f32 %v677, %v678
        %v680 = vand.u32 %v679, 4294901760
        %681 = vmatmul.mubr.f32.gmra.mrb[0].mxu0 %v680
        %v682 = vpop.f32.mrb[0].mxu0
        %v683 = vadd.f32 0.0, %v682
        %v684 = vpop.f32.mrb[0].mxu0
        %685 = vmatprep.mubr.f32.mxu0 0.0
        %v686 = vand.u32 %v552, 4294901760
        %v687 = vsub.f32 %v552, %v686
        %v688 = vand.u32 %v687, 4294901760
        %v689 = vsub.f32 %v687, %v688
        %v690 = vand.u32 %v689, 4294901760
        %691 = vmatmul.mubr.f32.gmra.mrb[0].mxu0 %v690
        %v692 = vpop.f32.mrb[0].mxu0
        %v693 = vadd.f32 0.0, %v692
        %v694 = vpop.f32.mrb[0].mxu0
        %695 = vmatprep.mubr.f32.mxu0 0.0
        %v696 = vand.u32 %v555, 4294901760
        %v697 = vsub.f32 %v555, %v696
        %v698 = vand.u32 %v697, 4294901760
        %v699 = vsub.f32 %v697, %v698
        %v700 = vand.u32 %v699, 4294901760
        %701 = vmatmul.mubr.f32.gmra.mrb[0].mxu0 %v700
        %v702 = vpop.f32.mrb[0].mxu0
        %v703 = vadd.f32 0.0, %v702
        %v704 = vpop.f32.mrb[0].mxu0
        %705 = vmatprep.mubr.f32.mxu0 0.0
        %v706 = vand.u32 %v558, 4294901760
        %v707 = vsub.f32 %v558, %v706
        %v708 = vand.u32 %v707, 4294901760
        %v709 = vsub.f32 %v707, %v708
        %v710 = vand.u32 %v709, 4294901760
        %711 = vmatmul.mubr.f32.gmra.mrb[0].mxu0 %v710
        %v712 = vpop.f32.mrb[0].mxu0
        %v713 = vadd.f32 0.0, %v712
        %v714 = vpop.f32.mrb[0].mxu0
        %715 = vmatprep.mubr.f32.mxu0 0.0
        %v716 = vand.u32 %v561, 4294901760
        %v717 = vsub.f32 %v561, %v716
        %v718 = vand.u32 %v717, 4294901760
        %v719 = vsub.f32 %v717, %v718
        %v720 = vand.u32 %v719, 4294901760
        %721 = vmatmul.mubr.f32.gmra.mrb[0].mxu0 %v720
        %v722 = vpop.f32.mrb[0].mxu0
        %v723 = vadd.f32 0.0, %v722
        %v724 = vpop.f32.mrb[0].mxu0
        %725 = vmatprep.mubr.f32.mxu0 0.0
        %v726 = vand.u32 %v564, 4294901760
        %v727 = vsub.f32 %v564, %v726
        %v728 = vand.u32 %v727, 4294901760
        %v729 = vsub.f32 %v727, %v728
        %v730 = vand.u32 %v729, 4294901760
        %731 = vmatmul.mubr.f32.gmra.mrb[0].mxu0 %v730
        %v732 = vpop.f32.mrb[0].mxu0
        %v733 = vadd.f32 0.0, %v732
        %v734 = vpop.f32.mrb[0].mxu0
        %735 = vmatprep.mubr.f32.mxu0 0.0
        %v736 = vand.u32 %v567, 4294901760
        %v737 = vsub.f32 %v567, %v736
        %v738 = vand.u32 %v737, 4294901760
        %v739 = vsub.f32 %v737, %v738
        %v740 = vand.u32 %v739, 4294901760
        %741 = vmatmul.mubr.f32.gmra.mrb[0].mxu0 %v740
        %v742 = vpop.f32.mrb[0].mxu0
        %v743 = vadd.f32 0.0, %v742
        %v744 = vpop.f32.mrb[0].mxu0
        %745 = vmatprep.mubr.f32.mxu0 0.0
        %v746 = vand.u32 %v570, 4294901760
        %v747 = vsub.f32 %v570, %v746
        %v748 = vand.u32 %v747, 4294901760
        %v749 = vsub.f32 %v747, %v748
        %v750 = vand.u32 %v749, 4294901760
        %751 = vmatmul.mubr.f32.gmra.mrb[0].mxu0 %v750
        %v752 = vpop.f32.mrb[0].mxu0
        %v753 = vadd.f32 0.0, %v752
        %v754 = vpop.f32.mrb[0].mxu0
        %755 = vmatprep.mubr.f32.mxu0 0.0
        %v756 = vand.u32 %v573, 4294901760
        %v757 = vsub.f32 %v573, %v756
        %v758 = vand.u32 %v757, 4294901760
        %v759 = vsub.f32 %v757, %v758
        %v760 = vand.u32 %v759, 4294901760
        %761 = vmatmul.mubr.f32.gmra.mrb[0].mxu0 %v760
        %v762 = vpop.f32.mrb[0].mxu0
        %v763 = vadd.f32 0.0, %v762
        %v764 = vpop.f32.mrb[0].mxu0
        %765 = vmatprep.mubr.f32.mxu0 0.0
        %v766 = vand.u32 %v576, 4294901760
        %v767 = vsub.f32 %v576, %v766
        %v768 = vand.u32 %v767, 4294901760
        %v769 = vsub.f32 %v767, %v768
        %v770 = vand.u32 %v769, 4294901760
        %771 = vmatmul.mubr.f32.gmra.mrb[0].mxu0 %v770
        %v772 = vpop.f32.mrb[0].mxu0
        %v773 = vadd.f32 0.0, %v772
        %v774 = vpop.f32.mrb[0].mxu0
        %775 = vmatprep.mubr.f32.mxu0 0.0
        %v776 = vand.u32 %v579, 4294901760
        %v777 = vsub.f32 %v579, %v776
        %v778 = vand.u32 %v777, 4294901760
        %v779 = vsub.f32 %v777, %v778
        %v780 = vand.u32 %v779, 4294901760
        %781 = vmatmul.mubr.f32.gmra.mrb[0].mxu0 %v780
        %v782 = vpop.f32.mrb[0].mxu0
        %v783 = vadd.f32 0.0, %v782
        %v784 = vpop.f32.mrb[0].mxu0
        %785 = vmatprep.mubr.f32.mxu0 0.0
        %v786 = vand.u32 %v582, 4294901760
        %v787 = vsub.f32 %v582, %v786
        %v788 = vand.u32 %v787, 4294901760
        %v789 = vsub.f32 %v787, %v788
        %v790 = vand.u32 %v789, 4294901760
        %791 = vmatmul.mubr.f32.gmra.mrb[0].mxu0 %v790
        %v792 = vpop.f32.mrb[0].mxu0
        %v793 = vadd.f32 0.0, %v792
        %v794 = vpop.f32.mrb[0].mxu0
        %795 = vmatprep.mubr.f32.mxu0 0.0
        %v796 = vand.u32 %v585, 4294901760
        %v797 = vsub.f32 %v585, %v796
        %v798 = vand.u32 %v797, 4294901760
        %v799 = vsub.f32 %v797, %v798
        %v800 = vand.u32 %v799, 4294901760
        %801 = vmatmul.mubr.f32.gmra.mrb[0].mxu0 %v800
        %v802 = vpop.f32.mrb[0].mxu0
        %v803 = vadd.f32 0.0, %v802
        %v804 = vpop.f32.mrb[0].mxu0
        %805 = vmatprep.mubr.f32.mxu0 0.0
        %v806 = vand.u32 %v588, 4294901760
        %v807 = vsub.f32 %v588, %v806
        %v808 = vand.u32 %v807, 4294901760
        %v809 = vsub.f32 %v807, %v808
        %v810 = vand.u32 %v809, 4294901760
        %811 = vmatmul.mubr.f32.gmra.mrb[0].mxu0 %v810
        %v812 = vpop.f32.mrb[0].mxu0
        %v813 = vadd.f32 0.0, %v812
        %v814 = vpop.f32.mrb[0].mxu0
        %815 = vmatprep.mubr.f32.mxu0 0.0
        %v816 = vand.u32 %v591, 4294901760
        %v817 = vsub.f32 %v591, %v816
        %v818 = vand.u32 %v817, 4294901760
        %v819 = vsub.f32 %v817, %v818
        %v820 = vand.u32 %v819, 4294901760
        %821 = vmatmul.mubr.f32.gmra.mrb[0].mxu0 %v820
        %v822 = vpop.f32.mrb[0].mxu0
        %v823 = vadd.f32 0.0, %v822
        %v824 = vpop.f32.mrb[0].mxu0
        %825 = vdwg.mxu0
        %826 = vmatprep.subr.mxu0 0.0
        %v827 = vand.u32 %v536, 4294901760
        %v828 = vsub.f32 %v536, %v827
        %v829 = vand.u32 %v828, 4294901760
        %v830 = vsub.f32 %v828, %v829
        %v831 = vand.u32 %v830, 4294901760
        %832 = vmatpush1.msra.mxu0 %v831
        %833 = vmatprep.subr.mxu0 0.0
        %v834 = vand.u32 %v537, 4294901760
        %v835 = vsub.f32 %v537, %v834
        %v836 = vand.u32 %v835, 4294901760
        %v837 = vsub.f32 %v835, %v836
        %v838 = vand.u32 %v837, 4294901760
        %839 = vmatpush1.msra.mxu0 %v838
        %840 = vmatprep.subr.mxu0 0.0
        %v841 = vand.u32 %v538, 4294901760
        %v842 = vsub.f32 %v538, %v841
        %v843 = vand.u32 %v842, 4294901760
        %v844 = vsub.f32 %v842, %v843
        %v845 = vand.u32 %v844, 4294901760
        %846 = vmatpush1.msra.mxu0 %v845
        %847 = vmatprep.subr.mxu0 0.0
        %v848 = vand.u32 %v539, 4294901760
        %v849 = vsub.f32 %v539, %v848
        %v850 = vand.u32 %v849, 4294901760
        %v851 = vsub.f32 %v849, %v850
        %v852 = vand.u32 %v851, 4294901760
        %853 = vmatpush1.msra.mxu0 %v852
        %854 = vmatprep.subr.mxu0 0.0
        %v855 = vand.u32 %v540, 4294901760
        %v856 = vsub.f32 %v540, %v855
        %v857 = vand.u32 %v856, 4294901760
        %v858 = vsub.f32 %v856, %v857
        %v859 = vand.u32 %v858, 4294901760
        %860 = vmatpush1.msra.mxu0 %v859
        %861 = vmatprep.subr.mxu0 0.0
        %v862 = vand.u32 %v541, 4294901760
        %v863 = vsub.f32 %v541, %v862
        %v864 = vand.u32 %v863, 4294901760
        %v865 = vsub.f32 %v863, %v864
        %v866 = vand.u32 %v865, 4294901760
        %867 = vmatpush1.msra.mxu0 %v866
        %868 = vmatprep.subr.mxu0 0.0
        %v869 = vand.u32 %v542, 4294901760
        %v870 = vsub.f32 %v542, %v869
        %v871 = vand.u32 %v870, 4294901760
        %v872 = vsub.f32 %v870, %v871
        %v873 = vand.u32 %v872, 4294901760
        %874 = vmatpush1.msra.mxu0 %v873
        %875 = vmatprep.subr.mxu0 0.0
        %v876 = vand.u32 %v543, 4294901760
        %v877 = vsub.f32 %v543, %v876
        %v878 = vand.u32 %v877, 4294901760
        %v879 = vsub.f32 %v877, %v878
        %v880 = vand.u32 %v879, 4294901760
        %881 = vmatpush1.msra.mxu0 %v880
        %882 = vmatprep.subr.mxu0 0.0
        %883 = vmatpush1.msra.mxu0 0.0
        %884 = vmatprep.subr.mxu0 0.0
        %885 = vmatpush1.msra.mxu0 0.0
        %886 = vmatprep.subr.mxu0 0.0
        %887 = vmatpush1.msra.mxu0 0.0
        %888 = vmatprep.subr.mxu0 0.0
        %889 = vmatpush1.msra.mxu0 0.0
        %890 = vmatprep.subr.mxu0 0.0
        %891 = vmatpush1.msra.mxu0 0.0
        %892 = vmatprep.subr.mxu0 0.0
        %893 = vmatpush1.msra.mxu0 0.0
        %894 = vmatprep.subr.mxu0 0.0
        %895 = vmatpush1.msra.mxu0 0.0
        %896 = vmatprep.subr.mxu0 0.0
        %897 = vmatpush1.msra.mxu0 0.0
        %898 = vmatprep.subr.mxu0 0.0
        %899 = vmatpush1.msra.mxu0 0.0
        %900 = vmatprep.subr.mxu0 0.0
        %901 = vmatpush1.msra.mxu0 0.0
        %902 = vmatprep.subr.mxu0 0.0
        %903 = vmatpush1.msra.mxu0 0.0
        %904 = vmatprep.subr.mxu0 0.0
        %905 = vmatpush1.msra.mxu0 0.0
        %906 = vmatprep.subr.mxu0 0.0
        %907 = vmatpush1.msra.mxu0 0.0
        %908 = vmatprep.subr.mxu0 0.0
        %909 = vmatpush1.msra.mxu0 0.0
        %910 = vmatprep.subr.mxu0 0.0
        %911 = vmatpush1.msra.mxu0 0.0
        %912 = vmatprep.subr.mxu0 0.0
        %913 = vmatpush1.msra.mxu0 0.0
        %914 = vmatprep.subr.mxu0 0.0
        %915 = vmatpush1.msra.mxu0 0.0
        %916 = vmatprep.subr.mxu0 0.0
        %917 = vmatpush1.msra.mxu0 0.0
        %918 = vmatprep.subr.mxu0 0.0
        %919 = vmatpush1.msra.mxu0 0.0
        %920 = vmatprep.subr.mxu0 0.0
        %921 = vmatpush1.msra.mxu0 0.0
        %922 = vmatprep.subr.mxu0 0.0
        %923 = vmatpush1.msra.mxu0 0.0
        %924 = vmatprep.subr.mxu0 0.0
        %925 = vmatpush1.msra.mxu0 0.0
        %926 = vmatprep.subr.mxu0 0.0
        %927 = vmatpush1.msra.mxu0 0.0
        %928 = vmatprep.subr.mxu0 0.0
        %929 = vmatpush1.msra.mxu0 0.0
        %930 = vmatprep.mubr.f32.mxu0 0.0
        %v931 = vand.u32 %v546, 4294901760
        %932 = vmatmul.mubr.f32.gmra.mrb[0].mxu0 %v931
        %v933 = vpop.f32.mrb[0].mxu0
        %v934 = vadd.f32 %v673, %v933
        %v935 = vpop.f32.mrb[0].mxu0
        %936 = vmatprep.mubr.f32.mxu0 0.0
        %v937 = vand.u32 %v549, 4294901760
        %938 = vmatmul.mubr.f32.gmra.mrb[0].mxu0 %v937
        %v939 = vpop.f32.mrb[0].mxu0
        %v940 = vadd.f32 %v683, %v939
        %v941 = vpop.f32.mrb[0].mxu0
        %942 = vmatprep.mubr.f32.mxu0 0.0
        %v943 = vand.u32 %v552, 4294901760
        %944 = vmatmul.mubr.f32.gmra.mrb[0].mxu0 %v943
        %v945 = vpop.f32.mrb[0].mxu0
        %v946 = vadd.f32 %v693, %v945
        %v947 = vpop.f32.mrb[0].mxu0
        %948 = vmatprep.mubr.f32.mxu0 0.0
        %v949 = vand.u32 %v555, 4294901760
        %950 = vmatmul.mubr.f32.gmra.mrb[0].mxu0 %v949
        %v951 = vpop.f32.mrb[0].mxu0
        %v952 = vadd.f32 %v703, %v951
        %v953 = vpop.f32.mrb[0].mxu0
        %954 = vmatprep.mubr.f32.mxu0 0.0
        %v955 = vand.u32 %v558, 4294901760
        %956 = vmatmul.mubr.f32.gmra.mrb[0].mxu0 %v955
        %v957 = vpop.f32.mrb[0].mxu0
        %v958 = vadd.f32 %v713, %v957
        %v959 = vpop.f32.mrb[0].mxu0
        %960 = vmatprep.mubr.f32.mxu0 0.0
        %v961 = vand.u32 %v561, 4294901760
        %962 = vmatmul.mubr.f32.gmra.mrb[0].mxu0 %v961
        %v963 = vpop.f32.mrb[0].mxu0
        %v964 = vadd.f32 %v723, %v963
        %v965 = vpop.f32.mrb[0].mxu0
        %966 = vmatprep.mubr.f32.mxu0 0.0
        %v967 = vand.u32 %v564, 4294901760
        %968 = vmatmul.mubr.f32.gmra.mrb[0].mxu0 %v967
        %v969 = vpop.f32.mrb[0].mxu0
        %v970 = vadd.f32 %v733, %v969
        %v971 = vpop.f32.mrb[0].mxu0
        %972 = vmatprep.mubr.f32.mxu0 0.0
        %v973 = vand.u32 %v567, 4294901760
        %974 = vmatmul.mubr.f32.gmra.mrb[0].mxu0 %v973
        %v975 = vpop.f32.mrb[0].mxu0
        %v976 = vadd.f32 %v743, %v975
        %v977 = vpop.f32.mrb[0].mxu0
        %978 = vmatprep.mubr.f32.mxu0 0.0
        %v979 = vand.u32 %v570, 4294901760
        %980 = vmatmul.mubr.f32.gmra.mrb[0].mxu0 %v979
        %v981 = vpop.f32.mrb[0].mxu0
        %v982 = vadd.f32 %v753, %v981
        %v983 = vpop.f32.mrb[0].mxu0
        %984 = vmatprep.mubr.f32.mxu0 0.0
        %v985 = vand.u32 %v573, 4294901760
        %986 = vmatmul.mubr.f32.gmra.mrb[0].mxu0 %v985
        %v987 = vpop.f32.mrb[0].mxu0
        %v988 = vadd.f32 %v763, %v987
        %v989 = vpop.f32.mrb[0].mxu0
        %990 = vmatprep.mubr.f32.mxu0 0.0
        %v991 = vand.u32 %v576, 4294901760
        %992 = vmatmul.mubr.f32.gmra.mrb[0].mxu0 %v991
        %v993 = vpop.f32.mrb[0].mxu0
        %v994 = vadd.f32 %v773, %v993
        %v995 = vpop.f32.mrb[0].mxu0
        %996 = vmatprep.mubr.f32.mxu0 0.0
        %v997 = vand.u32 %v579, 4294901760
        %998 = vmatmul.mubr.f32.gmra.mrb[0].mxu0 %v997
        %v999 = vpop.f32.mrb[0].mxu0
        %v1000 = vadd.f32 %v783, %v999
        %v1001 = vpop.f32.mrb[0].mxu0
        %1002 = vmatprep.mubr.f32.mxu0 0.0
        %v1003 = vand.u32 %v582, 4294901760
        %1004 = vmatmul.mubr.f32.gmra.mrb[0].mxu0 %v1003
        %v1005 = vpop.f32.mrb[0].mxu0
        %v1006 = vadd.f32 %v793, %v1005
        %v1007 = vpop.f32.mrb[0].mxu0
        %1008 = vmatprep.mubr.f32.mxu0 0.0
        %v1009 = vand.u32 %v585, 4294901760
        %1010 = vmatmul.mubr.f32.gmra.mrb[0].mxu0 %v1009
        %v1011 = vpop.f32.mrb[0].mxu0
        %v1012 = vadd.f32 %v803, %v1011
        %v1013 = vpop.f32.mrb[0].mxu0
        %1014 = vmatprep.mubr.f32.mxu0 0.0
        %v1015 = vand.u32 %v588, 4294901760
        %1016 = vmatmul.mubr.f32.gmra.mrb[0].mxu0 %v1015
        %v1017 = vpop.f32.mrb[0].mxu0
        %v1018 = vadd.f32 %v813, %v1017
        %v1019 = vpop.f32.mrb[0].mxu0
        %1020 = vmatprep.mubr.f32.mxu0 0.0
        %v1021 = vand.u32 %v591, 4294901760
        %1022 = vmatmul.mubr.f32.gmra.mrb[0].mxu0 %v1021
        %v1023 = vpop.f32.mrb[0].mxu0
        %v1024 = vadd.f32 %v823, %v1023
        %v1025 = vpop.f32.mrb[0].mxu0
        %1026 = vdwg.mxu0
        %1027 = vmatprep.subr.mxu0 0.0
        %v1028 = vand.u32 %v536, 4294901760
        %v1029 = vsub.f32 %v536, %v1028
        %1030 = vmatpush1.msra.mxu0 %v1029
        %1031 = vmatprep.subr.mxu0 0.0
        %v1032 = vand.u32 %v537, 4294901760
        %v1033 = vsub.f32 %v537, %v1032
        %1034 = vmatpush1.msra.mxu0 %v1033
        %1035 = vmatprep.subr.mxu0 0.0
        %v1036 = vand.u32 %v538, 4294901760
        %v1037 = vsub.f32 %v538, %v1036
        %1038 = vmatpush1.msra.mxu0 %v1037
        %1039 = vmatprep.subr.mxu0 0.0
        %v1040 = vand.u32 %v539, 4294901760
        %v1041 = vsub.f32 %v539, %v1040
        %1042 = vmatpush1.msra.mxu0 %v1041
        %1043 = vmatprep.subr.mxu0 0.0
        %v1044 = vand.u32 %v540, 4294901760
        %v1045 = vsub.f32 %v540, %v1044
        %1046 = vmatpush1.msra.mxu0 %v1045
        %1047 = vmatprep.subr.mxu0 0.0
        %v1048 = vand.u32 %v541, 4294901760
        %v1049 = vsub.f32 %v541, %v1048
        %1050 = vmatpush1.msra.mxu0 %v1049
        %1051 = vmatprep.subr.mxu0 0.0
        %v1052 = vand.u32 %v542, 4294901760
        %v1053 = vsub.f32 %v542, %v1052
        %1054 = vmatpush1.msra.mxu0 %v1053
        %1055 = vmatprep.subr.mxu0 0.0
        %v1056 = vand.u32 %v543, 4294901760
        %v1057 = vsub.f32 %v543, %v1056
        %1058 = vmatpush1.msra.mxu0 %v1057
        %1059 = vmatprep.subr.mxu0 0.0
        %1060 = vmatpush1.msra.mxu0 0.0
        %1061 = vmatprep.subr.mxu0 0.0
        %1062 = vmatpush1.msra.mxu0 0.0
        %1063 = vmatprep.subr.mxu0 0.0
        %1064 = vmatpush1.msra.mxu0 0.0
        %1065 = vmatprep.subr.mxu0 0.0
        %1066 = vmatpush1.msra.mxu0 0.0
        %1067 = vmatprep.subr.mxu0 0.0
        %1068 = vmatpush1.msra.mxu0 0.0
        %1069 = vmatprep.subr.mxu0 0.0
        %1070 = vmatpush1.msra.mxu0 0.0
        %1071 = vmatprep.subr.mxu0 0.0
        %1072 = vmatpush1.msra.mxu0 0.0
        %1073 = vmatprep.subr.mxu0 0.0
        %1074 = vmatpush1.msra.mxu0 0.0
        %1075 = vmatprep.subr.mxu0 0.0
        %1076 = vmatpush1.msra.mxu0 0.0
        %1077 = vmatprep.subr.mxu0 0.0
        %1078 = vmatpush1.msra.mxu0 0.0
        %1079 = vmatprep.subr.mxu0 0.0
        %1080 = vmatpush1.msra.mxu0 0.0
        %1081 = vmatprep.subr.mxu0 0.0
        %1082 = vmatpush1.msra.mxu0 0.0
        %1083 = vmatprep.subr.mxu0 0.0
        %1084 = vmatpush1.msra.mxu0 0.0
        %1085 = vmatprep.subr.mxu0 0.0
        %1086 = vmatpush1.msra.mxu0 0.0
        %1087 = vmatprep.subr.mxu0 0.0
        %1088 = vmatpush1.msra.mxu0 0.0
        %1089 = vmatprep.subr.mxu0 0.0
        %1090 = vmatpush1.msra.mxu0 0.0
        %1091 = vmatprep.subr.mxu0 0.0
        %1092 = vmatpush1.msra.mxu0 0.0
        %1093 = vmatprep.subr.mxu0 0.0
        %1094 = vmatpush1.msra.mxu0 0.0
        %1095 = vmatprep.subr.mxu0 0.0
        %1096 = vmatpush1.msra.mxu0 0.0
        %1097 = vmatprep.subr.mxu0 0.0
        %1098 = vmatpush1.msra.mxu0 0.0
        %1099 = vmatprep.subr.mxu0 0.0
        %1100 = vmatpush1.msra.mxu0 0.0
        %1101 = vmatprep.subr.mxu0 0.0
        %1102 = vmatpush1.msra.mxu0 0.0
        %1103 = vmatprep.subr.mxu0 0.0
        %1104 = vmatpush1.msra.mxu0 0.0
        %1105 = vmatprep.subr.mxu0 0.0
        %1106 = vmatpush1.msra.mxu0 0.0
        %1107 = vmatprep.mubr.f32.mxu0 0.0
        %v1108 = vand.u32 %v546, 4294901760
        %v1109 = vsub.f32 %v546, %v1108
        %1110 = vmatmul.mubr.f32.gmra.mrb[0].mxu0 %v1109
        %v1111 = vpop.f32.mrb[0].mxu0
        %v1112 = vadd.f32 %v934, %v1111
        %v1113 = vpop.f32.mrb[0].mxu0
        %1114 = vmatprep.mubr.f32.mxu0 0.0
        %v1115 = vand.u32 %v549, 4294901760
        %v1116 = vsub.f32 %v549, %v1115
        %1117 = vmatmul.mubr.f32.gmra.mrb[0].mxu0 %v1116
        %v1118 = vpop.f32.mrb[0].mxu0
        %v1119 = vadd.f32 %v940, %v1118
        %v1120 = vpop.f32.mrb[0].mxu0
        %1121 = vmatprep.mubr.f32.mxu0 0.0
        %v1122 = vand.u32 %v552, 4294901760
        %v1123 = vsub.f32 %v552, %v1122
        %1124 = vmatmul.mubr.f32.gmra.mrb[0].mxu0 %v1123
        %v1125 = vpop.f32.mrb[0].mxu0
        %v1126 = vadd.f32 %v946, %v1125
        %v1127 = vpop.f32.mrb[0].mxu0
        %1128 = vmatprep.mubr.f32.mxu0 0.0
        %v1129 = vand.u32 %v555, 4294901760
        %v1130 = vsub.f32 %v555, %v1129
        %1131 = vmatmul.mubr.f32.gmra.mrb[0].mxu0 %v1130
        %v1132 = vpop.f32.mrb[0].mxu0
        %v1133 = vadd.f32 %v952, %v1132
        %v1134 = vpop.f32.mrb[0].mxu0
        %1135 = vmatprep.mubr.f32.mxu0 0.0
        %v1136 = vand.u32 %v558, 4294901760
        %v1137 = vsub.f32 %v558, %v1136
        %1138 = vmatmul.mubr.f32.gmra.mrb[0].mxu0 %v1137
        %v1139 = vpop.f32.mrb[0].mxu0
        %v1140 = vadd.f32 %v958, %v1139
        %v1141 = vpop.f32.mrb[0].mxu0
        %1142 = vmatprep.mubr.f32.mxu0 0.0
        %v1143 = vand.u32 %v561, 4294901760
        %v1144 = vsub.f32 %v561, %v1143
        %1145 = vmatmul.mubr.f32.gmra.mrb[0].mxu0 %v1144
        %v1146 = vpop.f32.mrb[0].mxu0
        %v1147 = vadd.f32 %v964, %v1146
        %v1148 = vpop.f32.mrb[0].mxu0
        %1149 = vmatprep.mubr.f32.mxu0 0.0
        %v1150 = vand.u32 %v564, 4294901760
        %v1151 = vsub.f32 %v564, %v1150
        %1152 = vmatmul.mubr.f32.gmra.mrb[0].mxu0 %v1151
        %v1153 = vpop.f32.mrb[0].mxu0
        %v1154 = vadd.f32 %v970, %v1153
        %v1155 = vpop.f32.mrb[0].mxu0
        %1156 = vmatprep.mubr.f32.mxu0 0.0
        %v1157 = vand.u32 %v567, 4294901760
        %v1158 = vsub.f32 %v567, %v1157
        %1159 = vmatmul.mubr.f32.gmra.mrb[0].mxu0 %v1158
        %v1160 = vpop.f32.mrb[0].mxu0
        %v1161 = vadd.f32 %v976, %v1160
        %v1162 = vpop.f32.mrb[0].mxu0
        %1163 = vmatprep.mubr.f32.mxu0 0.0
        %v1164 = vand.u32 %v570, 4294901760
        %v1165 = vsub.f32 %v570, %v1164
        %1166 = vmatmul.mubr.f32.gmra.mrb[0].mxu0 %v1165
        %v1167 = vpop.f32.mrb[0].mxu0
        %v1168 = vadd.f32 %v982, %v1167
        %v1169 = vpop.f32.mrb[0].mxu0
        %1170 = vmatprep.mubr.f32.mxu0 0.0
        %v1171 = vand.u32 %v573, 4294901760
        %v1172 = vsub.f32 %v573, %v1171
        %1173 = vmatmul.mubr.f32.gmra.mrb[0].mxu0 %v1172
        %v1174 = vpop.f32.mrb[0].mxu0
        %v1175 = vadd.f32 %v988, %v1174
        %v1176 = vpop.f32.mrb[0].mxu0
        %1177 = vmatprep.mubr.f32.mxu0 0.0
        %v1178 = vand.u32 %v576, 4294901760
        %v1179 = vsub.f32 %v576, %v1178
        %1180 = vmatmul.mubr.f32.gmra.mrb[0].mxu0 %v1179
        %v1181 = vpop.f32.mrb[0].mxu0
        %v1182 = vadd.f32 %v994, %v1181
        %v1183 = vpop.f32.mrb[0].mxu0
        %1184 = vmatprep.mubr.f32.mxu0 0.0
        %v1185 = vand.u32 %v579, 4294901760
        %v1186 = vsub.f32 %v579, %v1185
        %1187 = vmatmul.mubr.f32.gmra.mrb[0].mxu0 %v1186
        %v1188 = vpop.f32.mrb[0].mxu0
        %v1189 = vadd.f32 %v1000, %v1188
        %v1190 = vpop.f32.mrb[0].mxu0
        %1191 = vmatprep.mubr.f32.mxu0 0.0
        %v1192 = vand.u32 %v582, 4294901760
        %v1193 = vsub.f32 %v582, %v1192
        %1194 = vmatmul.mubr.f32.gmra.mrb[0].mxu0 %v1193
        %v1195 = vpop.f32.mrb[0].mxu0
        %v1196 = vadd.f32 %v1006, %v1195
        %v1197 = vpop.f32.mrb[0].mxu0
        %1198 = vmatprep.mubr.f32.mxu0 0.0
        %v1199 = vand.u32 %v585, 4294901760
        %v1200 = vsub.f32 %v585, %v1199
        %1201 = vmatmul.mubr.f32.gmra.mrb[0].mxu0 %v1200
        %v1202 = vpop.f32.mrb[0].mxu0
        %v1203 = vadd.f32 %v1012, %v1202
        %v1204 = vpop.f32.mrb[0].mxu0
        %1205 = vmatprep.mubr.f32.mxu0 0.0
        %v1206 = vand.u32 %v588, 4294901760
        %v1207 = vsub.f32 %v588, %v1206
        %1208 = vmatmul.mubr.f32.gmra.mrb[0].mxu0 %v1207
        %v1209 = vpop.f32.mrb[0].mxu0
        %v1210 = vadd.f32 %v1018, %v1209
        %v1211 = vpop.f32.mrb[0].mxu0
        %1212 = vmatprep.mubr.f32.mxu0 0.0
        %v1213 = vand.u32 %v591, 4294901760
        %v1214 = vsub.f32 %v591, %v1213
        %1215 = vmatmul.mubr.f32.gmra.mrb[0].mxu0 %v1214
        %v1216 = vpop.f32.mrb[0].mxu0
        %v1217 = vadd.f32 %v1024, %v1216
        %v1218 = vpop.f32.mrb[0].mxu0
        %1219 = vdwg.mxu0
        %1220 = vmatprep.subr.mxu0 0.0
        %v1221 = vand.u32 %v536, 4294901760
        %1222 = vmatpush1.msra.mxu0 %v1221
        %1223 = vmatprep.subr.mxu0 0.0
        %v1224 = vand.u32 %v537, 4294901760
        %1225 = vmatpush1.msra.mxu0 %v1224
        %1226 = vmatprep.subr.mxu0 0.0
        %v1227 = vand.u32 %v538, 4294901760
        %1228 = vmatpush1.msra.mxu0 %v1227
        %1229 = vmatprep.subr.mxu0 0.0
        %v1230 = vand.u32 %v539, 4294901760
        %1231 = vmatpush1.msra.mxu0 %v1230
        %1232 = vmatprep.subr.mxu0 0.0
        %v1233 = vand.u32 %v540, 4294901760
        %1234 = vmatpush1.msra.mxu0 %v1233
        %1235 = vmatprep.subr.mxu0 0.0
        %v1236 = vand.u32 %v541, 4294901760
        %1237 = vmatpush1.msra.mxu0 %v1236
        %1238 = vmatprep.subr.mxu0 0.0
        %v1239 = vand.u32 %v542, 4294901760
        %1240 = vmatpush1.msra.mxu0 %v1239
        %1241 = vmatprep.subr.mxu0 0.0
        %v1242 = vand.u32 %v543, 4294901760
        %1243 = vmatpush1.msra.mxu0 %v1242
        %1244 = vmatprep.subr.mxu0 0.0
        %1245 = vmatpush1.msra.mxu0 0.0
        %1246 = vmatprep.subr.mxu0 0.0
        %1247 = vmatpush1.msra.mxu0 0.0
        %1248 = vmatprep.subr.mxu0 0.0
        %1249 = vmatpush1.msra.mxu0 0.0
        %1250 = vmatprep.subr.mxu0 0.0
        %1251 = vmatpush1.msra.mxu0 0.0
        %1252 = vmatprep.subr.mxu0 0.0
        %1253 = vmatpush1.msra.mxu0 0.0
        %1254 = vmatprep.subr.mxu0 0.0
        %1255 = vmatpush1.msra.mxu0 0.0
        %1256 = vmatprep.subr.mxu0 0.0
        %1257 = vmatpush1.msra.mxu0 0.0
        %1258 = vmatprep.subr.mxu0 0.0
        %1259 = vmatpush1.msra.mxu0 0.0
        %1260 = vmatprep.subr.mxu0 0.0
        %1261 = vmatpush1.msra.mxu0 0.0
        %1262 = vmatprep.subr.mxu0 0.0
        %1263 = vmatpush1.msra.mxu0 0.0
        %1264 = vmatprep.subr.mxu0 0.0
        %1265 = vmatpush1.msra.mxu0 0.0
        %1266 = vmatprep.subr.mxu0 0.0
        %1267 = vmatpush1.msra.mxu0 0.0
        %1268 = vmatprep.subr.mxu0 0.0
        %1269 = vmatpush1.msra.mxu0 0.0
        %1270 = vmatprep.subr.mxu0 0.0
        %1271 = vmatpush1.msra.mxu0 0.0
        %1272 = vmatprep.subr.mxu0 0.0
        %1273 = vmatpush1.msra.mxu0 0.0
        %1274 = vmatprep.subr.mxu0 0.0
        %1275 = vmatpush1.msra.mxu0 0.0
        %1276 = vmatprep.subr.mxu0 0.0
        %1277 = vmatpush1.msra.mxu0 0.0
        %1278 = vmatprep.subr.mxu0 0.0
        %1279 = vmatpush1.msra.mxu0 0.0
        %1280 = vmatprep.subr.mxu0 0.0
        %1281 = vmatpush1.msra.mxu0 0.0
        %1282 = vmatprep.subr.mxu0 0.0
        %1283 = vmatpush1.msra.mxu0 0.0
        %1284 = vmatprep.subr.mxu0 0.0
        %1285 = vmatpush1.msra.mxu0 0.0
        %1286 = vmatprep.subr.mxu0 0.0
        %1287 = vmatpush1.msra.mxu0 0.0
        %1288 = vmatprep.subr.mxu0 0.0
        %1289 = vmatpush1.msra.mxu0 0.0
        %1290 = vmatprep.subr.mxu0 0.0
        %1291 = vmatpush1.msra.mxu0 0.0
        %1292 = vmatprep.mubr.f32.mxu0 0.0
        %v1293 = vand.u32 %v546, 4294901760
        %v1294 = vsub.f32 %v546, %v1293
        %v1295 = vand.u32 %v1294, 4294901760
        %1296 = vmatmul.mubr.f32.gmra.mrb[0].mxu0 %v1295
        %v1297 = vpop.f32.mrb[0].mxu0
        %v1298 = vadd.f32 %v1112, %v1297
        %v1299 = vpop.f32.mrb[0].mxu0
        %1300 = vmatprep.mubr.f32.mxu0 0.0
        %v1301 = vand.u32 %v549, 4294901760
        %v1302 = vsub.f32 %v549, %v1301
        %v1303 = vand.u32 %v1302, 4294901760
        %1304 = vmatmul.mubr.f32.gmra.mrb[0].mxu0 %v1303
        %v1305 = vpop.f32.mrb[0].mxu0
        %v1306 = vadd.f32 %v1119, %v1305
        %v1307 = vpop.f32.mrb[0].mxu0
        %1308 = vmatprep.mubr.f32.mxu0 0.0
        %v1309 = vand.u32 %v552, 4294901760
        %v1310 = vsub.f32 %v552, %v1309
        %v1311 = vand.u32 %v1310, 4294901760
        %1312 = vmatmul.mubr.f32.gmra.mrb[0].mxu0 %v1311
        %v1313 = vpop.f32.mrb[0].mxu0
        %v1314 = vadd.f32 %v1126, %v1313
        %v1315 = vpop.f32.mrb[0].mxu0
        %1316 = vmatprep.mubr.f32.mxu0 0.0
        %v1317 = vand.u32 %v555, 4294901760
        %v1318 = vsub.f32 %v555, %v1317
        %v1319 = vand.u32 %v1318, 4294901760
        %1320 = vmatmul.mubr.f32.gmra.mrb[0].mxu0 %v1319
        %v1321 = vpop.f32.mrb[0].mxu0
        %v1322 = vadd.f32 %v1133, %v1321
        %v1323 = vpop.f32.mrb[0].mxu0
        %1324 = vmatprep.mubr.f32.mxu0 0.0
        %v1325 = vand.u32 %v558, 4294901760
        %v1326 = vsub.f32 %v558, %v1325
        %v1327 = vand.u32 %v1326, 4294901760
        %1328 = vmatmul.mubr.f32.gmra.mrb[0].mxu0 %v1327
        %v1329 = vpop.f32.mrb[0].mxu0
        %v1330 = vadd.f32 %v1140, %v1329
        %v1331 = vpop.f32.mrb[0].mxu0
        %1332 = vmatprep.mubr.f32.mxu0 0.0
        %v1333 = vand.u32 %v561, 4294901760
        %v1334 = vsub.f32 %v561, %v1333
        %v1335 = vand.u32 %v1334, 4294901760
        %1336 = vmatmul.mubr.f32.gmra.mrb[0].mxu0 %v1335
        %v1337 = vpop.f32.mrb[0].mxu0
        %v1338 = vadd.f32 %v1147, %v1337
        %v1339 = vpop.f32.mrb[0].mxu0
        %1340 = vmatprep.mubr.f32.mxu0 0.0
        %v1341 = vand.u32 %v564, 4294901760
        %v1342 = vsub.f32 %v564, %v1341
        %v1343 = vand.u32 %v1342, 4294901760
        %1344 = vmatmul.mubr.f32.gmra.mrb[0].mxu0 %v1343
        %v1345 = vpop.f32.mrb[0].mxu0
        %v1346 = vadd.f32 %v1154, %v1345
        %v1347 = vpop.f32.mrb[0].mxu0
        %1348 = vmatprep.mubr.f32.mxu0 0.0
        %v1349 = vand.u32 %v567, 4294901760
        %v1350 = vsub.f32 %v567, %v1349
        %v1351 = vand.u32 %v1350, 4294901760
        %1352 = vmatmul.mubr.f32.gmra.mrb[0].mxu0 %v1351
        %v1353 = vpop.f32.mrb[0].mxu0
        %v1354 = vadd.f32 %v1161, %v1353
        %v1355 = vpop.f32.mrb[0].mxu0
        %1356 = vmatprep.mubr.f32.mxu0 0.0
        %v1357 = vand.u32 %v570, 4294901760
        %v1358 = vsub.f32 %v570, %v1357
        %v1359 = vand.u32 %v1358, 4294901760
        %1360 = vmatmul.mubr.f32.gmra.mrb[0].mxu0 %v1359
        %v1361 = vpop.f32.mrb[0].mxu0
        %v1362 = vadd.f32 %v1168, %v1361
        %v1363 = vpop.f32.mrb[0].mxu0
        %1364 = vmatprep.mubr.f32.mxu0 0.0
        %v1365 = vand.u32 %v573, 4294901760
        %v1366 = vsub.f32 %v573, %v1365
        %v1367 = vand.u32 %v1366, 4294901760
        %1368 = vmatmul.mubr.f32.gmra.mrb[0].mxu0 %v1367
        %v1369 = vpop.f32.mrb[0].mxu0
        %v1370 = vadd.f32 %v1175, %v1369
        %v1371 = vpop.f32.mrb[0].mxu0
        %1372 = vmatprep.mubr.f32.mxu0 0.0
        %v1373 = vand.u32 %v576, 4294901760
        %v1374 = vsub.f32 %v576, %v1373
        %v1375 = vand.u32 %v1374, 4294901760
        %1376 = vmatmul.mubr.f32.gmra.mrb[0].mxu0 %v1375
        %v1377 = vpop.f32.mrb[0].mxu0
        %v1378 = vadd.f32 %v1182, %v1377
        %v1379 = vpop.f32.mrb[0].mxu0
        %1380 = vmatprep.mubr.f32.mxu0 0.0
        %v1381 = vand.u32 %v579, 4294901760
        %v1382 = vsub.f32 %v579, %v1381
        %v1383 = vand.u32 %v1382, 4294901760
        %1384 = vmatmul.mubr.f32.gmra.mrb[0].mxu0 %v1383
        %v1385 = vpop.f32.mrb[0].mxu0
        %v1386 = vadd.f32 %v1189, %v1385
        %v1387 = vpop.f32.mrb[0].mxu0
        %1388 = vmatprep.mubr.f32.mxu0 0.0
        %v1389 = vand.u32 %v582, 4294901760
        %v1390 = vsub.f32 %v582, %v1389
        %v1391 = vand.u32 %v1390, 4294901760
        %1392 = vmatmul.mubr.f32.gmra.mrb[0].mxu0 %v1391
        %v1393 = vpop.f32.mrb[0].mxu0
        %v1394 = vadd.f32 %v1196, %v1393
        %v1395 = vpop.f32.mrb[0].mxu0
        %1396 = vmatprep.mubr.f32.mxu0 0.0
        %v1397 = vand.u32 %v585, 4294901760
        %v1398 = vsub.f32 %v585, %v1397
        %v1399 = vand.u32 %v1398, 4294901760
        %1400 = vmatmul.mubr.f32.gmra.mrb[0].mxu0 %v1399
        %v1401 = vpop.f32.mrb[0].mxu0
        %v1402 = vadd.f32 %v1203, %v1401
        %v1403 = vpop.f32.mrb[0].mxu0
        %1404 = vmatprep.mubr.f32.mxu0 0.0
        %v1405 = vand.u32 %v588, 4294901760
        %v1406 = vsub.f32 %v588, %v1405
        %v1407 = vand.u32 %v1406, 4294901760
        %1408 = vmatmul.mubr.f32.gmra.mrb[0].mxu0 %v1407
        %v1409 = vpop.f32.mrb[0].mxu0
        %v1410 = vadd.f32 %v1210, %v1409
        %v1411 = vpop.f32.mrb[0].mxu0
        %1412 = vmatprep.mubr.f32.mxu0 0.0
        %v1413 = vand.u32 %v591, 4294901760
        %v1414 = vsub.f32 %v591, %v1413
        %v1415 = vand.u32 %v1414, 4294901760
        %1416 = vmatmul.mubr.f32.gmra.mrb[0].mxu0 %v1415
        %v1417 = vpop.f32.mrb[0].mxu0
        %v1418 = vadd.f32 %v1217, %v1417
        %v1419 = vpop.f32.mrb[0].mxu0
        %1420 = vdwg.mxu0
        %1421 = vmatprep.subr.mxu0 0.0
        %v1422 = vand.u32 %v536, 4294901760
        %v1423 = vsub.f32 %v536, %v1422
        %v1424 = vand.u32 %v1423, 4294901760
        %1425 = vmatpush1.msra.mxu0 %v1424
        %1426 = vmatprep.subr.mxu0 0.0
        %v1427 = vand.u32 %v537, 4294901760
        %v1428 = vsub.f32 %v537, %v1427
        %v1429 = vand.u32 %v1428, 4294901760
        %1430 = vmatpush1.msra.mxu0 %v1429
        %1431 = vmatprep.subr.mxu0 0.0
        %v1432 = vand.u32 %v538, 4294901760
        %v1433 = vsub.f32 %v538, %v1432
        %v1434 = vand.u32 %v1433, 4294901760
        %1435 = vmatpush1.msra.mxu0 %v1434
        %1436 = vmatprep.subr.mxu0 0.0
        %v1437 = vand.u32 %v539, 4294901760
        %v1438 = vsub.f32 %v539, %v1437
        %v1439 = vand.u32 %v1438, 4294901760
        %1440 = vmatpush1.msra.mxu0 %v1439
        %1441 = vmatprep.subr.mxu0 0.0
        %v1442 = vand.u32 %v540, 4294901760
        %v1443 = vsub.f32 %v540, %v1442
        %v1444 = vand.u32 %v1443, 4294901760
        %1445 = vmatpush1.msra.mxu0 %v1444
        %1446 = vmatprep.subr.mxu0 0.0
        %v1447 = vand.u32 %v541, 4294901760
        %v1448 = vsub.f32 %v541, %v1447
        %v1449 = vand.u32 %v1448, 4294901760
        %1450 = vmatpush1.msra.mxu0 %v1449
        %1451 = vmatprep.subr.mxu0 0.0
        %v1452 = vand.u32 %v542, 4294901760
        %v1453 = vsub.f32 %v542, %v1452
        %v1454 = vand.u32 %v1453, 4294901760
        %1455 = vmatpush1.msra.mxu0 %v1454
        %1456 = vmatprep.subr.mxu0 0.0
        %v1457 = vand.u32 %v543, 4294901760
        %v1458 = vsub.f32 %v543, %v1457
        %v1459 = vand.u32 %v1458, 4294901760
        %1460 = vmatpush1.msra.mxu0 %v1459
        %1461 = vmatprep.subr.mxu0 0.0
        %1462 = vmatpush1.msra.mxu0 0.0
        %1463 = vmatprep.subr.mxu0 0.0
        %1464 = vmatpush1.msra.mxu0 0.0
        %1465 = vmatprep.subr.mxu0 0.0
        %1466 = vmatpush1.msra.mxu0 0.0
        %1467 = vmatprep.subr.mxu0 0.0
        %1468 = vmatpush1.msra.mxu0 0.0
        %1469 = vmatprep.subr.mxu0 0.0
        %1470 = vmatpush1.msra.mxu0 0.0
        %1471 = vmatprep.subr.mxu0 0.0
        %1472 = vmatpush1.msra.mxu0 0.0
        %1473 = vmatprep.subr.mxu0 0.0
        %1474 = vmatpush1.msra.mxu0 0.0
        %1475 = vmatprep.subr.mxu0 0.0
        %1476 = vmatpush1.msra.mxu0 0.0
        %1477 = vmatprep.subr.mxu0 0.0
        %1478 = vmatpush1.msra.mxu0 0.0
        %1479 = vmatprep.subr.mxu0 0.0
        %1480 = vmatpush1.msra.mxu0 0.0
        %1481 = vmatprep.subr.mxu0 0.0
        %1482 = vmatpush1.msra.mxu0 0.0
        %1483 = vmatprep.subr.mxu0 0.0
        %1484 = vmatpush1.msra.mxu0 0.0
        %1485 = vmatprep.subr.mxu0 0.0
        %1486 = vmatpush1.msra.mxu0 0.0
        %1487 = vmatprep.subr.mxu0 0.0
        %1488 = vmatpush1.msra.mxu0 0.0
        %1489 = vmatprep.subr.mxu0 0.0
        %1490 = vmatpush1.msra.mxu0 0.0
        %1491 = vmatprep.subr.mxu0 0.0
        %1492 = vmatpush1.msra.mxu0 0.0
        %1493 = vmatprep.subr.mxu0 0.0
        %1494 = vmatpush1.msra.mxu0 0.0
        %1495 = vmatprep.subr.mxu0 0.0
        %1496 = vmatpush1.msra.mxu0 0.0
        %1497 = vmatprep.subr.mxu0 0.0
        %1498 = vmatpush1.msra.mxu0 0.0
        %1499 = vmatprep.subr.mxu0 0.0
        %1500 = vmatpush1.msra.mxu0 0.0
        %1501 = vmatprep.subr.mxu0 0.0
        %1502 = vmatpush1.msra.mxu0 0.0
        %1503 = vmatprep.subr.mxu0 0.0
        %1504 = vmatpush1.msra.mxu0 0.0
        %1505 = vmatprep.subr.mxu0 0.0
        %1506 = vmatpush1.msra.mxu0 0.0
        %1507 = vmatprep.subr.mxu0 0.0
        %1508 = vmatpush1.msra.mxu0 0.0
        %1509 = vmatprep.mubr.f32.mxu0 0.0
        %v1510 = vand.u32 %v546, 4294901760
        %1511 = vmatmul.mubr.f32.gmra.mrb[0].mxu0 %v1510
        %v1512 = vpop.f32.mrb[0].mxu0
        %v1513 = vadd.f32 %v1298, %v1512
        %v1514 = vpop.f32.mrb[0].mxu0
        %1515 = vmatprep.mubr.f32.mxu0 0.0
        %v1516 = vand.u32 %v549, 4294901760
        %1517 = vmatmul.mubr.f32.gmra.mrb[0].mxu0 %v1516
        %v1518 = vpop.f32.mrb[0].mxu0
        %v1519 = vadd.f32 %v1306, %v1518
        %v1520 = vpop.f32.mrb[0].mxu0
        %1521 = vmatprep.mubr.f32.mxu0 0.0
        %v1522 = vand.u32 %v552, 4294901760
        %1523 = vmatmul.mubr.f32.gmra.mrb[0].mxu0 %v1522
        %v1524 = vpop.f32.mrb[0].mxu0
        %v1525 = vadd.f32 %v1314, %v1524
        %v1526 = vpop.f32.mrb[0].mxu0
        %1527 = vmatprep.mubr.f32.mxu0 0.0
        %v1528 = vand.u32 %v555, 4294901760
        %1529 = vmatmul.mubr.f32.gmra.mrb[0].mxu0 %v1528
        %v1530 = vpop.f32.mrb[0].mxu0
        %v1531 = vadd.f32 %v1322, %v1530
        %v1532 = vpop.f32.mrb[0].mxu0
        %1533 = vmatprep.mubr.f32.mxu0 0.0
        %v1534 = vand.u32 %v558, 4294901760
        %1535 = vmatmul.mubr.f32.gmra.mrb[0].mxu0 %v1534
        %v1536 = vpop.f32.mrb[0].mxu0
        %v1537 = vadd.f32 %v1330, %v1536
        %v1538 = vpop.f32.mrb[0].mxu0
        %1539 = vmatprep.mubr.f32.mxu0 0.0
        %v1540 = vand.u32 %v561, 4294901760
        %1541 = vmatmul.mubr.f32.gmra.mrb[0].mxu0 %v1540
        %v1542 = vpop.f32.mrb[0].mxu0
        %v1543 = vadd.f32 %v1338, %v1542
        %v1544 = vpop.f32.mrb[0].mxu0
        %1545 = vmatprep.mubr.f32.mxu0 0.0
        %v1546 = vand.u32 %v564, 4294901760
        %1547 = vmatmul.mubr.f32.gmra.mrb[0].mxu0 %v1546
        %v1548 = vpop.f32.mrb[0].mxu0
        %v1549 = vadd.f32 %v1346, %v1548
        %v1550 = vpop.f32.mrb[0].mxu0
        %1551 = vmatprep.mubr.f32.mxu0 0.0
        %v1552 = vand.u32 %v567, 4294901760
        %1553 = vmatmul.mubr.f32.gmra.mrb[0].mxu0 %v1552
        %v1554 = vpop.f32.mrb[0].mxu0
        %v1555 = vadd.f32 %v1354, %v1554
        %v1556 = vpop.f32.mrb[0].mxu0
        %1557 = vmatprep.mubr.f32.mxu0 0.0
        %v1558 = vand.u32 %v570, 4294901760
        %1559 = vmatmul.mubr.f32.gmra.mrb[0].mxu0 %v1558
        %v1560 = vpop.f32.mrb[0].mxu0
        %v1561 = vadd.f32 %v1362, %v1560
        %v1562 = vpop.f32.mrb[0].mxu0
        %1563 = vmatprep.mubr.f32.mxu0 0.0
        %v1564 = vand.u32 %v573, 4294901760
        %1565 = vmatmul.mubr.f32.gmra.mrb[0].mxu0 %v1564
        %v1566 = vpop.f32.mrb[0].mxu0
        %v1567 = vadd.f32 %v1370, %v1566
        %v1568 = vpop.f32.mrb[0].mxu0
        %1569 = vmatprep.mubr.f32.mxu0 0.0
        %v1570 = vand.u32 %v576, 4294901760
        %1571 = vmatmul.mubr.f32.gmra.mrb[0].mxu0 %v1570
        %v1572 = vpop.f32.mrb[0].mxu0
        %v1573 = vadd.f32 %v1378, %v1572
        %v1574 = vpop.f32.mrb[0].mxu0
        %1575 = vmatprep.mubr.f32.mxu0 0.0
        %v1576 = vand.u32 %v579, 4294901760
        %1577 = vmatmul.mubr.f32.gmra.mrb[0].mxu0 %v1576
        %v1578 = vpop.f32.mrb[0].mxu0
        %v1579 = vadd.f32 %v1386, %v1578
        %v1580 = vpop.f32.mrb[0].mxu0
        %1581 = vmatprep.mubr.f32.mxu0 0.0
        %v1582 = vand.u32 %v582, 4294901760
        %1583 = vmatmul.mubr.f32.gmra.mrb[0].mxu0 %v1582
        %v1584 = vpop.f32.mrb[0].mxu0
        %v1585 = vadd.f32 %v1394, %v1584
        %v1586 = vpop.f32.mrb[0].mxu0
        %1587 = vmatprep.mubr.f32.mxu0 0.0
        %v1588 = vand.u32 %v585, 4294901760
        %1589 = vmatmul.mubr.f32.gmra.mrb[0].mxu0 %v1588
        %v1590 = vpop.f32.mrb[0].mxu0
        %v1591 = vadd.f32 %v1402, %v1590
        %v1592 = vpop.f32.mrb[0].mxu0
        %1593 = vmatprep.mubr.f32.mxu0 0.0
        %v1594 = vand.u32 %v588, 4294901760
        %1595 = vmatmul.mubr.f32.gmra.mrb[0].mxu0 %v1594
        %v1596 = vpop.f32.mrb[0].mxu0
        %v1597 = vadd.f32 %v1410, %v1596
        %v1598 = vpop.f32.mrb[0].mxu0
        %1599 = vmatprep.mubr.f32.mxu0 0.0
        %v1600 = vand.u32 %v591, 4294901760
        %1601 = vmatmul.mubr.f32.gmra.mrb[0].mxu0 %v1600
        %v1602 = vpop.f32.mrb[0].mxu0
        %v1603 = vadd.f32 %v1418, %v1602
        %v1604 = vpop.f32.mrb[0].mxu0
        %1605 = vdwg.mxu0
        %1606 = vmatprep.subr.mxu0 0.0
        %v1607 = vand.u32 %v536, 4294901760
        %1608 = vmatpush1.msra.mxu0 %v1607
        %1609 = vmatprep.subr.mxu0 0.0
        %v1610 = vand.u32 %v537, 4294901760
        %1611 = vmatpush1.msra.mxu0 %v1610
        %1612 = vmatprep.subr.mxu0 0.0
        %v1613 = vand.u32 %v538, 4294901760
        %1614 = vmatpush1.msra.mxu0 %v1613
        %1615 = vmatprep.subr.mxu0 0.0
        %v1616 = vand.u32 %v539, 4294901760
        %1617 = vmatpush1.msra.mxu0 %v1616
        %1618 = vmatprep.subr.mxu0 0.0
        %v1619 = vand.u32 %v540, 4294901760
        %1620 = vmatpush1.msra.mxu0 %v1619
        %1621 = vmatprep.subr.mxu0 0.0
        %v1622 = vand.u32 %v541, 4294901760
        %1623 = vmatpush1.msra.mxu0 %v1622
        %1624 = vmatprep.subr.mxu0 0.0
        %v1625 = vand.u32 %v542, 4294901760
        %1626 = vmatpush1.msra.mxu0 %v1625
        %1627 = vmatprep.subr.mxu0 0.0
        %v1628 = vand.u32 %v543, 4294901760
        %1629 = vmatpush1.msra.mxu0 %v1628
        %1630 = vmatprep.subr.mxu0 0.0
        %1631 = vmatpush1.msra.mxu0 0.0
        %1632 = vmatprep.subr.mxu0 0.0
        %1633 = vmatpush1.msra.mxu0 0.0
        %1634 = vmatprep.subr.mxu0 0.0
        %1635 = vmatpush1.msra.mxu0 0.0
        %1636 = vmatprep.subr.mxu0 0.0
        %1637 = vmatpush1.msra.mxu0 0.0
        %1638 = vmatprep.subr.mxu0 0.0
        %1639 = vmatpush1.msra.mxu0 0.0
        %1640 = vmatprep.subr.mxu0 0.0
        %1641 = vmatpush1.msra.mxu0 0.0
        %1642 = vmatprep.subr.mxu0 0.0
        %1643 = vmatpush1.msra.mxu0 0.0
        %1644 = vmatprep.subr.mxu0 0.0
        %1645 = vmatpush1.msra.mxu0 0.0
        %1646 = vmatprep.subr.mxu0 0.0
        %1647 = vmatpush1.msra.mxu0 0.0
        %1648 = vmatprep.subr.mxu0 0.0
        %1649 = vmatpush1.msra.mxu0 0.0
        %1650 = vmatprep.subr.mxu0 0.0
        %1651 = vmatpush1.msra.mxu0 0.0
        %1652 = vmatprep.subr.mxu0 0.0
        %1653 = vmatpush1.msra.mxu0 0.0
        %1654 = vmatprep.subr.mxu0 0.0
        %1655 = vmatpush1.msra.mxu0 0.0
        %1656 = vmatprep.subr.mxu0 0.0
        %1657 = vmatpush1.msra.mxu0 0.0
        %1658 = vmatprep.subr.mxu0 0.0
        %1659 = vmatpush1.msra.mxu0 0.0
        %1660 = vmatprep.subr.mxu0 0.0
        %1661 = vmatpush1.msra.mxu0 0.0
        %1662 = vmatprep.subr.mxu0 0.0
        %1663 = vmatpush1.msra.mxu0 0.0
        %1664 = vmatprep.subr.mxu0 0.0
        %1665 = vmatpush1.msra.mxu0 0.0
        %1666 = vmatprep.subr.mxu0 0.0
        %1667 = vmatpush1.msra.mxu0 0.0
        %1668 = vmatprep.subr.mxu0 0.0
        %1669 = vmatpush1.msra.mxu0 0.0
        %1670 = vmatprep.subr.mxu0 0.0
        %1671 = vmatpush1.msra.mxu0 0.0
        %1672 = vmatprep.subr.mxu0 0.0
        %1673 = vmatpush1.msra.mxu0 0.0
        %1674 = vmatprep.subr.mxu0 0.0
        %1675 = vmatpush1.msra.mxu0 0.0
        %1676 = vmatprep.subr.mxu0 0.0
        %1677 = vmatpush1.msra.mxu0 0.0
        %1678 = vmatprep.mubr.f32.mxu0 0.0
        %v1679 = vand.u32 %v546, 4294901760
        %1680 = vmatmul.mubr.f32.gmra.mrb[0].mxu0 %v1679
        %v1681 = vpop.f32.mrb[0].mxu0
        %v1682 = vadd.f32 %v1513, %v1681
        %v1683 = vpop.f32.mrb[0].mxu0
        %1684 = vmatprep.mubr.f32.mxu0 0.0
        %v1685 = vand.u32 %v549, 4294901760
        %1686 = vmatmul.mubr.f32.gmra.mrb[0].mxu0 %v1685
        %v1687 = vpop.f32.mrb[0].mxu0
        %v1688 = vadd.f32 %v1519, %v1687
        %v1689 = vpop.f32.mrb[0].mxu0
        %1690 = vmatprep.mubr.f32.mxu0 0.0
        %v1691 = vand.u32 %v552, 4294901760
        %1692 = vmatmul.mubr.f32.gmra.mrb[0].mxu0 %v1691
        %v1693 = vpop.f32.mrb[0].mxu0
        %v1694 = vadd.f32 %v1525, %v1693
        %v1695 = vpop.f32.mrb[0].mxu0
        %1696 = vmatprep.mubr.f32.mxu0 0.0
        %v1697 = vand.u32 %v555, 4294901760
        %1698 = vmatmul.mubr.f32.gmra.mrb[0].mxu0 %v1697
        %v1699 = vpop.f32.mrb[0].mxu0
        %v1700 = vadd.f32 %v1531, %v1699
        %v1701 = vpop.f32.mrb[0].mxu0
        %1702 = vmatprep.mubr.f32.mxu0 0.0
        %v1703 = vand.u32 %v558, 4294901760
        %1704 = vmatmul.mubr.f32.gmra.mrb[0].mxu0 %v1703
        %v1705 = vpop.f32.mrb[0].mxu0
        %v1706 = vadd.f32 %v1537, %v1705
        %v1707 = vpop.f32.mrb[0].mxu0
        %1708 = vmatprep.mubr.f32.mxu0 0.0
        %v1709 = vand.u32 %v561, 4294901760
        %1710 = vmatmul.mubr.f32.gmra.mrb[0].mxu0 %v1709
        %v1711 = vpop.f32.mrb[0].mxu0
        %v1712 = vadd.f32 %v1543, %v1711
        %v1713 = vpop.f32.mrb[0].mxu0
        %1714 = vmatprep.mubr.f32.mxu0 0.0
        %v1715 = vand.u32 %v564, 4294901760
        %1716 = vmatmul.mubr.f32.gmra.mrb[0].mxu0 %v1715
        %v1717 = vpop.f32.mrb[0].mxu0
        %v1718 = vadd.f32 %v1549, %v1717
        %v1719 = vpop.f32.mrb[0].mxu0
        %1720 = vmatprep.mubr.f32.mxu0 0.0
        %v1721 = vand.u32 %v567, 4294901760
        %1722 = vmatmul.mubr.f32.gmra.mrb[0].mxu0 %v1721
        %v1723 = vpop.f32.mrb[0].mxu0
        %v1724 = vadd.f32 %v1555, %v1723
        %v1725 = vpop.f32.mrb[0].mxu0
        %1726 = vmatprep.mubr.f32.mxu0 0.0
        %v1727 = vand.u32 %v570, 4294901760
        %1728 = vmatmul.mubr.f32.gmra.mrb[0].mxu0 %v1727
        %v1729 = vpop.f32.mrb[0].mxu0
        %v1730 = vadd.f32 %v1561, %v1729
        %v1731 = vpop.f32.mrb[0].mxu0
        %1732 = vmatprep.mubr.f32.mxu0 0.0
        %v1733 = vand.u32 %v573, 4294901760
        %1734 = vmatmul.mubr.f32.gmra.mrb[0].mxu0 %v1733
        %v1735 = vpop.f32.mrb[0].mxu0
        %v1736 = vadd.f32 %v1567, %v1735
        %v1737 = vpop.f32.mrb[0].mxu0
        %1738 = vmatprep.mubr.f32.mxu0 0.0
        %v1739 = vand.u32 %v576, 4294901760
        %1740 = vmatmul.mubr.f32.gmra.mrb[0].mxu0 %v1739
        %v1741 = vpop.f32.mrb[0].mxu0
        %v1742 = vadd.f32 %v1573, %v1741
        %v1743 = vpop.f32.mrb[0].mxu0
        %1744 = vmatprep.mubr.f32.mxu0 0.0
        %v1745 = vand.u32 %v579, 4294901760
        %1746 = vmatmul.mubr.f32.gmra.mrb[0].mxu0 %v1745
        %v1747 = vpop.f32.mrb[0].mxu0
        %v1748 = vadd.f32 %v1579, %v1747
        %v1749 = vpop.f32.mrb[0].mxu0
        %1750 = vmatprep.mubr.f32.mxu0 0.0
        %v1751 = vand.u32 %v582, 4294901760
        %1752 = vmatmul.mubr.f32.gmra.mrb[0].mxu0 %v1751
        %v1753 = vpop.f32.mrb[0].mxu0
        %v1754 = vadd.f32 %v1585, %v1753
        %v1755 = vpop.f32.mrb[0].mxu0
        %1756 = vmatprep.mubr.f32.mxu0 0.0
        %v1757 = vand.u32 %v585, 4294901760
        %1758 = vmatmul.mubr.f32.gmra.mrb[0].mxu0 %v1757
        %v1759 = vpop.f32.mrb[0].mxu0
        %v1760 = vadd.f32 %v1591, %v1759
        %v1761 = vpop.f32.mrb[0].mxu0
        %1762 = vmatprep.mubr.f32.mxu0 0.0
        %v1763 = vand.u32 %v588, 4294901760
        %1764 = vmatmul.mubr.f32.gmra.mrb[0].mxu0 %v1763
        %v1765 = vpop.f32.mrb[0].mxu0
        %v1766 = vadd.f32 %v1597, %v1765
        %v1767 = vpop.f32.mrb[0].mxu0
        %1768 = vmatprep.mubr.f32.mxu0 0.0
        %v1769 = vand.u32 %v591, 4294901760
        %1770 = vmatmul.mubr.f32.gmra.mrb[0].mxu0 %v1769
        %v1771 = vpop.f32.mrb[0].mxu0
        %v1772 = vadd.f32 %v1603, %v1771
        %v1773 = vpop.f32.mrb[0].mxu0
        %1774 = vdwg.mxu0
        %vm1775 = vcmp.eq.s32.totalorder %v486, 63
        %v1776 = vsel %vm1775, 1e+10, %v1682
        %v1777 = vsel %vm1775, 1e+10, %v1688
        %v1778 = vsel %vm1775, 1e+10, %v1694
        %v1779 = vsel %vm1775, 1e+10, %v1700
        %v1780 = vsel %vm1775, 1e+10, %v1706
        %v1781 = vsel %vm1775, 1e+10, %v1712
        %v1782 = vsel %vm1775, 1e+10, %v1718
        %v1783 = vsel %vm1775, 1e+10, %v1724
        %v1784 = vsel %vm1775, 1e+10, %v1730
        %v1785 = vsel %vm1775, 1e+10, %v1736
        %v1786 = vsel %vm1775, 1e+10, %v1742
        %v1787 = vsel %vm1775, 1e+10, %v1748
        %v1788 = vsel %vm1775, 1e+10, %v1754
        %v1789 = vsel %vm1775, 1e+10, %v1760
        %v1790 = vsel %vm1775, 1e+10, %v1766
        %v1791 = vsel %vm1775, 1e+10, %v1772
        %v1792 = vmul.f32 %v460, %v1776
        %v1793 = vmul.f32 %v461, %v1777
        %v1794 = vmul.f32 %v462, %v1778
        %v1795 = vmul.f32 %v463, %v1779
        %v1796 = vmul.f32 %v464, %v1780
        %v1797 = vmul.f32 %v465, %v1781
        %v1798 = vmul.f32 %v466, %v1782
        %v1799 = vmul.f32 %v467, %v1783
        %v1800 = vmul.f32 %v468, %v1784
        %v1801 = vmul.f32 %v469, %v1785
        %v1802 = vmul.f32 %v470, %v1786
        %v1803 = vmul.f32 %v471, %v1787
        %v1804 = vmul.f32 %v472, %v1788
        %v1805 = vmul.f32 %v473, %v1789
        %v1806 = vmul.f32 %v474, %v1790
        %v1807 = vmul.f32 %v475, %v1791
        %v1808 = vsub.f32 0.0, %v1792
        %v1809 = vsub.f32 0.0, %v1793
        %v1810 = vsub.f32 0.0, %v1794
        %v1811 = vsub.f32 0.0, %v1795
        %v1812 = vsub.f32 0.0, %v1796
        %v1813 = vsub.f32 0.0, %v1797
        %v1814 = vsub.f32 0.0, %v1798
        %v1815 = vsub.f32 0.0, %v1799
        %v1816 = vsub.f32 0.0, %v1800
        %v1817 = vsub.f32 0.0, %v1801
        %v1818 = vsub.f32 0.0, %v1802
        %v1819 = vsub.f32 0.0, %v1803
        %v1820 = vsub.f32 0.0, %v1804
        %v1821 = vsub.f32 0.0, %v1805
        %v1822 = vsub.f32 0.0, %v1806
        %v1823 = vsub.f32 0.0, %v1807
        %v1824 = vmul.f32 %v1808, 1.442695
        %v1825 = vpow.pop %v1824
        %v1826 = vmul.f32 %v1809, 1.442695
        %v1827 = vpow.pop %v1826
        %v1828 = vmul.f32 %v1810, 1.442695
        %v1829 = vpow.pop %v1828
        %v1830 = vmul.f32 %v1811, 1.442695
        %v1831 = vpow.pop %v1830
        %v1832 = vmul.f32 %v1812, 1.442695
        %v1833 = vpow.pop %v1832
        %v1834 = vmul.f32 %v1813, 1.442695
        %v1835 = vpow.pop %v1834
        %v1836 = vmul.f32 %v1814, 1.442695
        %v1837 = vpow.pop %v1836
        %v1838 = vmul.f32 %v1815, 1.442695
        %v1839 = vpow.pop %v1838
        %v1840 = vmul.f32 %v1816, 1.442695
        %v1841 = vpow.pop %v1840
        %v1842 = vmul.f32 %v1817, 1.442695
        %v1843 = vpow.pop %v1842
        %v1844 = vmul.f32 %v1818, 1.442695
        %v1845 = vpow.pop %v1844
        %v1846 = vmul.f32 %v1819, 1.442695
        %v1847 = vpow.pop %v1846
        %v1848 = vmul.f32 %v1820, 1.442695
        %v1849 = vpow.pop %v1848
        %v1850 = vmul.f32 %v1821, 1.442695
        %v1851 = vpow.pop %v1850
        %v1852 = vmul.f32 %v1822, 1.442695
        %v1853 = vpow.pop %v1852
        %v1854 = vmul.f32 %v1823, 1.442695
        %v1855 = vpow.pop %v1854
        %v1856 = vsub.f32 1.0, %v1825
        %v1857 = vsub.f32 1.0, %v1827
        %v1858 = vsub.f32 1.0, %v1829
        %v1859 = vsub.f32 1.0, %v1831
        %v1860 = vsub.f32 1.0, %v1833
        %v1861 = vsub.f32 1.0, %v1835
        %v1862 = vsub.f32 1.0, %v1837
        %v1863 = vsub.f32 1.0, %v1839
        %v1864 = vsub.f32 1.0, %v1841
        %v1865 = vsub.f32 1.0, %v1843
        %v1866 = vsub.f32 1.0, %v1845
        %v1867 = vsub.f32 1.0, %v1847
        %v1868 = vsub.f32 1.0, %v1849
        %v1869 = vsub.f32 1.0, %v1851
        %v1870 = vsub.f32 1.0, %v1853
        %v1871 = vsub.f32 1.0, %v1855
        %vm1872 = vcmp.lt.s32.totalorder %v477, %v486
        %vm1873 = vcmp.lt.s32.totalorder %v478, %v486
        %vm1874 = vcmp.lt.s32.totalorder %v479, %v486
        %vm1875 = vcmp.lt.s32.totalorder %v480, %v486
        %vm1876 = vcmp.lt.s32.totalorder %v481, %v486
        %vm1877 = vcmp.lt.s32.totalorder %v482, %v486
        %vm1878 = vcmp.lt.s32.totalorder %v483, %v486
        %vm1879 = vcmp.lt.s32.totalorder %v484, %v486
        %v1880 = vsel %vm1872, 1, 0
        %v1881 = vsel %vm1873, 1, 0
        %v1882 = vsel %vm1874, 1, 0
        %v1883 = vsel %vm1875, 1, 0
        %v1884 = vsel %vm1876, 1, 0
        %v1885 = vsel %vm1877, 1, 0
        %v1886 = vsel %vm1878, 1, 0
        %v1887 = vsel %vm1879, 1, 0
        %v1888 = vcvt.s32.f32 %v1880
        %v1889 = vcvt.s32.f32 %v1881
        %v1890 = vcvt.s32.f32 %v1882
        %v1891 = vcvt.s32.f32 %v1883
        %v1892 = vcvt.s32.f32 %v1884
        %v1893 = vcvt.s32.f32 %v1885
        %v1894 = vcvt.s32.f32 %v1886
        %v1895 = vcvt.s32.f32 %v1887
        %v1897 = vsel %vm544, %v1792, 0
        %v1900 = vsel %vm544, %v1793, 0
        %v1903 = vsel %vm544, %v1794, 0
        %v1906 = vsel %vm544, %v1795, 0
        %v1909 = vsel %vm544, %v1796, 0
        %v1912 = vsel %vm544, %v1797, 0
        %v1915 = vsel %vm544, %v1798, 0
        %v1918 = vsel %vm544, %v1799, 0
        %v1921 = vsel %vm544, %v1800, 0
        %v1924 = vsel %vm544, %v1801, 0
        %v1927 = vsel %vm544, %v1802, 0
        %v1930 = vsel %vm544, %v1803, 0
        %v1933 = vsel %vm544, %v1804, 0
        %v1936 = vsel %vm544, %v1805, 0
        %v1939 = vsel %vm544, %v1806, 0
        %v1942 = vsel %vm544, %v1807, 0
        %1944 = vmatprep.subr.mxu0 0.0
        %v1945 = vand.u32 %v1888, 4294901760
        %1946 = vmatpush1.msra.mxu0 %v1945
        %1947 = vmatprep.subr.mxu0 0.0
        %v1948 = vand.u32 %v1889, 4294901760
        %1949 = vmatpush1.msra.mxu0 %v1948
        %1950 = vmatprep.subr.mxu0 0.0
        %v1951 = vand.u32 %v1890, 4294901760
        %1952 = vmatpush1.msra.mxu0 %v1951
        %1953 = vmatprep.subr.mxu0 0.0
        %v1954 = vand.u32 %v1891, 4294901760
        %1955 = vmatpush1.msra.mxu0 %v1954
        %1956 = vmatprep.subr.mxu0 0.0
        %v1957 = vand.u32 %v1892, 4294901760
        %1958 = vmatpush1.msra.mxu0 %v1957
        %1959 = vmatprep.subr.mxu0 0.0
        %v1960 = vand.u32 %v1893, 4294901760
        %1961 = vmatpush1.msra.mxu0 %v1960
        %1962 = vmatprep.subr.mxu0 0.0
        %v1963 = vand.u32 %v1894, 4294901760
        %1964 = vmatpush1.msra.mxu0 %v1963
        %1965 = vmatprep.subr.mxu0 0.0
        %v1966 = vand.u32 %v1895, 4294901760
        %1967 = vmatpush1.msra.mxu0 %v1966
        %1968 = vmatprep.subr.mxu0 0.0
        %1969 = vmatpush1.msra.mxu0 0.0
        %1970 = vmatprep.subr.mxu0 0.0
        %1971 = vmatpush1.msra.mxu0 0.0
        %1972 = vmatprep.subr.mxu0 0.0
        %1973 = vmatpush1.msra.mxu0 0.0
        %1974 = vmatprep.subr.mxu0 0.0
        %1975 = vmatpush1.msra.mxu0 0.0
        %1976 = vmatprep.subr.mxu0 0.0
        %1977 = vmatpush1.msra.mxu0 0.0
        %1978 = vmatprep.subr.mxu0 0.0
        %1979 = vmatpush1.msra.mxu0 0.0
        %1980 = vmatprep.subr.mxu0 0.0
        %1981 = vmatpush1.msra.mxu0 0.0
        %1982 = vmatprep.subr.mxu0 0.0
        %1983 = vmatpush1.msra.mxu0 0.0
        %1984 = vmatprep.subr.mxu0 0.0
        %1985 = vmatpush1.msra.mxu0 0.0
        %1986 = vmatprep.subr.mxu0 0.0
        %1987 = vmatpush1.msra.mxu0 0.0
        %1988 = vmatprep.subr.mxu0 0.0
        %1989 = vmatpush1.msra.mxu0 0.0
        %1990 = vmatprep.subr.mxu0 0.0
        %1991 = vmatpush1.msra.mxu0 0.0
        %1992 = vmatprep.subr.mxu0 0.0
        %1993 = vmatpush1.msra.mxu0 0.0
        %1994 = vmatprep.subr.mxu0 0.0
        %1995 = vmatpush1.msra.mxu0 0.0
        %1996 = vmatprep.subr.mxu0 0.0
        %1997 = vmatpush1.msra.mxu0 0.0
        %1998 = vmatprep.subr.mxu0 0.0
        %1999 = vmatpush1.msra.mxu0 0.0
        %2000 = vmatprep.subr.mxu0 0.0
        %2001 = vmatpush1.msra.mxu0 0.0
        %2002 = vmatprep.subr.mxu0 0.0
        %2003 = vmatpush1.msra.mxu0 0.0
        %2004 = vmatprep.subr.mxu0 0.0
        %2005 = vmatpush1.msra.mxu0 0.0
        %2006 = vmatprep.subr.mxu0 0.0
        %2007 = vmatpush1.msra.mxu0 0.0
        %2008 = vmatprep.subr.mxu0 0.0
        %2009 = vmatpush1.msra.mxu0 0.0
        %2010 = vmatprep.subr.mxu0 0.0
        %2011 = vmatpush1.msra.mxu0 0.0
        %2012 = vmatprep.subr.mxu0 0.0
        %2013 = vmatpush1.msra.mxu0 0.0
        %2014 = vmatprep.subr.mxu0 0.0
        %2015 = vmatpush1.msra.mxu0 0.0
        %2016 = vmatprep.mubr.f32.mxu0 0.0
        %v2017 = vand.u32 %v1897, 4294901760
        %v2018 = vsub.f32 %v1897, %v2017
        %v2019 = vand.u32 %v2018, 4294901760
        %v2020 = vsub.f32 %v2018, %v2019
        %v2021 = vand.u32 %v2020, 4294901760
        %2022 = vmatmul.mubr.f32.gmra.mrb[0].mxu0 %v2021
        %v2023 = vpop.f32.mrb[0].mxu0
        %v2024 = vadd.f32 0.0, %v2023
        %v2025 = vpop.f32.mrb[0].mxu0
        %2026 = vmatprep.mubr.f32.mxu0 0.0
        %v2027 = vand.u32 %v1900, 4294901760
        %v2028 = vsub.f32 %v1900, %v2027
        %v2029 = vand.u32 %v2028, 4294901760
        %v2030 = vsub.f32 %v2028, %v2029
        %v2031 = vand.u32 %v2030, 4294901760
        %2032 = vmatmul.mubr.f32.gmra.mrb[0].mxu0 %v2031
        %v2033 = vpop.f32.mrb[0].mxu0
        %v2034 = vadd.f32 0.0, %v2033
        %v2035 = vpop.f32.mrb[0].mxu0
        %2036 = vmatprep.mubr.f32.mxu0 0.0
        %v2037 = vand.u32 %v1903, 4294901760
        %v2038 = vsub.f32 %v1903, %v2037
        %v2039 = vand.u32 %v2038, 4294901760
        %v2040 = vsub.f32 %v2038, %v2039
        %v2041 = vand.u32 %v2040, 4294901760
        %2042 = vmatmul.mubr.f32.gmra.mrb[0].mxu0 %v2041
        %v2043 = vpop.f32.mrb[0].mxu0
        %v2044 = vadd.f32 0.0, %v2043
        %v2045 = vpop.f32.mrb[0].mxu0
        %2046 = vmatprep.mubr.f32.mxu0 0.0
        %v2047 = vand.u32 %v1906, 4294901760
        %v2048 = vsub.f32 %v1906, %v2047
        %v2049 = vand.u32 %v2048, 4294901760
        %v2050 = vsub.f32 %v2048, %v2049
        %v2051 = vand.u32 %v2050, 4294901760
        %2052 = vmatmul.mubr.f32.gmra.mrb[0].mxu0 %v2051
        %v2053 = vpop.f32.mrb[0].mxu0
        %v2054 = vadd.f32 0.0, %v2053
        %v2055 = vpop.f32.mrb[0].mxu0
        %2056 = vmatprep.mubr.f32.mxu0 0.0
        %v2057 = vand.u32 %v1909, 4294901760
        %v2058 = vsub.f32 %v1909, %v2057
        %v2059 = vand.u32 %v2058, 4294901760
        %v2060 = vsub.f32 %v2058, %v2059
        %v2061 = vand.u32 %v2060, 4294901760
        %2062 = vmatmul.mubr.f32.gmra.mrb[0].mxu0 %v2061
        %v2063 = vpop.f32.mrb[0].mxu0
        %v2064 = vadd.f32 0.0, %v2063
        %v2065 = vpop.f32.mrb[0].mxu0
        %2066 = vmatprep.mubr.f32.mxu0 0.0
        %v2067 = vand.u32 %v1912, 4294901760
        %v2068 = vsub.f32 %v1912, %v2067
        %v2069 = vand.u32 %v2068, 4294901760
        %v2070 = vsub.f32 %v2068, %v2069
        %v2071 = vand.u32 %v2070, 4294901760
        %2072 = vmatmul.mubr.f32.gmra.mrb[0].mxu0 %v2071
        %v2073 = vpop.f32.mrb[0].mxu0
        %v2074 = vadd.f32 0.0, %v2073
        %v2075 = vpop.f32.mrb[0].mxu0
        %2076 = vmatprep.mubr.f32.mxu0 0.0
        %v2077 = vand.u32 %v1915, 4294901760
        %v2078 = vsub.f32 %v1915, %v2077
        %v2079 = vand.u32 %v2078, 4294901760
        %v2080 = vsub.f32 %v2078, %v2079
        %v2081 = vand.u32 %v2080, 4294901760
        %2082 = vmatmul.mubr.f32.gmra.mrb[0].mxu0 %v2081
        %v2083 = vpop.f32.mrb[0].mxu0
        %v2084 = vadd.f32 0.0, %v2083
        %v2085 = vpop.f32.mrb[0].mxu0
        %2086 = vmatprep.mubr.f32.mxu0 0.0
        %v2087 = vand.u32 %v1918, 4294901760
        %v2088 = vsub.f32 %v1918, %v2087
        %v2089 = vand.u32 %v2088, 4294901760
        %v2090 = vsub.f32 %v2088, %v2089
        %v2091 = vand.u32 %v2090, 4294901760
        %2092 = vmatmul.mubr.f32.gmra.mrb[0].mxu0 %v2091
        %v2093 = vpop.f32.mrb[0].mxu0
        %v2094 = vadd.f32 0.0, %v2093
        %v2095 = vpop.f32.mrb[0].mxu0
        %2096 = vmatprep.mubr.f32.mxu0 0.0
        %v2097 = vand.u32 %v1921, 4294901760
        %v2098 = vsub.f32 %v1921, %v2097
        %v2099 = vand.u32 %v2098, 4294901760
        %v2100 = vsub.f32 %v2098, %v2099
        %v2101 = vand.u32 %v2100, 4294901760
        %2102 = vmatmul.mubr.f32.gmra.mrb[0].mxu0 %v2101
        %v2103 = vpop.f32.mrb[0].mxu0
        %v2104 = vadd.f32 0.0, %v2103
        %v2105 = vpop.f32.mrb[0].mxu0
        %2106 = vmatprep.mubr.f32.mxu0 0.0
        %v2107 = vand.u32 %v1924, 4294901760
        %v2108 = vsub.f32 %v1924, %v2107
        %v2109 = vand.u32 %v2108, 4294901760
        %v2110 = vsub.f32 %v2108, %v2109
        %v2111 = vand.u32 %v2110, 4294901760
        %2112 = vmatmul.mubr.f32.gmra.mrb[0].mxu0 %v2111
        %v2113 = vpop.f32.mrb[0].mxu0
        %v2114 = vadd.f32 0.0, %v2113
        %v2115 = vpop.f32.mrb[0].mxu0
        %2116 = vmatprep.mubr.f32.mxu0 0.0
        %v2117 = vand.u32 %v1927, 4294901760
        %v2118 = vsub.f32 %v1927, %v2117
        %v2119 = vand.u32 %v2118, 4294901760
        %v2120 = vsub.f32 %v2118, %v2119
        %v2121 = vand.u32 %v2120, 4294901760
        %2122 = vmatmul.mubr.f32.gmra.mrb[0].mxu0 %v2121
        %v2123 = vpop.f32.mrb[0].mxu0
        %v2124 = vadd.f32 0.0, %v2123
        %v2125 = vpop.f32.mrb[0].mxu0
        %2126 = vmatprep.mubr.f32.mxu0 0.0
        %v2127 = vand.u32 %v1930, 4294901760
        %v2128 = vsub.f32 %v1930, %v2127
        %v2129 = vand.u32 %v2128, 4294901760
        %v2130 = vsub.f32 %v2128, %v2129
        %v2131 = vand.u32 %v2130, 4294901760
        %2132 = vmatmul.mubr.f32.gmra.mrb[0].mxu0 %v2131
        %v2133 = vpop.f32.mrb[0].mxu0
        %v2134 = vadd.f32 0.0, %v2133
        %v2135 = vpop.f32.mrb[0].mxu0
        %2136 = vmatprep.mubr.f32.mxu0 0.0
        %v2137 = vand.u32 %v1933, 4294901760
        %v2138 = vsub.f32 %v1933, %v2137
        %v2139 = vand.u32 %v2138, 4294901760
        %v2140 = vsub.f32 %v2138, %v2139
        %v2141 = vand.u32 %v2140, 4294901760
        %2142 = vmatmul.mubr.f32.gmra.mrb[0].mxu0 %v2141
        %v2143 = vpop.f32.mrb[0].mxu0
        %v2144 = vadd.f32 0.0, %v2143
        %v2145 = vpop.f32.mrb[0].mxu0
        %2146 = vmatprep.mubr.f32.mxu0 0.0
        %v2147 = vand.u32 %v1936, 4294901760
        %v2148 = vsub.f32 %v1936, %v2147
        %v2149 = vand.u32 %v2148, 4294901760
        %v2150 = vsub.f32 %v2148, %v2149
        %v2151 = vand.u32 %v2150, 4294901760
        %2152 = vmatmul.mubr.f32.gmra.mrb[0].mxu0 %v2151
        %v2153 = vpop.f32.mrb[0].mxu0
        %v2154 = vadd.f32 0.0, %v2153
        %v2155 = vpop.f32.mrb[0].mxu0
        %2156 = vmatprep.mubr.f32.mxu0 0.0
        %v2157 = vand.u32 %v1939, 4294901760
        %v2158 = vsub.f32 %v1939, %v2157
        %v2159 = vand.u32 %v2158, 4294901760
        %v2160 = vsub.f32 %v2158, %v2159
        %v2161 = vand.u32 %v2160, 4294901760
        %2162 = vmatmul.mubr.f32.gmra.mrb[0].mxu0 %v2161
        %v2163 = vpop.f32.mrb[0].mxu0
        %v2164 = vadd.f32 0.0, %v2163
        %v2165 = vpop.f32.mrb[0].mxu0
        %2166 = vmatprep.mubr.f32.mxu0 0.0
        %v2167 = vand.u32 %v1942, 4294901760
        %v2168 = vsub.f32 %v1942, %v2167
        %v2169 = vand.u32 %v2168, 4294901760
        %v2170 = vsub.f32 %v2168, %v2169
        %v2171 = vand.u32 %v2170, 4294901760
        %2172 = vmatmul.mubr.f32.gmra.mrb[0].mxu0 %v2171
        %v2173 = vpop.f32.mrb[0].mxu0
        %v2174 = vadd.f32 0.0, %v2173
        %v2175 = vpop.f32.mrb[0].mxu0
        %2176 = vdwg.mxu0
        %2177 = vmatprep.subr.mxu0 0.0
        %v2178 = vand.u32 %v1888, 4294901760
        %v2179 = vsub.f32 %v1888, %v2178
        %v2180 = vand.u32 %v2179, 4294901760
        %v2181 = vsub.f32 %v2179, %v2180
        %v2182 = vand.u32 %v2181, 4294901760
        %2183 = vmatpush1.msra.mxu0 %v2182
        %2184 = vmatprep.subr.mxu0 0.0
        %v2185 = vand.u32 %v1889, 4294901760
        %v2186 = vsub.f32 %v1889, %v2185
        %v2187 = vand.u32 %v2186, 4294901760
        %v2188 = vsub.f32 %v2186, %v2187
        %v2189 = vand.u32 %v2188, 4294901760
        %2190 = vmatpush1.msra.mxu0 %v2189
        %2191 = vmatprep.subr.mxu0 0.0
        %v2192 = vand.u32 %v1890, 4294901760
        %v2193 = vsub.f32 %v1890, %v2192
        %v2194 = vand.u32 %v2193, 4294901760
        %v2195 = vsub.f32 %v2193, %v2194
        %v2196 = vand.u32 %v2195, 4294901760
        %2197 = vmatpush1.msra.mxu0 %v2196
        %2198 = vmatprep.subr.mxu0 0.0
        %v2199 = vand.u32 %v1891, 4294901760
        %v2200 = vsub.f32 %v1891, %v2199
        %v2201 = vand.u32 %v2200, 4294901760
        %v2202 = vsub.f32 %v2200, %v2201
        %v2203 = vand.u32 %v2202, 4294901760
        %2204 = vmatpush1.msra.mxu0 %v2203
        %2205 = vmatprep.subr.mxu0 0.0
        %v2206 = vand.u32 %v1892, 4294901760
        %v2207 = vsub.f32 %v1892, %v2206
        %v2208 = vand.u32 %v2207, 4294901760
        %v2209 = vsub.f32 %v2207, %v2208
        %v2210 = vand.u32 %v2209, 4294901760
        %2211 = vmatpush1.msra.mxu0 %v2210
        %2212 = vmatprep.subr.mxu0 0.0
        %v2213 = vand.u32 %v1893, 4294901760
        %v2214 = vsub.f32 %v1893, %v2213
        %v2215 = vand.u32 %v2214, 4294901760
        %v2216 = vsub.f32 %v2214, %v2215
        %v2217 = vand.u32 %v2216, 4294901760
        %2218 = vmatpush1.msra.mxu0 %v2217
        %2219 = vmatprep.subr.mxu0 0.0
        %v2220 = vand.u32 %v1894, 4294901760
        %v2221 = vsub.f32 %v1894, %v2220
        %v2222 = vand.u32 %v2221, 4294901760
        %v2223 = vsub.f32 %v2221, %v2222
        %v2224 = vand.u32 %v2223, 4294901760
        %2225 = vmatpush1.msra.mxu0 %v2224
        %2226 = vmatprep.subr.mxu0 0.0
        %v2227 = vand.u32 %v1895, 4294901760
        %v2228 = vsub.f32 %v1895, %v2227
        %v2229 = vand.u32 %v2228, 4294901760
        %v2230 = vsub.f32 %v2228, %v2229
        %v2231 = vand.u32 %v2230, 4294901760
        %2232 = vmatpush1.msra.mxu0 %v2231
        %2233 = vmatprep.subr.mxu0 0.0
        %2234 = vmatpush1.msra.mxu0 0.0
        %2235 = vmatprep.subr.mxu0 0.0
        %2236 = vmatpush1.msra.mxu0 0.0
        %2237 = vmatprep.subr.mxu0 0.0
        %2238 = vmatpush1.msra.mxu0 0.0
        %2239 = vmatprep.subr.mxu0 0.0
        %2240 = vmatpush1.msra.mxu0 0.0
        %2241 = vmatprep.subr.mxu0 0.0
        %2242 = vmatpush1.msra.mxu0 0.0
        %2243 = vmatprep.subr.mxu0 0.0
        %2244 = vmatpush1.msra.mxu0 0.0
        %2245 = vmatprep.subr.mxu0 0.0
        %2246 = vmatpush1.msra.mxu0 0.0
        %2247 = vmatprep.subr.mxu0 0.0
        %2248 = vmatpush1.msra.mxu0 0.0
        %2249 = vmatprep.subr.mxu0 0.0
        %2250 = vmatpush1.msra.mxu0 0.0
        %2251 = vmatprep.subr.mxu0 0.0
        %2252 = vmatpush1.msra.mxu0 0.0
        %2253 = vmatprep.subr.mxu0 0.0
        %2254 = vmatpush1.msra.mxu0 0.0
        %2255 = vmatprep.subr.mxu0 0.0
        %2256 = vmatpush1.msra.mxu0 0.0
        %2257 = vmatprep.subr.mxu0 0.0
        %2258 = vmatpush1.msra.mxu0 0.0
        %2259 = vmatprep.subr.mxu0 0.0
        %2260 = vmatpush1.msra.mxu0 0.0
        %2261 = vmatprep.subr.mxu0 0.0
        %2262 = vmatpush1.msra.mxu0 0.0
        %2263 = vmatprep.subr.mxu0 0.0
        %2264 = vmatpush1.msra.mxu0 0.0
        %2265 = vmatprep.subr.mxu0 0.0
        %2266 = vmatpush1.msra.mxu0 0.0
        %2267 = vmatprep.subr.mxu0 0.0
        %2268 = vmatpush1.msra.mxu0 0.0
        %2269 = vmatprep.subr.mxu0 0.0
        %2270 = vmatpush1.msra.mxu0 0.0
        %2271 = vmatprep.subr.mxu0 0.0
        %2272 = vmatpush1.msra.mxu0 0.0
        %2273 = vmatprep.subr.mxu0 0.0
        %2274 = vmatpush1.msra.mxu0 0.0
        %2275 = vmatprep.subr.mxu0 0.0
        %2276 = vmatpush1.msra.mxu0 0.0
        %2277 = vmatprep.subr.mxu0 0.0
        %2278 = vmatpush1.msra.mxu0 0.0
        %2279 = vmatprep.subr.mxu0 0.0
        %2280 = vmatpush1.msra.mxu0 0.0
        %2281 = vmatprep.mubr.f32.mxu0 0.0
        %v2282 = vand.u32 %v1897, 4294901760
        %2283 = vmatmul.mubr.f32.gmra.mrb[0].mxu0 %v2282
        %v2284 = vpop.f32.mrb[0].mxu0
        %v2285 = vadd.f32 %v2024, %v2284
        %v2286 = vpop.f32.mrb[0].mxu0
        %2287 = vmatprep.mubr.f32.mxu0 0.0
        %v2288 = vand.u32 %v1900, 4294901760
        %2289 = vmatmul.mubr.f32.gmra.mrb[0].mxu0 %v2288
        %v2290 = vpop.f32.mrb[0].mxu0
        %v2291 = vadd.f32 %v2034, %v2290
        %v2292 = vpop.f32.mrb[0].mxu0
        %2293 = vmatprep.mubr.f32.mxu0 0.0
        %v2294 = vand.u32 %v1903, 4294901760
        %2295 = vmatmul.mubr.f32.gmra.mrb[0].mxu0 %v2294
        %v2296 = vpop.f32.mrb[0].mxu0
        %v2297 = vadd.f32 %v2044, %v2296
        %v2298 = vpop.f32.mrb[0].mxu0
        %2299 = vmatprep.mubr.f32.mxu0 0.0
        %v2300 = vand.u32 %v1906, 4294901760
        %2301 = vmatmul.mubr.f32.gmra.mrb[0].mxu0 %v2300
        %v2302 = vpop.f32.mrb[0].mxu0
        %v2303 = vadd.f32 %v2054, %v2302
        %v2304 = vpop.f32.mrb[0].mxu0
        %2305 = vmatprep.mubr.f32.mxu0 0.0
        %v2306 = vand.u32 %v1909, 4294901760
        %2307 = vmatmul.mubr.f32.gmra.mrb[0].mxu0 %v2306
        %v2308 = vpop.f32.mrb[0].mxu0
        %v2309 = vadd.f32 %v2064, %v2308
        %v2310 = vpop.f32.mrb[0].mxu0
        %2311 = vmatprep.mubr.f32.mxu0 0.0
        %v2312 = vand.u32 %v1912, 4294901760
        %2313 = vmatmul.mubr.f32.gmra.mrb[0].mxu0 %v2312
        %v2314 = vpop.f32.mrb[0].mxu0
        %v2315 = vadd.f32 %v2074, %v2314
        %v2316 = vpop.f32.mrb[0].mxu0
        %2317 = vmatprep.mubr.f32.mxu0 0.0
        %v2318 = vand.u32 %v1915, 4294901760
        %2319 = vmatmul.mubr.f32.gmra.mrb[0].mxu0 %v2318
        %v2320 = vpop.f32.mrb[0].mxu0
        %v2321 = vadd.f32 %v2084, %v2320
        %v2322 = vpop.f32.mrb[0].mxu0
        %2323 = vmatprep.mubr.f32.mxu0 0.0
        %v2324 = vand.u32 %v1918, 4294901760
        %2325 = vmatmul.mubr.f32.gmra.mrb[0].mxu0 %v2324
        %v2326 = vpop.f32.mrb[0].mxu0
        %v2327 = vadd.f32 %v2094, %v2326
        %v2328 = vpop.f32.mrb[0].mxu0
        %2329 = vmatprep.mubr.f32.mxu0 0.0
        %v2330 = vand.u32 %v1921, 4294901760
        %2331 = vmatmul.mubr.f32.gmra.mrb[0].mxu0 %v2330
        %v2332 = vpop.f32.mrb[0].mxu0
        %v2333 = vadd.f32 %v2104, %v2332
        %v2334 = vpop.f32.mrb[0].mxu0
        %2335 = vmatprep.mubr.f32.mxu0 0.0
        %v2336 = vand.u32 %v1924, 4294901760
        %2337 = vmatmul.mubr.f32.gmra.mrb[0].mxu0 %v2336
        %v2338 = vpop.f32.mrb[0].mxu0
        %v2339 = vadd.f32 %v2114, %v2338
        %v2340 = vpop.f32.mrb[0].mxu0
        %2341 = vmatprep.mubr.f32.mxu0 0.0
        %v2342 = vand.u32 %v1927, 4294901760
        %2343 = vmatmul.mubr.f32.gmra.mrb[0].mxu0 %v2342
        %v2344 = vpop.f32.mrb[0].mxu0
        %v2345 = vadd.f32 %v2124, %v2344
        %v2346 = vpop.f32.mrb[0].mxu0
        %2347 = vmatprep.mubr.f32.mxu0 0.0
        %v2348 = vand.u32 %v1930, 4294901760
        %2349 = vmatmul.mubr.f32.gmra.mrb[0].mxu0 %v2348
        %v2350 = vpop.f32.mrb[0].mxu0
        %v2351 = vadd.f32 %v2134, %v2350
        %v2352 = vpop.f32.mrb[0].mxu0
        %2353 = vmatprep.mubr.f32.mxu0 0.0
        %v2354 = vand.u32 %v1933, 4294901760
        %2355 = vmatmul.mubr.f32.gmra.mrb[0].mxu0 %v2354
        %v2356 = vpop.f32.mrb[0].mxu0
        %v2357 = vadd.f32 %v2144, %v2356
        %v2358 = vpop.f32.mrb[0].mxu0
        %2359 = vmatprep.mubr.f32.mxu0 0.0
        %v2360 = vand.u32 %v1936, 4294901760
        %2361 = vmatmul.mubr.f32.gmra.mrb[0].mxu0 %v2360
        %v2362 = vpop.f32.mrb[0].mxu0
        %v2363 = vadd.f32 %v2154, %v2362
        %v2364 = vpop.f32.mrb[0].mxu0
        %2365 = vmatprep.mubr.f32.mxu0 0.0
        %v2366 = vand.u32 %v1939, 4294901760
        %2367 = vmatmul.mubr.f32.gmra.mrb[0].mxu0 %v2366
        %v2368 = vpop.f32.mrb[0].mxu0
        %v2369 = vadd.f32 %v2164, %v2368
        %v2370 = vpop.f32.mrb[0].mxu0
        %2371 = vmatprep.mubr.f32.mxu0 0.0
        %v2372 = vand.u32 %v1942, 4294901760
        %2373 = vmatmul.mubr.f32.gmra.mrb[0].mxu0 %v2372
        %v2374 = vpop.f32.mrb[0].mxu0
        %v2375 = vadd.f32 %v2174, %v2374
        %v2376 = vpop.f32.mrb[0].mxu0
        %2377 = vdwg.mxu0
        %2378 = vmatprep.subr.mxu0 0.0
        %v2379 = vand.u32 %v1888, 4294901760
        %v2380 = vsub.f32 %v1888, %v2379
        %2381 = vmatpush1.msra.mxu0 %v2380
        %2382 = vmatprep.subr.mxu0 0.0
        %v2383 = vand.u32 %v1889, 4294901760
        %v2384 = vsub.f32 %v1889, %v2383
        %2385 = vmatpush1.msra.mxu0 %v2384
        %2386 = vmatprep.subr.mxu0 0.0
        %v2387 = vand.u32 %v1890, 4294901760
        %v2388 = vsub.f32 %v1890, %v2387
        %2389 = vmatpush1.msra.mxu0 %v2388
        %2390 = vmatprep.subr.mxu0 0.0
        %v2391 = vand.u32 %v1891, 4294901760
        %v2392 = vsub.f32 %v1891, %v2391
        %2393 = vmatpush1.msra.mxu0 %v2392
        %2394 = vmatprep.subr.mxu0 0.0
        %v2395 = vand.u32 %v1892, 4294901760
        %v2396 = vsub.f32 %v1892, %v2395
        %2397 = vmatpush1.msra.mxu0 %v2396
        %2398 = vmatprep.subr.mxu0 0.0
        %v2399 = vand.u32 %v1893, 4294901760
        %v2400 = vsub.f32 %v1893, %v2399
        %2401 = vmatpush1.msra.mxu0 %v2400
        %2402 = vmatprep.subr.mxu0 0.0
        %v2403 = vand.u32 %v1894, 4294901760
        %v2404 = vsub.f32 %v1894, %v2403
        %2405 = vmatpush1.msra.mxu0 %v2404
        %2406 = vmatprep.subr.mxu0 0.0
        %v2407 = vand.u32 %v1895, 4294901760
        %v2408 = vsub.f32 %v1895, %v2407
        %2409 = vmatpush1.msra.mxu0 %v2408
        %2410 = vmatprep.subr.mxu0 0.0
        %2411 = vmatpush1.msra.mxu0 0.0
        %2412 = vmatprep.subr.mxu0 0.0
        %2413 = vmatpush1.msra.mxu0 0.0
        %2414 = vmatprep.subr.mxu0 0.0
        %2415 = vmatpush1.msra.mxu0 0.0
        %2416 = vmatprep.subr.mxu0 0.0
        %2417 = vmatpush1.msra.mxu0 0.0
        %2418 = vmatprep.subr.mxu0 0.0
        %2419 = vmatpush1.msra.mxu0 0.0
        %2420 = vmatprep.subr.mxu0 0.0
        %2421 = vmatpush1.msra.mxu0 0.0
        %2422 = vmatprep.subr.mxu0 0.0
        %2423 = vmatpush1.msra.mxu0 0.0
        %2424 = vmatprep.subr.mxu0 0.0
        %2425 = vmatpush1.msra.mxu0 0.0
        %2426 = vmatprep.subr.mxu0 0.0
        %2427 = vmatpush1.msra.mxu0 0.0
        %2428 = vmatprep.subr.mxu0 0.0
        %2429 = vmatpush1.msra.mxu0 0.0
        %2430 = vmatprep.subr.mxu0 0.0
        %2431 = vmatpush1.msra.mxu0 0.0
        %2432 = vmatprep.subr.mxu0 0.0
        %2433 = vmatpush1.msra.mxu0 0.0
        %2434 = vmatprep.subr.mxu0 0.0
        %2435 = vmatpush1.msra.mxu0 0.0
        %2436 = vmatprep.subr.mxu0 0.0
        %2437 = vmatpush1.msra.mxu0 0.0
        %2438 = vmatprep.subr.mxu0 0.0
        %2439 = vmatpush1.msra.mxu0 0.0
        %2440 = vmatprep.subr.mxu0 0.0
        %2441 = vmatpush1.msra.mxu0 0.0
        %2442 = vmatprep.subr.mxu0 0.0
        %2443 = vmatpush1.msra.mxu0 0.0
        %2444 = vmatprep.subr.mxu0 0.0
        %2445 = vmatpush1.msra.mxu0 0.0
        %2446 = vmatprep.subr.mxu0 0.0
        %2447 = vmatpush1.msra.mxu0 0.0
        %2448 = vmatprep.subr.mxu0 0.0
        %2449 = vmatpush1.msra.mxu0 0.0
        %2450 = vmatprep.subr.mxu0 0.0
        %2451 = vmatpush1.msra.mxu0 0.0
        %2452 = vmatprep.subr.mxu0 0.0
        %2453 = vmatpush1.msra.mxu0 0.0
        %2454 = vmatprep.subr.mxu0 0.0
        %2455 = vmatpush1.msra.mxu0 0.0
        %2456 = vmatprep.subr.mxu0 0.0
        %2457 = vmatpush1.msra.mxu0 0.0
        %2458 = vmatprep.mubr.f32.mxu0 0.0
        %v2459 = vand.u32 %v1897, 4294901760
        %v2460 = vsub.f32 %v1897, %v2459
        %2461 = vmatmul.mubr.f32.gmra.mrb[0].mxu0 %v2460
        %v2462 = vpop.f32.mrb[0].mxu0
        %v2463 = vadd.f32 %v2285, %v2462
        %v2464 = vpop.f32.mrb[0].mxu0
        %2465 = vmatprep.mubr.f32.mxu0 0.0
        %v2466 = vand.u32 %v1900, 4294901760
        %v2467 = vsub.f32 %v1900, %v2466
        %2468 = vmatmul.mubr.f32.gmra.mrb[0].mxu0 %v2467
        %v2469 = vpop.f32.mrb[0].mxu0
        %v2470 = vadd.f32 %v2291, %v2469
        %v2471 = vpop.f32.mrb[0].mxu0
        %2472 = vmatprep.mubr.f32.mxu0 0.0
        %v2473 = vand.u32 %v1903, 4294901760
        %v2474 = vsub.f32 %v1903, %v2473
        %2475 = vmatmul.mubr.f32.gmra.mrb[0].mxu0 %v2474
        %v2476 = vpop.f32.mrb[0].mxu0
        %v2477 = vadd.f32 %v2297, %v2476
        %v2478 = vpop.f32.mrb[0].mxu0
        %2479 = vmatprep.mubr.f32.mxu0 0.0
        %v2480 = vand.u32 %v1906, 4294901760
        %v2481 = vsub.f32 %v1906, %v2480
        %2482 = vmatmul.mubr.f32.gmra.mrb[0].mxu0 %v2481
        %v2483 = vpop.f32.mrb[0].mxu0
        %v2484 = vadd.f32 %v2303, %v2483
        %v2485 = vpop.f32.mrb[0].mxu0
        %2486 = vmatprep.mubr.f32.mxu0 0.0
        %v2487 = vand.u32 %v1909, 4294901760
        %v2488 = vsub.f32 %v1909, %v2487
        %2489 = vmatmul.mubr.f32.gmra.mrb[0].mxu0 %v2488
        %v2490 = vpop.f32.mrb[0].mxu0
        %v2491 = vadd.f32 %v2309, %v2490
        %v2492 = vpop.f32.mrb[0].mxu0
        %2493 = vmatprep.mubr.f32.mxu0 0.0
        %v2494 = vand.u32 %v1912, 4294901760
        %v2495 = vsub.f32 %v1912, %v2494
        %2496 = vmatmul.mubr.f32.gmra.mrb[0].mxu0 %v2495
        %v2497 = vpop.f32.mrb[0].mxu0
        %v2498 = vadd.f32 %v2315, %v2497
        %v2499 = vpop.f32.mrb[0].mxu0
        %2500 = vmatprep.mubr.f32.mxu0 0.0
        %v2501 = vand.u32 %v1915, 4294901760
        %v2502 = vsub.f32 %v1915, %v2501
        %2503 = vmatmul.mubr.f32.gmra.mrb[0].mxu0 %v2502
        %v2504 = vpop.f32.mrb[0].mxu0
        %v2505 = vadd.f32 %v2321, %v2504
        %v2506 = vpop.f32.mrb[0].mxu0
        %2507 = vmatprep.mubr.f32.mxu0 0.0
        %v2508 = vand.u32 %v1918, 4294901760
        %v2509 = vsub.f32 %v1918, %v2508
        %2510 = vmatmul.mubr.f32.gmra.mrb[0].mxu0 %v2509
        %v2511 = vpop.f32.mrb[0].mxu0
        %v2512 = vadd.f32 %v2327, %v2511
        %v2513 = vpop.f32.mrb[0].mxu0
        %2514 = vmatprep.mubr.f32.mxu0 0.0
        %v2515 = vand.u32 %v1921, 4294901760
        %v2516 = vsub.f32 %v1921, %v2515
        %2517 = vmatmul.mubr.f32.gmra.mrb[0].mxu0 %v2516
        %v2518 = vpop.f32.mrb[0].mxu0
        %v2519 = vadd.f32 %v2333, %v2518
        %v2520 = vpop.f32.mrb[0].mxu0
        %2521 = vmatprep.mubr.f32.mxu0 0.0
        %v2522 = vand.u32 %v1924, 4294901760
        %v2523 = vsub.f32 %v1924, %v2522
        %2524 = vmatmul.mubr.f32.gmra.mrb[0].mxu0 %v2523
        %v2525 = vpop.f32.mrb[0].mxu0
        %v2526 = vadd.f32 %v2339, %v2525
        %v2527 = vpop.f32.mrb[0].mxu0
        %2528 = vmatprep.mubr.f32.mxu0 0.0
        %v2529 = vand.u32 %v1927, 4294901760
        %v2530 = vsub.f32 %v1927, %v2529
        %2531 = vmatmul.mubr.f32.gmra.mrb[0].mxu0 %v2530
        %v2532 = vpop.f32.mrb[0].mxu0
        %v2533 = vadd.f32 %v2345, %v2532
        %v2534 = vpop.f32.mrb[0].mxu0
        %2535 = vmatprep.mubr.f32.mxu0 0.0
        %v2536 = vand.u32 %v1930, 4294901760
        %v2537 = vsub.f32 %v1930, %v2536
        %2538 = vmatmul.mubr.f32.gmra.mrb[0].mxu0 %v2537
        %v2539 = vpop.f32.mrb[0].mxu0
        %v2540 = vadd.f32 %v2351, %v2539
        %v2541 = vpop.f32.mrb[0].mxu0
        %2542 = vmatprep.mubr.f32.mxu0 0.0
        %v2543 = vand.u32 %v1933, 4294901760
        %v2544 = vsub.f32 %v1933, %v2543
        %2545 = vmatmul.mubr.f32.gmra.mrb[0].mxu0 %v2544
        %v2546 = vpop.f32.mrb[0].mxu0
        %v2547 = vadd.f32 %v2357, %v2546
        %v2548 = vpop.f32.mrb[0].mxu0
        %2549 = vmatprep.mubr.f32.mxu0 0.0
        %v2550 = vand.u32 %v1936, 4294901760
        %v2551 = vsub.f32 %v1936, %v2550
        %2552 = vmatmul.mubr.f32.gmra.mrb[0].mxu0 %v2551
        %v2553 = vpop.f32.mrb[0].mxu0
        %v2554 = vadd.f32 %v2363, %v2553
        %v2555 = vpop.f32.mrb[0].mxu0
        %2556 = vmatprep.mubr.f32.mxu0 0.0
        %v2557 = vand.u32 %v1939, 4294901760
        %v2558 = vsub.f32 %v1939, %v2557
        %2559 = vmatmul.mubr.f32.gmra.mrb[0].mxu0 %v2558
        %v2560 = vpop.f32.mrb[0].mxu0
        %v2561 = vadd.f32 %v2369, %v2560
        %v2562 = vpop.f32.mrb[0].mxu0
        %2563 = vmatprep.mubr.f32.mxu0 0.0
        %v2564 = vand.u32 %v1942, 4294901760
        %v2565 = vsub.f32 %v1942, %v2564
        %2566 = vmatmul.mubr.f32.gmra.mrb[0].mxu0 %v2565
        %v2567 = vpop.f32.mrb[0].mxu0
        %v2568 = vadd.f32 %v2375, %v2567
        %v2569 = vpop.f32.mrb[0].mxu0
        %2570 = vdwg.mxu0
        %2571 = vmatprep.subr.mxu0 0.0
        %v2572 = vand.u32 %v1888, 4294901760
        %2573 = vmatpush1.msra.mxu0 %v2572
        %2574 = vmatprep.subr.mxu0 0.0
        %v2575 = vand.u32 %v1889, 4294901760
        %2576 = vmatpush1.msra.mxu0 %v2575
        %2577 = vmatprep.subr.mxu0 0.0
        %v2578 = vand.u32 %v1890, 4294901760
        %2579 = vmatpush1.msra.mxu0 %v2578
        %2580 = vmatprep.subr.mxu0 0.0
        %v2581 = vand.u32 %v1891, 4294901760
        %2582 = vmatpush1.msra.mxu0 %v2581
        %2583 = vmatprep.subr.mxu0 0.0
        %v2584 = vand.u32 %v1892, 4294901760
        %2585 = vmatpush1.msra.mxu0 %v2584
        %2586 = vmatprep.subr.mxu0 0.0
        %v2587 = vand.u32 %v1893, 4294901760
        %2588 = vmatpush1.msra.mxu0 %v2587
        %2589 = vmatprep.subr.mxu0 0.0
        %v2590 = vand.u32 %v1894, 4294901760
        %2591 = vmatpush1.msra.mxu0 %v2590
        %2592 = vmatprep.subr.mxu0 0.0
        %v2593 = vand.u32 %v1895, 4294901760
        %2594 = vmatpush1.msra.mxu0 %v2593
        %2595 = vmatprep.subr.mxu0 0.0
        %2596 = vmatpush1.msra.mxu0 0.0
        %2597 = vmatprep.subr.mxu0 0.0
        %2598 = vmatpush1.msra.mxu0 0.0
        %2599 = vmatprep.subr.mxu0 0.0
        %2600 = vmatpush1.msra.mxu0 0.0
        %2601 = vmatprep.subr.mxu0 0.0
        %2602 = vmatpush1.msra.mxu0 0.0
        %2603 = vmatprep.subr.mxu0 0.0
        %2604 = vmatpush1.msra.mxu0 0.0
        %2605 = vmatprep.subr.mxu0 0.0
        %2606 = vmatpush1.msra.mxu0 0.0
        %2607 = vmatprep.subr.mxu0 0.0
        %2608 = vmatpush1.msra.mxu0 0.0
        %2609 = vmatprep.subr.mxu0 0.0
        %2610 = vmatpush1.msra.mxu0 0.0
        %2611 = vmatprep.subr.mxu0 0.0
        %2612 = vmatpush1.msra.mxu0 0.0
        %2613 = vmatprep.subr.mxu0 0.0
        %2614 = vmatpush1.msra.mxu0 0.0
        %2615 = vmatprep.subr.mxu0 0.0
        %2616 = vmatpush1.msra.mxu0 0.0
        %2617 = vmatprep.subr.mxu0 0.0
        %2618 = vmatpush1.msra.mxu0 0.0
        %2619 = vmatprep.subr.mxu0 0.0
        %2620 = vmatpush1.msra.mxu0 0.0
        %2621 = vmatprep.subr.mxu0 0.0
        %2622 = vmatpush1.msra.mxu0 0.0
        %2623 = vmatprep.subr.mxu0 0.0
        %2624 = vmatpush1.msra.mxu0 0.0
        %2625 = vmatprep.subr.mxu0 0.0
        %2626 = vmatpush1.msra.mxu0 0.0
        %2627 = vmatprep.subr.mxu0 0.0
        %2628 = vmatpush1.msra.mxu0 0.0
        %2629 = vmatprep.subr.mxu0 0.0
        %2630 = vmatpush1.msra.mxu0 0.0
        %2631 = vmatprep.subr.mxu0 0.0
        %2632 = vmatpush1.msra.mxu0 0.0
        %2633 = vmatprep.subr.mxu0 0.0
        %2634 = vmatpush1.msra.mxu0 0.0
        %2635 = vmatprep.subr.mxu0 0.0
        %2636 = vmatpush1.msra.mxu0 0.0
        %2637 = vmatprep.subr.mxu0 0.0
        %2638 = vmatpush1.msra.mxu0 0.0
        %2639 = vmatprep.subr.mxu0 0.0
        %2640 = vmatpush1.msra.mxu0 0.0
        %2641 = vmatprep.subr.mxu0 0.0
        %2642 = vmatpush1.msra.mxu0 0.0
        %2643 = vmatprep.mubr.f32.mxu0 0.0
        %v2644 = vand.u32 %v1897, 4294901760
        %v2645 = vsub.f32 %v1897, %v2644
        %v2646 = vand.u32 %v2645, 4294901760
        %2647 = vmatmul.mubr.f32.gmra.mrb[0].mxu0 %v2646
        %v2648 = vpop.f32.mrb[0].mxu0
        %v2649 = vadd.f32 %v2463, %v2648
        %v2650 = vpop.f32.mrb[0].mxu0
        %2651 = vmatprep.mubr.f32.mxu0 0.0
        %v2652 = vand.u32 %v1900, 4294901760
        %v2653 = vsub.f32 %v1900, %v2652
        %v2654 = vand.u32 %v2653, 4294901760
        %2655 = vmatmul.mubr.f32.gmra.mrb[0].mxu0 %v2654
        %v2656 = vpop.f32.mrb[0].mxu0
        %v2657 = vadd.f32 %v2470, %v2656
        %v2658 = vpop.f32.mrb[0].mxu0
        %2659 = vmatprep.mubr.f32.mxu0 0.0
        %v2660 = vand.u32 %v1903, 4294901760
        %v2661 = vsub.f32 %v1903, %v2660
        %v2662 = vand.u32 %v2661, 4294901760
        %2663 = vmatmul.mubr.f32.gmra.mrb[0].mxu0 %v2662
        %v2664 = vpop.f32.mrb[0].mxu0
        %v2665 = vadd.f32 %v2477, %v2664
        %v2666 = vpop.f32.mrb[0].mxu0
        %2667 = vmatprep.mubr.f32.mxu0 0.0
        %v2668 = vand.u32 %v1906, 4294901760
        %v2669 = vsub.f32 %v1906, %v2668
        %v2670 = vand.u32 %v2669, 4294901760
        %2671 = vmatmul.mubr.f32.gmra.mrb[0].mxu0 %v2670
        %v2672 = vpop.f32.mrb[0].mxu0
        %v2673 = vadd.f32 %v2484, %v2672
        %v2674 = vpop.f32.mrb[0].mxu0
        %2675 = vmatprep.mubr.f32.mxu0 0.0
        %v2676 = vand.u32 %v1909, 4294901760
        %v2677 = vsub.f32 %v1909, %v2676
        %v2678 = vand.u32 %v2677, 4294901760
        %2679 = vmatmul.mubr.f32.gmra.mrb[0].mxu0 %v2678
        %v2680 = vpop.f32.mrb[0].mxu0
        %v2681 = vadd.f32 %v2491, %v2680
        %v2682 = vpop.f32.mrb[0].mxu0
        %2683 = vmatprep.mubr.f32.mxu0 0.0
        %v2684 = vand.u32 %v1912, 4294901760
        %v2685 = vsub.f32 %v1912, %v2684
        %v2686 = vand.u32 %v2685, 4294901760
        %2687 = vmatmul.mubr.f32.gmra.mrb[0].mxu0 %v2686
        %v2688 = vpop.f32.mrb[0].mxu0
        %v2689 = vadd.f32 %v2498, %v2688
        %v2690 = vpop.f32.mrb[0].mxu0
        %2691 = vmatprep.mubr.f32.mxu0 0.0
        %v2692 = vand.u32 %v1915, 4294901760
        %v2693 = vsub.f32 %v1915, %v2692
        %v2694 = vand.u32 %v2693, 4294901760
        %2695 = vmatmul.mubr.f32.gmra.mrb[0].mxu0 %v2694
        %v2696 = vpop.f32.mrb[0].mxu0
        %v2697 = vadd.f32 %v2505, %v2696
        %v2698 = vpop.f32.mrb[0].mxu0
        %2699 = vmatprep.mubr.f32.mxu0 0.0
        %v2700 = vand.u32 %v1918, 4294901760
        %v2701 = vsub.f32 %v1918, %v2700
        %v2702 = vand.u32 %v2701, 4294901760
        %2703 = vmatmul.mubr.f32.gmra.mrb[0].mxu0 %v2702
        %v2704 = vpop.f32.mrb[0].mxu0
        %v2705 = vadd.f32 %v2512, %v2704
        %v2706 = vpop.f32.mrb[0].mxu0
        %2707 = vmatprep.mubr.f32.mxu0 0.0
        %v2708 = vand.u32 %v1921, 4294901760
        %v2709 = vsub.f32 %v1921, %v2708
        %v2710 = vand.u32 %v2709, 4294901760
        %2711 = vmatmul.mubr.f32.gmra.mrb[0].mxu0 %v2710
        %v2712 = vpop.f32.mrb[0].mxu0
        %v2713 = vadd.f32 %v2519, %v2712
        %v2714 = vpop.f32.mrb[0].mxu0
        %2715 = vmatprep.mubr.f32.mxu0 0.0
        %v2716 = vand.u32 %v1924, 4294901760
        %v2717 = vsub.f32 %v1924, %v2716
        %v2718 = vand.u32 %v2717, 4294901760
        %2719 = vmatmul.mubr.f32.gmra.mrb[0].mxu0 %v2718
        %v2720 = vpop.f32.mrb[0].mxu0
        %v2721 = vadd.f32 %v2526, %v2720
        %v2722 = vpop.f32.mrb[0].mxu0
        %2723 = vmatprep.mubr.f32.mxu0 0.0
        %v2724 = vand.u32 %v1927, 4294901760
        %v2725 = vsub.f32 %v1927, %v2724
        %v2726 = vand.u32 %v2725, 4294901760
        %2727 = vmatmul.mubr.f32.gmra.mrb[0].mxu0 %v2726
        %v2728 = vpop.f32.mrb[0].mxu0
        %v2729 = vadd.f32 %v2533, %v2728
        %v2730 = vpop.f32.mrb[0].mxu0
        %2731 = vmatprep.mubr.f32.mxu0 0.0
        %v2732 = vand.u32 %v1930, 4294901760
        %v2733 = vsub.f32 %v1930, %v2732
        %v2734 = vand.u32 %v2733, 4294901760
        %2735 = vmatmul.mubr.f32.gmra.mrb[0].mxu0 %v2734
        %v2736 = vpop.f32.mrb[0].mxu0
        %v2737 = vadd.f32 %v2540, %v2736
        %v2738 = vpop.f32.mrb[0].mxu0
        %2739 = vmatprep.mubr.f32.mxu0 0.0
        %v2740 = vand.u32 %v1933, 4294901760
        %v2741 = vsub.f32 %v1933, %v2740
        %v2742 = vand.u32 %v2741, 4294901760
        %2743 = vmatmul.mubr.f32.gmra.mrb[0].mxu0 %v2742
        %v2744 = vpop.f32.mrb[0].mxu0
        %v2745 = vadd.f32 %v2547, %v2744
        %v2746 = vpop.f32.mrb[0].mxu0
        %2747 = vmatprep.mubr.f32.mxu0 0.0
        %v2748 = vand.u32 %v1936, 4294901760
        %v2749 = vsub.f32 %v1936, %v2748
        %v2750 = vand.u32 %v2749, 4294901760
        %2751 = vmatmul.mubr.f32.gmra.mrb[0].mxu0 %v2750
        %v2752 = vpop.f32.mrb[0].mxu0
        %v2753 = vadd.f32 %v2554, %v2752
        %v2754 = vpop.f32.mrb[0].mxu0
        %2755 = vmatprep.mubr.f32.mxu0 0.0
        %v2756 = vand.u32 %v1939, 4294901760
        %v2757 = vsub.f32 %v1939, %v2756
        %v2758 = vand.u32 %v2757, 4294901760
        %2759 = vmatmul.mubr.f32.gmra.mrb[0].mxu0 %v2758
        %v2760 = vpop.f32.mrb[0].mxu0
        %v2761 = vadd.f32 %v2561, %v2760
        %v2762 = vpop.f32.mrb[0].mxu0
        %2763 = vmatprep.mubr.f32.mxu0 0.0
        %v2764 = vand.u32 %v1942, 4294901760
        %v2765 = vsub.f32 %v1942, %v2764
        %v2766 = vand.u32 %v2765, 4294901760
        %2767 = vmatmul.mubr.f32.gmra.mrb[0].mxu0 %v2766
        %v2768 = vpop.f32.mrb[0].mxu0
        %v2769 = vadd.f32 %v2568, %v2768
        %v2770 = vpop.f32.mrb[0].mxu0
        %2771 = vdwg.mxu0
        %2772 = vmatprep.subr.mxu0 0.0
        %v2773 = vand.u32 %v1888, 4294901760
        %v2774 = vsub.f32 %v1888, %v2773
        %v2775 = vand.u32 %v2774, 4294901760
        %2776 = vmatpush1.msra.mxu0 %v2775
        %2777 = vmatprep.subr.mxu0 0.0
        %v2778 = vand.u32 %v1889, 4294901760
        %v2779 = vsub.f32 %v1889, %v2778
        %v2780 = vand.u32 %v2779, 4294901760
        %2781 = vmatpush1.msra.mxu0 %v2780
        %2782 = vmatprep.subr.mxu0 0.0
        %v2783 = vand.u32 %v1890, 4294901760
        %v2784 = vsub.f32 %v1890, %v2783
        %v2785 = vand.u32 %v2784, 4294901760
        %2786 = vmatpush1.msra.mxu0 %v2785
        %2787 = vmatprep.subr.mxu0 0.0
        %v2788 = vand.u32 %v1891, 4294901760
        %v2789 = vsub.f32 %v1891, %v2788
        %v2790 = vand.u32 %v2789, 4294901760
        %2791 = vmatpush1.msra.mxu0 %v2790
        %2792 = vmatprep.subr.mxu0 0.0
        %v2793 = vand.u32 %v1892, 4294901760
        %v2794 = vsub.f32 %v1892, %v2793
        %v2795 = vand.u32 %v2794, 4294901760
        %2796 = vmatpush1.msra.mxu0 %v2795
        %2797 = vmatprep.subr.mxu0 0.0
        %v2798 = vand.u32 %v1893, 4294901760
        %v2799 = vsub.f32 %v1893, %v2798
        %v2800 = vand.u32 %v2799, 4294901760
        %2801 = vmatpush1.msra.mxu0 %v2800
        %2802 = vmatprep.subr.mxu0 0.0
        %v2803 = vand.u32 %v1894, 4294901760
        %v2804 = vsub.f32 %v1894, %v2803
        %v2805 = vand.u32 %v2804, 4294901760
        %2806 = vmatpush1.msra.mxu0 %v2805
        %2807 = vmatprep.subr.mxu0 0.0
        %v2808 = vand.u32 %v1895, 4294901760
        %v2809 = vsub.f32 %v1895, %v2808
        %v2810 = vand.u32 %v2809, 4294901760
        %2811 = vmatpush1.msra.mxu0 %v2810
        %2812 = vmatprep.subr.mxu0 0.0
        %2813 = vmatpush1.msra.mxu0 0.0
        %2814 = vmatprep.subr.mxu0 0.0
        %2815 = vmatpush1.msra.mxu0 0.0
        %2816 = vmatprep.subr.mxu0 0.0
        %2817 = vmatpush1.msra.mxu0 0.0
        %2818 = vmatprep.subr.mxu0 0.0
        %2819 = vmatpush1.msra.mxu0 0.0
        %2820 = vmatprep.subr.mxu0 0.0
        %2821 = vmatpush1.msra.mxu0 0.0
        %2822 = vmatprep.subr.mxu0 0.0
        %2823 = vmatpush1.msra.mxu0 0.0
        %2824 = vmatprep.subr.mxu0 0.0
        %2825 = vmatpush1.msra.mxu0 0.0
        %2826 = vmatprep.subr.mxu0 0.0
        %2827 = vmatpush1.msra.mxu0 0.0
        %2828 = vmatprep.subr.mxu0 0.0
        %2829 = vmatpush1.msra.mxu0 0.0
        %2830 = vmatprep.subr.mxu0 0.0
        %2831 = vmatpush1.msra.mxu0 0.0
        %2832 = vmatprep.subr.mxu0 0.0
        %2833 = vmatpush1.msra.mxu0 0.0
        %2834 = vmatprep.subr.mxu0 0.0
        %2835 = vmatpush1.msra.mxu0 0.0
        %2836 = vmatprep.subr.mxu0 0.0
        %2837 = vmatpush1.msra.mxu0 0.0
        %2838 = vmatprep.subr.mxu0 0.0
        %2839 = vmatpush1.msra.mxu0 0.0
        %2840 = vmatprep.subr.mxu0 0.0
        %2841 = vmatpush1.msra.mxu0 0.0
        %2842 = vmatprep.subr.mxu0 0.0
        %2843 = vmatpush1.msra.mxu0 0.0
        %2844 = vmatprep.subr.mxu0 0.0
        %2845 = vmatpush1.msra.mxu0 0.0
        %2846 = vmatprep.subr.mxu0 0.0
        %2847 = vmatpush1.msra.mxu0 0.0
        %2848 = vmatprep.subr.mxu0 0.0
        %2849 = vmatpush1.msra.mxu0 0.0
        %2850 = vmatprep.subr.mxu0 0.0
        %2851 = vmatpush1.msra.mxu0 0.0
        %2852 = vmatprep.subr.mxu0 0.0
        %2853 = vmatpush1.msra.mxu0 0.0
        %2854 = vmatprep.subr.mxu0 0.0
        %2855 = vmatpush1.msra.mxu0 0.0
        %2856 = vmatprep.subr.mxu0 0.0
        %2857 = vmatpush1.msra.mxu0 0.0
        %2858 = vmatprep.subr.mxu0 0.0
        %2859 = vmatpush1.msra.mxu0 0.0
        %2860 = vmatprep.mubr.f32.mxu0 0.0
        %v2861 = vand.u32 %v1897, 4294901760
        %2862 = vmatmul.mubr.f32.gmra.mrb[0].mxu0 %v2861
        %v2863 = vpop.f32.mrb[0].mxu0
        %v2864 = vadd.f32 %v2649, %v2863
        %v2865 = vpop.f32.mrb[0].mxu0
        %2866 = vmatprep.mubr.f32.mxu0 0.0
        %v2867 = vand.u32 %v1900, 4294901760
        %2868 = vmatmul.mubr.f32.gmra.mrb[0].mxu0 %v2867
        %v2869 = vpop.f32.mrb[0].mxu0
        %v2870 = vadd.f32 %v2657, %v2869
        %v2871 = vpop.f32.mrb[0].mxu0
        %2872 = vmatprep.mubr.f32.mxu0 0.0
        %v2873 = vand.u32 %v1903, 4294901760
        %2874 = vmatmul.mubr.f32.gmra.mrb[0].mxu0 %v2873
        %v2875 = vpop.f32.mrb[0].mxu0
        %v2876 = vadd.f32 %v2665, %v2875
        %v2877 = vpop.f32.mrb[0].mxu0
        %2878 = vmatprep.mubr.f32.mxu0 0.0
        %v2879 = vand.u32 %v1906, 4294901760
        %2880 = vmatmul.mubr.f32.gmra.mrb[0].mxu0 %v2879
        %v2881 = vpop.f32.mrb[0].mxu0
        %v2882 = vadd.f32 %v2673, %v2881
        %v2883 = vpop.f32.mrb[0].mxu0
        %2884 = vmatprep.mubr.f32.mxu0 0.0
        %v2885 = vand.u32 %v1909, 4294901760
        %2886 = vmatmul.mubr.f32.gmra.mrb[0].mxu0 %v2885
        %v2887 = vpop.f32.mrb[0].mxu0
        %v2888 = vadd.f32 %v2681, %v2887
        %v2889 = vpop.f32.mrb[0].mxu0
        %2890 = vmatprep.mubr.f32.mxu0 0.0
        %v2891 = vand.u32 %v1912, 4294901760
        %2892 = vmatmul.mubr.f32.gmra.mrb[0].mxu0 %v2891
        %v2893 = vpop.f32.mrb[0].mxu0
        %v2894 = vadd.f32 %v2689, %v2893
        %v2895 = vpop.f32.mrb[0].mxu0
        %2896 = vmatprep.mubr.f32.mxu0 0.0
        %v2897 = vand.u32 %v1915, 4294901760
        %2898 = vmatmul.mubr.f32.gmra.mrb[0].mxu0 %v2897
        %v2899 = vpop.f32.mrb[0].mxu0
        %v2900 = vadd.f32 %v2697, %v2899
        %v2901 = vpop.f32.mrb[0].mxu0
        %2902 = vmatprep.mubr.f32.mxu0 0.0
        %v2903 = vand.u32 %v1918, 4294901760
        %2904 = vmatmul.mubr.f32.gmra.mrb[0].mxu0 %v2903
        %v2905 = vpop.f32.mrb[0].mxu0
        %v2906 = vadd.f32 %v2705, %v2905
        %v2907 = vpop.f32.mrb[0].mxu0
        %2908 = vmatprep.mubr.f32.mxu0 0.0
        %v2909 = vand.u32 %v1921, 4294901760
        %2910 = vmatmul.mubr.f32.gmra.mrb[0].mxu0 %v2909
        %v2911 = vpop.f32.mrb[0].mxu0
        %v2912 = vadd.f32 %v2713, %v2911
        %v2913 = vpop.f32.mrb[0].mxu0
        %2914 = vmatprep.mubr.f32.mxu0 0.0
        %v2915 = vand.u32 %v1924, 4294901760
        %2916 = vmatmul.mubr.f32.gmra.mrb[0].mxu0 %v2915
        %v2917 = vpop.f32.mrb[0].mxu0
        %v2918 = vadd.f32 %v2721, %v2917
        %v2919 = vpop.f32.mrb[0].mxu0
        %2920 = vmatprep.mubr.f32.mxu0 0.0
        %v2921 = vand.u32 %v1927, 4294901760
        %2922 = vmatmul.mubr.f32.gmra.mrb[0].mxu0 %v2921
        %v2923 = vpop.f32.mrb[0].mxu0
        %v2924 = vadd.f32 %v2729, %v2923
        %v2925 = vpop.f32.mrb[0].mxu0
        %2926 = vmatprep.mubr.f32.mxu0 0.0
        %v2927 = vand.u32 %v1930, 4294901760
        %2928 = vmatmul.mubr.f32.gmra.mrb[0].mxu0 %v2927
        %v2929 = vpop.f32.mrb[0].mxu0
        %v2930 = vadd.f32 %v2737, %v2929
        %v2931 = vpop.f32.mrb[0].mxu0
        %2932 = vmatprep.mubr.f32.mxu0 0.0
        %v2933 = vand.u32 %v1933, 4294901760
        %2934 = vmatmul.mubr.f32.gmra.mrb[0].mxu0 %v2933
        %v2935 = vpop.f32.mrb[0].mxu0
        %v2936 = vadd.f32 %v2745, %v2935
        %v2937 = vpop.f32.mrb[0].mxu0
        %2938 = vmatprep.mubr.f32.mxu0 0.0
        %v2939 = vand.u32 %v1936, 4294901760
        %2940 = vmatmul.mubr.f32.gmra.mrb[0].mxu0 %v2939
        %v2941 = vpop.f32.mrb[0].mxu0
        %v2942 = vadd.f32 %v2753, %v2941
        %v2943 = vpop.f32.mrb[0].mxu0
        %2944 = vmatprep.mubr.f32.mxu0 0.0
        %v2945 = vand.u32 %v1939, 4294901760
        %2946 = vmatmul.mubr.f32.gmra.mrb[0].mxu0 %v2945
        %v2947 = vpop.f32.mrb[0].mxu0
        %v2948 = vadd.f32 %v2761, %v2947
        %v2949 = vpop.f32.mrb[0].mxu0
        %2950 = vmatprep.mubr.f32.mxu0 0.0
        %v2951 = vand.u32 %v1942, 4294901760
        %2952 = vmatmul.mubr.f32.gmra.mrb[0].mxu0 %v2951
        %v2953 = vpop.f32.mrb[0].mxu0
        %v2954 = vadd.f32 %v2769, %v2953
        %v2955 = vpop.f32.mrb[0].mxu0
        %2956 = vdwg.mxu0
        %2957 = vmatprep.subr.mxu0 0.0
        %v2958 = vand.u32 %v1888, 4294901760
        %2959 = vmatpush1.msra.mxu0 %v2958
        %2960 = vmatprep.subr.mxu0 0.0
        %v2961 = vand.u32 %v1889, 4294901760
        %2962 = vmatpush1.msra.mxu0 %v2961
        %2963 = vmatprep.subr.mxu0 0.0
        %v2964 = vand.u32 %v1890, 4294901760
        %2965 = vmatpush1.msra.mxu0 %v2964
        %2966 = vmatprep.subr.mxu0 0.0
        %v2967 = vand.u32 %v1891, 4294901760
        %2968 = vmatpush1.msra.mxu0 %v2967
        %2969 = vmatprep.subr.mxu0 0.0
        %v2970 = vand.u32 %v1892, 4294901760
        %2971 = vmatpush1.msra.mxu0 %v2970
        %2972 = vmatprep.subr.mxu0 0.0
        %v2973 = vand.u32 %v1893, 4294901760
        %2974 = vmatpush1.msra.mxu0 %v2973
        %2975 = vmatprep.subr.mxu0 0.0
        %v2976 = vand.u32 %v1894, 4294901760
        %2977 = vmatpush1.msra.mxu0 %v2976
        %2978 = vmatprep.subr.mxu0 0.0
        %v2979 = vand.u32 %v1895, 4294901760
        %2980 = vmatpush1.msra.mxu0 %v2979
        %2981 = vmatprep.subr.mxu0 0.0
        %2982 = vmatpush1.msra.mxu0 0.0
        %2983 = vmatprep.subr.mxu0 0.0
        %2984 = vmatpush1.msra.mxu0 0.0
        %2985 = vmatprep.subr.mxu0 0.0
        %2986 = vmatpush1.msra.mxu0 0.0
        %2987 = vmatprep.subr.mxu0 0.0
        %2988 = vmatpush1.msra.mxu0 0.0
        %2989 = vmatprep.subr.mxu0 0.0
        %2990 = vmatpush1.msra.mxu0 0.0
        %2991 = vmatprep.subr.mxu0 0.0
        %2992 = vmatpush1.msra.mxu0 0.0
        %2993 = vmatprep.subr.mxu0 0.0
        %2994 = vmatpush1.msra.mxu0 0.0
        %2995 = vmatprep.subr.mxu0 0.0
        %2996 = vmatpush1.msra.mxu0 0.0
        %2997 = vmatprep.subr.mxu0 0.0
        %2998 = vmatpush1.msra.mxu0 0.0
        %2999 = vmatprep.subr.mxu0 0.0
        %3000 = vmatpush1.msra.mxu0 0.0
        %3001 = vmatprep.subr.mxu0 0.0
        %3002 = vmatpush1.msra.mxu0 0.0
        %3003 = vmatprep.subr.mxu0 0.0
        %3004 = vmatpush1.msra.mxu0 0.0
        %3005 = vmatprep.subr.mxu0 0.0
        %3006 = vmatpush1.msra.mxu0 0.0
        %3007 = vmatprep.subr.mxu0 0.0
        %3008 = vmatpush1.msra.mxu0 0.0
        %3009 = vmatprep.subr.mxu0 0.0
        %3010 = vmatpush1.msra.mxu0 0.0
        %3011 = vmatprep.subr.mxu0 0.0
        %3012 = vmatpush1.msra.mxu0 0.0
        %3013 = vmatprep.subr.mxu0 0.0
        %3014 = vmatpush1.msra.mxu0 0.0
        %3015 = vmatprep.subr.mxu0 0.0
        %3016 = vmatpush1.msra.mxu0 0.0
        %3017 = vmatprep.subr.mxu0 0.0
        %3018 = vmatpush1.msra.mxu0 0.0
        %3019 = vmatprep.subr.mxu0 0.0
        %3020 = vmatpush1.msra.mxu0 0.0
        %3021 = vmatprep.subr.mxu0 0.0
        %3022 = vmatpush1.msra.mxu0 0.0
        %3023 = vmatprep.subr.mxu0 0.0
        %3024 = vmatpush1.msra.mxu0 0.0
        %3025 = vmatprep.subr.mxu0 0.0
        %3026 = vmatpush1.msra.mxu0 0.0
        %3027 = vmatprep.subr.mxu0 0.0
        %3028 = vmatpush1.msra.mxu0 0.0
        %3029 = vmatprep.mubr.f32.mxu0 0.0
        %v3030 = vand.u32 %v1897, 4294901760
        %3031 = vmatmul.mubr.f32.gmra.mrb[0].mxu0 %v3030
        %v3032 = vpop.f32.mrb[0].mxu0
        %v3033 = vadd.f32 %v2864, %v3032
        %v3034 = vpop.f32.mrb[0].mxu0
        %3035 = vmatprep.mubr.f32.mxu0 0.0
        %v3036 = vand.u32 %v1900, 4294901760
        %3037 = vmatmul.mubr.f32.gmra.mrb[0].mxu0 %v3036
        %v3038 = vpop.f32.mrb[0].mxu0
        %v3039 = vadd.f32 %v2870, %v3038
        %v3040 = vpop.f32.mrb[0].mxu0
        %3041 = vmatprep.mubr.f32.mxu0 0.0
        %v3042 = vand.u32 %v1903, 4294901760
        %3043 = vmatmul.mubr.f32.gmra.mrb[0].mxu0 %v3042
        %v3044 = vpop.f32.mrb[0].mxu0
        %v3045 = vadd.f32 %v2876, %v3044
        %v3046 = vpop.f32.mrb[0].mxu0
        %3047 = vmatprep.mubr.f32.mxu0 0.0
        %v3048 = vand.u32 %v1906, 4294901760
        %3049 = vmatmul.mubr.f32.gmra.mrb[0].mxu0 %v3048
        %v3050 = vpop.f32.mrb[0].mxu0
        %v3051 = vadd.f32 %v2882, %v3050
        %v3052 = vpop.f32.mrb[0].mxu0
        %3053 = vmatprep.mubr.f32.mxu0 0.0
        %v3054 = vand.u32 %v1909, 4294901760
        %3055 = vmatmul.mubr.f32.gmra.mrb[0].mxu0 %v3054
        %v3056 = vpop.f32.mrb[0].mxu0
        %v3057 = vadd.f32 %v2888, %v3056
        %v3058 = vpop.f32.mrb[0].mxu0
        %3059 = vmatprep.mubr.f32.mxu0 0.0
        %v3060 = vand.u32 %v1912, 4294901760
        %3061 = vmatmul.mubr.f32.gmra.mrb[0].mxu0 %v3060
        %v3062 = vpop.f32.mrb[0].mxu0
        %v3063 = vadd.f32 %v2894, %v3062
        %v3064 = vpop.f32.mrb[0].mxu0
        %3065 = vmatprep.mubr.f32.mxu0 0.0
        %v3066 = vand.u32 %v1915, 4294901760
        %3067 = vmatmul.mubr.f32.gmra.mrb[0].mxu0 %v3066
        %v3068 = vpop.f32.mrb[0].mxu0
        %v3069 = vadd.f32 %v2900, %v3068
        %v3070 = vpop.f32.mrb[0].mxu0
        %3071 = vmatprep.mubr.f32.mxu0 0.0
        %v3072 = vand.u32 %v1918, 4294901760
        %3073 = vmatmul.mubr.f32.gmra.mrb[0].mxu0 %v3072
        %v3074 = vpop.f32.mrb[0].mxu0
        %v3075 = vadd.f32 %v2906, %v3074
        %v3076 = vpop.f32.mrb[0].mxu0
        %3077 = vmatprep.mubr.f32.mxu0 0.0
        %v3078 = vand.u32 %v1921, 4294901760
        %3079 = vmatmul.mubr.f32.gmra.mrb[0].mxu0 %v3078
        %v3080 = vpop.f32.mrb[0].mxu0
        %v3081 = vadd.f32 %v2912, %v3080
        %v3082 = vpop.f32.mrb[0].mxu0
        %3083 = vmatprep.mubr.f32.mxu0 0.0
        %v3084 = vand.u32 %v1924, 4294901760
        %3085 = vmatmul.mubr.f32.gmra.mrb[0].mxu0 %v3084
        %v3086 = vpop.f32.mrb[0].mxu0
        %v3087 = vadd.f32 %v2918, %v3086
        %v3088 = vpop.f32.mrb[0].mxu0
        %3089 = vmatprep.mubr.f32.mxu0 0.0
        %v3090 = vand.u32 %v1927, 4294901760
        %3091 = vmatmul.mubr.f32.gmra.mrb[0].mxu0 %v3090
        %v3092 = vpop.f32.mrb[0].mxu0
        %v3093 = vadd.f32 %v2924, %v3092
        %v3094 = vpop.f32.mrb[0].mxu0
        %3095 = vmatprep.mubr.f32.mxu0 0.0
        %v3096 = vand.u32 %v1930, 4294901760
        %3097 = vmatmul.mubr.f32.gmra.mrb[0].mxu0 %v3096
        %v3098 = vpop.f32.mrb[0].mxu0
        %v3099 = vadd.f32 %v2930, %v3098
        %v3100 = vpop.f32.mrb[0].mxu0
        %3101 = vmatprep.mubr.f32.mxu0 0.0
        %v3102 = vand.u32 %v1933, 4294901760
        %3103 = vmatmul.mubr.f32.gmra.mrb[0].mxu0 %v3102
        %v3104 = vpop.f32.mrb[0].mxu0
        %v3105 = vadd.f32 %v2936, %v3104
        %v3106 = vpop.f32.mrb[0].mxu0
        %3107 = vmatprep.mubr.f32.mxu0 0.0
        %v3108 = vand.u32 %v1936, 4294901760
        %3109 = vmatmul.mubr.f32.gmra.mrb[0].mxu0 %v3108
        %v3110 = vpop.f32.mrb[0].mxu0
        %v3111 = vadd.f32 %v2942, %v3110
        %v3112 = vpop.f32.mrb[0].mxu0
        %3113 = vmatprep.mubr.f32.mxu0 0.0
        %v3114 = vand.u32 %v1939, 4294901760
        %3115 = vmatmul.mubr.f32.gmra.mrb[0].mxu0 %v3114
        %v3116 = vpop.f32.mrb[0].mxu0
        %v3117 = vadd.f32 %v2948, %v3116
        %v3118 = vpop.f32.mrb[0].mxu0
        %3119 = vmatprep.mubr.f32.mxu0 0.0
        %v3120 = vand.u32 %v1942, 4294901760
        %3121 = vmatmul.mubr.f32.gmra.mrb[0].mxu0 %v3120
        %v3122 = vpop.f32.mrb[0].mxu0
        %v3123 = vadd.f32 %v2954, %v3122
        %v3124 = vpop.f32.mrb[0].mxu0
        %3125 = vdwg.mxu0
        %v3126 = vsub.f32 0.0, %v3033
        %v3127 = vsub.f32 0.0, %v3039
        %v3128 = vsub.f32 0.0, %v3045
        %v3129 = vsub.f32 0.0, %v3051
        %v3130 = vsub.f32 0.0, %v3057
        %v3131 = vsub.f32 0.0, %v3063
        %v3132 = vsub.f32 0.0, %v3069
        %v3133 = vsub.f32 0.0, %v3075
        %v3134 = vsub.f32 0.0, %v3081
        %v3135 = vsub.f32 0.0, %v3087
        %v3136 = vsub.f32 0.0, %v3093
        %v3137 = vsub.f32 0.0, %v3099
        %v3138 = vsub.f32 0.0, %v3105
        %v3139 = vsub.f32 0.0, %v3111
        %v3140 = vsub.f32 0.0, %v3117
        %v3141 = vsub.f32 0.0, %v3123
        %v3142 = vmul.f32 %v3126, 1.442695
        %v3143 = vpow.pop %v3142
        %v3144 = vmul.f32 %v3127, 1.442695
        %v3145 = vpow.pop %v3144
        %v3146 = vmul.f32 %v3128, 1.442695
        %v3147 = vpow.pop %v3146
        %v3148 = vmul.f32 %v3129, 1.442695
        %v3149 = vpow.pop %v3148
        %v3150 = vmul.f32 %v3130, 1.442695
        %v3151 = vpow.pop %v3150
        %v3152 = vmul.f32 %v3131, 1.442695
        %v3153 = vpow.pop %v3152
        %v3154 = vmul.f32 %v3132, 1.442695
        %v3155 = vpow.pop %v3154
        %v3156 = vmul.f32 %v3133, 1.442695
        %v3157 = vpow.pop %v3156
        %v3158 = vmul.f32 %v3134, 1.442695
        %v3159 = vpow.pop %v3158
        %v3160 = vmul.f32 %v3135, 1.442695
        %v3161 = vpow.pop %v3160
        %v3162 = vmul.f32 %v3136, 1.442695
        %v3163 = vpow.pop %v3162
        %v3164 = vmul.f32 %v3137, 1.442695
        %v3165 = vpow.pop %v3164
        %v3166 = vmul.f32 %v3138, 1.442695
        %v3167 = vpow.pop %v3166
        %v3168 = vmul.f32 %v3139, 1.442695
        %v3169 = vpow.pop %v3168
        %v3170 = vmul.f32 %v3140, 1.442695
        %v3171 = vpow.pop %v3170
        %v3172 = vmul.f32 %v3141, 1.442695
        %v3173 = vpow.pop %v3172
        %v3174 = vmul.f32 %v3143, %v1856
        %v3175 = vmul.f32 %v3145, %v1857
        %v3176 = vmul.f32 %v3147, %v1858
        %v3177 = vmul.f32 %v3149, %v1859
        %v3178 = vmul.f32 %v3151, %v1860
        %v3179 = vmul.f32 %v3153, %v1861
        %v3180 = vmul.f32 %v3155, %v1862
        %v3181 = vmul.f32 %v3157, %v1863
        %v3182 = vmul.f32 %v3159, %v1864
        %v3183 = vmul.f32 %v3161, %v1865
        %v3184 = vmul.f32 %v3163, %v1866
        %v3185 = vmul.f32 %v3165, %v1867
        %v3186 = vmul.f32 %v3167, %v1868
        %v3187 = vmul.f32 %v3169, %v1869
        %v3188 = vmul.f32 %v3171, %v1870
        %v3189 = vmul.f32 %v3173, %v1871
        %v3190 = vld [vmem:[%s397] sm:$0xf]
        %v3191 = vld [vmem:[%s397 + $0x4] sm:$0xf]
        %v3192 = vld [vmem:[%s397 + $0x8] sm:$0xf]
        %v3193 = vld [vmem:[%s397 + $0xc] sm:$0xf]
        %v3194 = vld [vmem:[%s397 + $0x10] sm:$0xf]
        %v3195 = vld [vmem:[%s397 + $0x14] sm:$0xf]
        %v3196 = vld [vmem:[%s397 + $0x18] sm:$0xf]
        %v3197 = vld [vmem:[%s397 + $0x1c] sm:$0xf]
        %v3198 = vld [vmem:[%s397 + $0x20] sm:$0xf]
        %v3199 = vld [vmem:[%s397 + $0x24] sm:$0xf]
        %v3200 = vld [vmem:[%s397 + $0x28] sm:$0xf]
        %v3201 = vld [vmem:[%s397 + $0x2c] sm:$0xf]
        %v3202 = vld [vmem:[%s397 + $0x30] sm:$0xf]
        %v3203 = vld [vmem:[%s397 + $0x34] sm:$0xf]
        %v3204 = vld [vmem:[%s397 + $0x38] sm:$0xf]
        %v3205 = vld [vmem:[%s397 + $0x3c] sm:$0xf]
        %v3206 = vunpack.c.l.bf16 %v3190
        %v3207 = vunpack.c.l.bf16 %v3191
        %v3208 = vunpack.c.l.bf16 %v3192
        %v3209 = vunpack.c.l.bf16 %v3193
        %v3210 = vunpack.c.l.bf16 %v3194
        %v3211 = vunpack.c.l.bf16 %v3195
        %v3212 = vunpack.c.l.bf16 %v3196
        %v3213 = vunpack.c.l.bf16 %v3197
        %v3214 = vunpack.c.l.bf16 %v3198
        %v3215 = vunpack.c.l.bf16 %v3199
        %v3216 = vunpack.c.l.bf16 %v3200
        %v3217 = vunpack.c.l.bf16 %v3201
        %v3218 = vunpack.c.l.bf16 %v3202
        %v3219 = vunpack.c.l.bf16 %v3203
        %v3220 = vunpack.c.l.bf16 %v3204
        %v3221 = vunpack.c.l.bf16 %v3205
        %v3222 = vmul.f32 %v3174, %v3206
        %v3223 = vmul.f32 %v3175, %v3207
        %v3224 = vmul.f32 %v3176, %v3208
        %v3225 = vmul.f32 %v3177, %v3209
        %v3226 = vmul.f32 %v3178, %v3210
        %v3227 = vmul.f32 %v3179, %v3211
        %v3228 = vmul.f32 %v3180, %v3212
        %v3229 = vmul.f32 %v3181, %v3213
        %v3230 = vmul.f32 %v3182, %v3214
        %v3231 = vmul.f32 %v3183, %v3215
        %v3232 = vmul.f32 %v3184, %v3216
        %v3233 = vmul.f32 %v3185, %v3217
        %v3234 = vmul.f32 %v3186, %v3218
        %v3235 = vmul.f32 %v3187, %v3219
        %v3236 = vmul.f32 %v3188, %v3220
        %v3237 = vmul.f32 %v3189, %v3221
        %v3238 = vsel %vm544, %v3222, 0.0
        %3239 = vadd.xlane.f32.xlu0 %v3238
        %v3240 = vpop.xlane.xlu0 %3239
        %v3241 = vsel %vm544, %v3223, 0.0
        %3242 = vadd.xlane.f32.xlu0 %v3241
        %v3243 = vpop.xlane.xlu0 %3242
        %v3244 = vsel %vm544, %v3224, 0.0
        %3245 = vadd.xlane.f32.xlu0 %v3244
        %v3246 = vpop.xlane.xlu0 %3245
        %v3247 = vsel %vm544, %v3225, 0.0
        %3248 = vadd.xlane.f32.xlu0 %v3247
        %v3249 = vpop.xlane.xlu0 %3248
        %v3250 = vsel %vm544, %v3226, 0.0
        %3251 = vadd.xlane.f32.xlu0 %v3250
        %v3252 = vpop.xlane.xlu0 %3251
        %v3253 = vsel %vm544, %v3227, 0.0
        %3254 = vadd.xlane.f32.xlu0 %v3253
        %v3255 = vpop.xlane.xlu0 %3254
        %v3256 = vsel %vm544, %v3228, 0.0
        %3257 = vadd.xlane.f32.xlu0 %v3256
        %v3258 = vpop.xlane.xlu0 %3257
        %v3259 = vsel %vm544, %v3229, 0.0
        %3260 = vadd.xlane.f32.xlu0 %v3259
        %v3261 = vpop.xlane.xlu0 %3260
        %v3262 = vsel %vm544, %v3230, 0.0
        %3263 = vadd.xlane.f32.xlu0 %v3262
        %v3264 = vpop.xlane.xlu0 %3263
        %v3265 = vsel %vm544, %v3231, 0.0
        %3266 = vadd.xlane.f32.xlu0 %v3265
        %v3267 = vpop.xlane.xlu0 %3266
        %v3268 = vsel %vm544, %v3232, 0.0
        %3269 = vadd.xlane.f32.xlu0 %v3268
        %v3270 = vpop.xlane.xlu0 %3269
        %v3271 = vsel %vm544, %v3233, 0.0
        %3272 = vadd.xlane.f32.xlu0 %v3271
        %v3273 = vpop.xlane.xlu0 %3272
        %v3274 = vsel %vm544, %v3234, 0.0
        %3275 = vadd.xlane.f32.xlu0 %v3274
        %v3276 = vpop.xlane.xlu0 %3275
        %v3277 = vsel %vm544, %v3235, 0.0
        %3278 = vadd.xlane.f32.xlu0 %v3277
        %v3279 = vpop.xlane.xlu0 %3278
        %v3280 = vsel %vm544, %v3236, 0.0
        %3281 = vadd.xlane.f32.xlu0 %v3280
        %v3282 = vpop.xlane.xlu0 %3281
        %v3283 = vsel %vm544, %v3237, 0.0
        %3284 = vadd.xlane.f32.xlu0 %v3283
        %v3285 = vpop.xlane.xlu0 %3284
        %v3302 = vlaneseq
        %v3303 = vshrl.u32 %v3302, 7
        %v3304 = vsub.s32 %v486, %v3303
        %v3305 = vrot.slane %v3240, %v3304
        %v3306 = vadd.s32 %v486, 4294967288
        %v3307 = vlaneseq
        %v3308 = vshrl.u32 %v3307, 7
        %v3309 = vsub.s32 %v3306, %v3308
        %v3310 = vrot.slane %v3243, %v3309
        %vm3311 = vcmask 130112
        %v3312 = vsel %vm3311, %v3310, %v3305
        %v3313 = vadd.s32 %v486, 4294967280
        %v3314 = vlaneseq
        %v3315 = vshrl.u32 %v3314, 7
        %v3316 = vsub.s32 %v3313, %v3315
        %v3317 = vrot.slane %v3246, %v3316
        %vm3318 = vcmask 195712
        %v3319 = vsel %vm3318, %v3317, %v3312
        %v3320 = vadd.s32 %v486, 4294967272
        %v3321 = vlaneseq
        %v3322 = vshrl.u32 %v3321, 7
        %v3323 = vsub.s32 %v3320, %v3322
        %v3324 = vrot.slane %v3249, %v3323
        %vm3325 = vcmask 261312
        %v3326 = vsel %vm3325, %v3324, %v3319
        %v3327 = vadd.s32 %v486, 4294967264
        %v3328 = vlaneseq
        %v3329 = vshrl.u32 %v3328, 7
        %v3330 = vsub.s32 %v3327, %v3329
        %v3331 = vrot.slane %v3252, %v3330
        %vm3332 = vcmask 326912
        %v3333 = vsel %vm3332, %v3331, %v3326
        %v3334 = vadd.s32 %v486, 4294967256
        %v3335 = vlaneseq
        %v3336 = vshrl.u32 %v3335, 7
        %v3337 = vsub.s32 %v3334, %v3336
        %v3338 = vrot.slane %v3255, %v3337
        %vm3339 = vcmask 392512
        %v3340 = vsel %vm3339, %v3338, %v3333
        %v3341 = vadd.s32 %v486, 4294967248
        %v3342 = vlaneseq
        %v3343 = vshrl.u32 %v3342, 7
        %v3344 = vsub.s32 %v3341, %v3343
        %v3345 = vrot.slane %v3258, %v3344
        %vm3346 = vcmask 458112
        %v3347 = vsel %vm3346, %v3345, %v3340
        %v3348 = vadd.s32 %v486, 4294967240
        %v3349 = vlaneseq
        %v3350 = vshrl.u32 %v3349, 7
        %v3351 = vsub.s32 %v3348, %v3350
        %v3352 = vrot.slane %v3261, %v3351
        %vm3353 = vcmask 523712
        %v3354 = vsel %vm3353, %v3352, %v3347
        %v3355 = vadd.s32 %v486, 4294967232
        %v3356 = vlaneseq
        %v3357 = vshrl.u32 %v3356, 7
        %v3358 = vsub.s32 %v3355, %v3357
        %v3359 = vrot.slane %v3264, %v3358
        %vm3360 = vcmask 589312
        %v3361 = vsel %vm3360, %v3359, %v3354
        %v3362 = vadd.s32 %v486, 4294967224
        %v3363 = vlaneseq
        %v3364 = vshrl.u32 %v3363, 7
        %v3365 = vsub.s32 %v3362, %v3364
        %v3366 = vrot.slane %v3267, %v3365
        %vm3367 = vcmask 654912
        %v3368 = vsel %vm3367, %v3366, %v3361
        %v3369 = vadd.s32 %v486, 4294967216
        %v3370 = vlaneseq
        %v3371 = vshrl.u32 %v3370, 7
        %v3372 = vsub.s32 %v3369, %v3371
        %v3373 = vrot.slane %v3270, %v3372
        %vm3374 = vcmask 720512
        %v3375 = vsel %vm3374, %v3373, %v3368
        %v3376 = vadd.s32 %v486, 4294967208
        %v3377 = vlaneseq
        %v3378 = vshrl.u32 %v3377, 7
        %v3379 = vsub.s32 %v3376, %v3378
        %v3380 = vrot.slane %v3273, %v3379
        %vm3381 = vcmask 786112
        %v3382 = vsel %vm3381, %v3380, %v3375
        %v3383 = vadd.s32 %v486, 4294967200
        %v3384 = vlaneseq
        %v3385 = vshrl.u32 %v3384, 7
        %v3386 = vsub.s32 %v3383, %v3385
        %v3387 = vrot.slane %v3276, %v3386
        %vm3388 = vcmask 851712
        %v3389 = vsel %vm3388, %v3387, %v3382
        %v3390 = vadd.s32 %v486, 4294967192
        %v3391 = vlaneseq
        %v3392 = vshrl.u32 %v3391, 7
        %v3393 = vsub.s32 %v3390, %v3392
        %v3394 = vrot.slane %v3279, %v3393
        %vm3395 = vcmask 917312
        %v3396 = vsel %vm3395, %v3394, %v3389
        %v3397 = vadd.s32 %v486, 4294967184
        %v3398 = vlaneseq
        %v3399 = vshrl.u32 %v3398, 7
        %v3400 = vsub.s32 %v3397, %v3399
        %v3401 = vrot.slane %v3282, %v3400
        %vm3402 = vcmask 982912
        %v3403 = vsel %vm3402, %v3401, %v3396
        %v3404 = vadd.s32 %v486, 4294967176
        %v3405 = vlaneseq
        %v3406 = vshrl.u32 %v3405, 7
        %v3407 = vsub.s32 %v3404, %v3406
        %v3408 = vrot.slane %v3285, %v3407
        %vm3409 = vcmask 1048512
        %v3410 = vsel %vm3409, %v3408, %v3403
        %3412 = vst [vmem:[%s443] sm:$0x1] %v3410
        %s3413 = scalar_lea.vmem %s397, 64 [#allocation2]
        %v3414 = vld [vmem:[%s3413] sm:$0xf]
        %v3415 = vld [vmem:[%s3413 + $0x4] sm:$0xf]
        %v3416 = vld [vmem:[%s3413 + $0x8] sm:$0xf]
        %v3417 = vld [vmem:[%s3413 + $0xc] sm:$0xf]
        %v3418 = vld [vmem:[%s3413 + $0x10] sm:$0xf]
        %v3419 = vld [vmem:[%s3413 + $0x14] sm:$0xf]
        %v3420 = vld [vmem:[%s3413 + $0x18] sm:$0xf]
        %v3421 = vld [vmem:[%s3413 + $0x1c] sm:$0xf]
        %v3422 = vld [vmem:[%s3413 + $0x20] sm:$0xf]
        %v3423 = vld [vmem:[%s3413 + $0x24] sm:$0xf]
        %v3424 = vld [vmem:[%s3413 + $0x28] sm:$0xf]
        %v3425 = vld [vmem:[%s3413 + $0x2c] sm:$0xf]
        %v3426 = vld [vmem:[%s3413 + $0x30] sm:$0xf]
        %v3427 = vld [vmem:[%s3413 + $0x34] sm:$0xf]
        %v3428 = vld [vmem:[%s3413 + $0x38] sm:$0xf]
        %v3429 = vld [vmem:[%s3413 + $0x3c] sm:$0xf]
        %v3430 = vunpack.c.l.bf16 %v3414
        %v3431 = vunpack.c.l.bf16 %v3415
        %v3432 = vunpack.c.l.bf16 %v3416
        %v3433 = vunpack.c.l.bf16 %v3417
        %v3434 = vunpack.c.l.bf16 %v3418
        %v3435 = vunpack.c.l.bf16 %v3419
        %v3436 = vunpack.c.l.bf16 %v3420
        %v3437 = vunpack.c.l.bf16 %v3421
        %v3438 = vunpack.c.l.bf16 %v3422
        %v3439 = vunpack.c.l.bf16 %v3423
        %v3440 = vunpack.c.l.bf16 %v3424
        %v3441 = vunpack.c.l.bf16 %v3425
        %v3442 = vunpack.c.l.bf16 %v3426
        %v3443 = vunpack.c.l.bf16 %v3427
        %v3444 = vunpack.c.l.bf16 %v3428
        %v3445 = vunpack.c.l.bf16 %v3429
        %v3446 = vmul.f32 %v3174, %v3430
        %v3447 = vmul.f32 %v3175, %v3431
        %v3448 = vmul.f32 %v3176, %v3432
        %v3449 = vmul.f32 %v3177, %v3433
        %v3450 = vmul.f32 %v3178, %v3434
        %v3451 = vmul.f32 %v3179, %v3435
        %v3452 = vmul.f32 %v3180, %v3436
        %v3453 = vmul.f32 %v3181, %v3437
        %v3454 = vmul.f32 %v3182, %v3438
        %v3455 = vmul.f32 %v3183, %v3439
        %v3456 = vmul.f32 %v3184, %v3440
        %v3457 = vmul.f32 %v3185, %v3441
        %v3458 = vmul.f32 %v3186, %v3442
        %v3459 = vmul.f32 %v3187, %v3443
        %v3460 = vmul.f32 %v3188, %v3444
        %v3461 = vmul.f32 %v3189, %v3445
        %v3462 = vsel %vm544, %v3446, 0.0
        %3463 = vadd.xlane.f32.xlu0 %v3462
        %v3464 = vpop.xlane.xlu0 %3463
        %v3465 = vsel %vm544, %v3447, 0.0
        %3466 = vadd.xlane.f32.xlu0 %v3465
        %v3467 = vpop.xlane.xlu0 %3466
        %v3468 = vsel %vm544, %v3448, 0.0
        %3469 = vadd.xlane.f32.xlu0 %v3468
        %v3470 = vpop.xlane.xlu0 %3469
        %v3471 = vsel %vm544, %v3449, 0.0
        %3472 = vadd.xlane.f32.xlu0 %v3471
        %v3473 = vpop.xlane.xlu0 %3472
        %v3474 = vsel %vm544, %v3450, 0.0
        %3475 = vadd.xlane.f32.xlu0 %v3474
        %v3476 = vpop.xlane.xlu0 %3475
        %v3477 = vsel %vm544, %v3451, 0.0
        %3478 = vadd.xlane.f32.xlu0 %v3477
        %v3479 = vpop.xlane.xlu0 %3478
        %v3480 = vsel %vm544, %v3452, 0.0
        %3481 = vadd.xlane.f32.xlu0 %v3480
        %v3482 = vpop.xlane.xlu0 %3481
        %v3483 = vsel %vm544, %v3453, 0.0
        %3484 = vadd.xlane.f32.xlu0 %v3483
        %v3485 = vpop.xlane.xlu0 %3484
        %v3486 = vsel %vm544, %v3454, 0.0
        %3487 = vadd.xlane.f32.xlu0 %v3486
        %v3488 = vpop.xlane.xlu0 %3487
        %v3489 = vsel %vm544, %v3455, 0.0
        %3490 = vadd.xlane.f32.xlu0 %v3489
        %v3491 = vpop.xlane.xlu0 %3490
        %v3492 = vsel %vm544, %v3456, 0.0
        %3493 = vadd.xlane.f32.xlu0 %v3492
        %v3494 = vpop.xlane.xlu0 %3493
        %v3495 = vsel %vm544, %v3457, 0.0
        %3496 = vadd.xlane.f32.xlu0 %v3495
        %v3497 = vpop.xlane.xlu0 %3496
        %v3498 = vsel %vm544, %v3458, 0.0
        %3499 = vadd.xlane.f32.xlu0 %v3498
        %v3500 = vpop.xlane.xlu0 %3499
        %v3501 = vsel %vm544, %v3459, 0.0
        %3502 = vadd.xlane.f32.xlu0 %v3501
        %v3503 = vpop.xlane.xlu0 %3502
        %v3504 = vsel %vm544, %v3460, 0.0
        %3505 = vadd.xlane.f32.xlu0 %v3504
        %v3506 = vpop.xlane.xlu0 %3505
        %v3507 = vsel %vm544, %v3461, 0.0
        %3508 = vadd.xlane.f32.xlu0 %v3507
        %v3509 = vpop.xlane.xlu0 %3508
        %v3526 = vlaneseq
        %v3527 = vshrl.u32 %v3526, 7
        %v3528 = vsub.s32 %v486, %v3527
        %v3529 = vrot.slane %v3464, %v3528
        %v3530 = vlaneseq
        %v3531 = vshrl.u32 %v3530, 7
        %v3532 = vsub.s32 %v3306, %v3531
        %v3533 = vrot.slane %v3467, %v3532
        %v3534 = vsel %vm3311, %v3533, %v3529
        %v3535 = vlaneseq
        %v3536 = vshrl.u32 %v3535, 7
        %v3537 = vsub.s32 %v3313, %v3536
        %v3538 = vrot.slane %v3470, %v3537
        %v3539 = vsel %vm3318, %v3538, %v3534
        %v3540 = vlaneseq
        %v3541 = vshrl.u32 %v3540, 7
        %v3542 = vsub.s32 %v3320, %v3541
        %v3543 = vrot.slane %v3473, %v3542
        %v3544 = vsel %vm3325, %v3543, %v3539
        %v3545 = vlaneseq
        %v3546 = vshrl.u32 %v3545, 7
        %v3547 = vsub.s32 %v3327, %v3546
        %v3548 = vrot.slane %v3476, %v3547
        %v3549 = vsel %vm3332, %v3548, %v3544
        %v3550 = vlaneseq
        %v3551 = vshrl.u32 %v3550, 7
        %v3552 = vsub.s32 %v3334, %v3551
        %v3553 = vrot.slane %v3479, %v3552
        %v3554 = vsel %vm3339, %v3553, %v3549
        %v3555 = vlaneseq
        %v3556 = vshrl.u32 %v3555, 7
        %v3557 = vsub.s32 %v3341, %v3556
        %v3558 = vrot.slane %v3482, %v3557
        %v3559 = vsel %vm3346, %v3558, %v3554
        %v3560 = vlaneseq
        %v3561 = vshrl.u32 %v3560, 7
        %v3562 = vsub.s32 %v3348, %v3561
        %v3563 = vrot.slane %v3485, %v3562
        %v3564 = vsel %vm3353, %v3563, %v3559
        %v3565 = vlaneseq
        %v3566 = vshrl.u32 %v3565, 7
        %v3567 = vsub.s32 %v3355, %v3566
        %v3568 = vrot.slane %v3488, %v3567
        %v3569 = vsel %vm3360, %v3568, %v3564
        %v3570 = vlaneseq
        %v3571 = vshrl.u32 %v3570, 7
        %v3572 = vsub.s32 %v3362, %v3571
        %v3573 = vrot.slane %v3491, %v3572
        %v3574 = vsel %vm3367, %v3573, %v3569
        %v3575 = vlaneseq
        %v3576 = vshrl.u32 %v3575, 7
        %v3577 = vsub.s32 %v3369, %v3576
        %v3578 = vrot.slane %v3494, %v3577
        %v3579 = vsel %vm3374, %v3578, %v3574
        %v3580 = vlaneseq
        %v3581 = vshrl.u32 %v3580, 7
        %v3582 = vsub.s32 %v3376, %v3581
        %v3583 = vrot.slane %v3497, %v3582
        %v3584 = vsel %vm3381, %v3583, %v3579
        %v3585 = vlaneseq
        %v3586 = vshrl.u32 %v3585, 7
        %v3587 = vsub.s32 %v3383, %v3586
        %v3588 = vrot.slane %v3500, %v3587
        %v3589 = vsel %vm3388, %v3588, %v3584
        %v3590 = vlaneseq
        %v3591 = vshrl.u32 %v3590, 7
        %v3592 = vsub.s32 %v3390, %v3591
        %v3593 = vrot.slane %v3503, %v3592
        %v3594 = vsel %vm3395, %v3593, %v3589
        %v3595 = vlaneseq
        %v3596 = vshrl.u32 %v3595, 7
        %v3597 = vsub.s32 %v3397, %v3596
        %v3598 = vrot.slane %v3506, %v3597
        %v3599 = vsel %vm3402, %v3598, %v3594
        %v3600 = vlaneseq
        %v3601 = vshrl.u32 %v3600, 7
        %v3602 = vsub.s32 %v3404, %v3601
        %v3603 = vrot.slane %v3509, %v3602
        %v3604 = vsel %vm3409, %v3603, %v3599
        %3606 = vst [vmem:[%s443 + $0x1] sm:$0x1] %v3604
        %s3607 = scalar_lea.vmem %s397, 128 [#allocation2]
        %v3608 = vld [vmem:[%s3607] sm:$0xf]
        %v3609 = vld [vmem:[%s3607 + $0x4] sm:$0xf]
        %v3610 = vld [vmem:[%s3607 + $0x8] sm:$0xf]
        %v3611 = vld [vmem:[%s3607 + $0xc] sm:$0xf]
        %v3612 = vld [vmem:[%s3607 + $0x10] sm:$0xf]
        %v3613 = vld [vmem:[%s3607 + $0x14] sm:$0xf]
        %v3614 = vld [vmem:[%s3607 + $0x18] sm:$0xf]
        %v3615 = vld [vmem:[%s3607 + $0x1c] sm:$0xf]
        %v3616 = vld [vmem:[%s3607 + $0x20] sm:$0xf]
        %v3617 = vld [vmem:[%s3607 + $0x24] sm:$0xf]
        %v3618 = vld [vmem:[%s3607 + $0x28] sm:$0xf]
        %v3619 = vld [vmem:[%s3607 + $0x2c] sm:$0xf]
        %v3620 = vld [vmem:[%s3607 + $0x30] sm:$0xf]
        %v3621 = vld [vmem:[%s3607 + $0x34] sm:$0xf]
        %v3622 = vld [vmem:[%s3607 + $0x38] sm:$0xf]
        %v3623 = vld [vmem:[%s3607 + $0x3c] sm:$0xf]
        %v3624 = vunpack.c.l.bf16 %v3608
        %v3625 = vunpack.c.l.bf16 %v3609
        %v3626 = vunpack.c.l.bf16 %v3610
        %v3627 = vunpack.c.l.bf16 %v3611
        %v3628 = vunpack.c.l.bf16 %v3612
        %v3629 = vunpack.c.l.bf16 %v3613
        %v3630 = vunpack.c.l.bf16 %v3614
        %v3631 = vunpack.c.l.bf16 %v3615
        %v3632 = vunpack.c.l.bf16 %v3616
        %v3633 = vunpack.c.l.bf16 %v3617
        %v3634 = vunpack.c.l.bf16 %v3618
        %v3635 = vunpack.c.l.bf16 %v3619
        %v3636 = vunpack.c.l.bf16 %v3620
        %v3637 = vunpack.c.l.bf16 %v3621
        %v3638 = vunpack.c.l.bf16 %v3622
        %v3639 = vunpack.c.l.bf16 %v3623
        %v3640 = vmul.f32 %v3174, %v3624
        %v3641 = vmul.f32 %v3175, %v3625
        %v3642 = vmul.f32 %v3176, %v3626
        %v3643 = vmul.f32 %v3177, %v3627
        %v3644 = vmul.f32 %v3178, %v3628
        %v3645 = vmul.f32 %v3179, %v3629
        %v3646 = vmul.f32 %v3180, %v3630
        %v3647 = vmul.f32 %v3181, %v3631
        %v3648 = vmul.f32 %v3182, %v3632
        %v3649 = vmul.f32 %v3183, %v3633
        %v3650 = vmul.f32 %v3184, %v3634
        %v3651 = vmul.f32 %v3185, %v3635
        %v3652 = vmul.f32 %v3186, %v3636
        %v3653 = vmul.f32 %v3187, %v3637
        %v3654 = vmul.f32 %v3188, %v3638
        %v3655 = vmul.f32 %v3189, %v3639
        %v3656 = vsel %vm544, %v3640, 0.0
        %3657 = vadd.xlane.f32.xlu0 %v3656
        %v3658 = vpop.xlane.xlu0 %3657
        %v3659 = vsel %vm544, %v3641, 0.0
        %3660 = vadd.xlane.f32.xlu0 %v3659
        %v3661 = vpop.xlane.xlu0 %3660
        %v3662 = vsel %vm544, %v3642, 0.0
        %3663 = vadd.xlane.f32.xlu0 %v3662
        %v3664 = vpop.xlane.xlu0 %3663
        %v3665 = vsel %vm544, %v3643, 0.0
        %3666 = vadd.xlane.f32.xlu0 %v3665
        %v3667 = vpop.xlane.xlu0 %3666
        %v3668 = vsel %vm544, %v3644, 0.0
        %3669 = vadd.xlane.f32.xlu0 %v3668
        %v3670 = vpop.xlane.xlu0 %3669
        %v3671 = vsel %vm544, %v3645, 0.0
        %3672 = vadd.xlane.f32.xlu0 %v3671
        %v3673 = vpop.xlane.xlu0 %3672
        %v3674 = vsel %vm544, %v3646, 0.0
        %3675 = vadd.xlane.f32.xlu0 %v3674
        %v3676 = vpop.xlane.xlu0 %3675
        %v3677 = vsel %vm544, %v3647, 0.0
        %3678 = vadd.xlane.f32.xlu0 %v3677
        %v3679 = vpop.xlane.xlu0 %3678
        %v3680 = vsel %vm544, %v3648, 0.0
        %3681 = vadd.xlane.f32.xlu0 %v3680
        %v3682 = vpop.xlane.xlu0 %3681
        %v3683 = vsel %vm544, %v3649, 0.0
        %3684 = vadd.xlane.f32.xlu0 %v3683
        %v3685 = vpop.xlane.xlu0 %3684
        %v3686 = vsel %vm544, %v3650, 0.0
        %3687 = vadd.xlane.f32.xlu0 %v3686
        %v3688 = vpop.xlane.xlu0 %3687
        %v3689 = vsel %vm544, %v3651, 0.0
        %3690 = vadd.xlane.f32.xlu0 %v3689
        %v3691 = vpop.xlane.xlu0 %3690
        %v3692 = vsel %vm544, %v3652, 0.0
        %3693 = vadd.xlane.f32.xlu0 %v3692
        %v3694 = vpop.xlane.xlu0 %3693
        %v3695 = vsel %vm544, %v3653, 0.0
        %3696 = vadd.xlane.f32.xlu0 %v3695
        %v3697 = vpop.xlane.xlu0 %3696
        %v3698 = vsel %vm544, %v3654, 0.0
        %3699 = vadd.xlane.f32.xlu0 %v3698
        %v3700 = vpop.xlane.xlu0 %3699
        %v3701 = vsel %vm544, %v3655, 0.0
        %3702 = vadd.xlane.f32.xlu0 %v3701
        %v3703 = vpop.xlane.xlu0 %3702
        %v3720 = vlaneseq
        %v3721 = vshrl.u32 %v3720, 7
        %v3722 = vsub.s32 %v486, %v3721
        %v3723 = vrot.slane %v3658, %v3722
        %v3724 = vlaneseq
        %v3725 = vshrl.u32 %v3724, 7
        %v3726 = vsub.s32 %v3306, %v3725
        %v3727 = vrot.slane %v3661, %v3726
        %v3728 = vsel %vm3311, %v3727, %v3723
        %v3729 = vlaneseq
        %v3730 = vshrl.u32 %v3729, 7
        %v3731 = vsub.s32 %v3313, %v3730
        %v3732 = vrot.slane %v3664, %v3731
        %v3733 = vsel %vm3318, %v3732, %v3728
        %v3734 = vlaneseq
        %v3735 = vshrl.u32 %v3734, 7
        %v3736 = vsub.s32 %v3320, %v3735
        %v3737 = vrot.slane %v3667, %v3736
        %v3738 = vsel %vm3325, %v3737, %v3733
        %v3739 = vlaneseq
        %v3740 = vshrl.u32 %v3739, 7
        %v3741 = vsub.s32 %v3327, %v3740
        %v3742 = vrot.slane %v3670, %v3741
        %v3743 = vsel %vm3332, %v3742, %v3738
        %v3744 = vlaneseq
        %v3745 = vshrl.u32 %v3744, 7
        %v3746 = vsub.s32 %v3334, %v3745
        %v3747 = vrot.slane %v3673, %v3746
        %v3748 = vsel %vm3339, %v3747, %v3743
        %v3749 = vlaneseq
        %v3750 = vshrl.u32 %v3749, 7
        %v3751 = vsub.s32 %v3341, %v3750
        %v3752 = vrot.slane %v3676, %v3751
        %v3753 = vsel %vm3346, %v3752, %v3748
        %v3754 = vlaneseq
        %v3755 = vshrl.u32 %v3754, 7
        %v3756 = vsub.s32 %v3348, %v3755
        %v3757 = vrot.slane %v3679, %v3756
        %v3758 = vsel %vm3353, %v3757, %v3753
        %v3759 = vlaneseq
        %v3760 = vshrl.u32 %v3759, 7
        %v3761 = vsub.s32 %v3355, %v3760
        %v3762 = vrot.slane %v3682, %v3761
        %v3763 = vsel %vm3360, %v3762, %v3758
        %v3764 = vlaneseq
        %v3765 = vshrl.u32 %v3764, 7
        %v3766 = vsub.s32 %v3362, %v3765
        %v3767 = vrot.slane %v3685, %v3766
        %v3768 = vsel %vm3367, %v3767, %v3763
        %v3769 = vlaneseq
        %v3770 = vshrl.u32 %v3769, 7
        %v3771 = vsub.s32 %v3369, %v3770
        %v3772 = vrot.slane %v3688, %v3771
        %v3773 = vsel %vm3374, %v3772, %v3768
        %v3774 = vlaneseq
        %v3775 = vshrl.u32 %v3774, 7
        %v3776 = vsub.s32 %v3376, %v3775
        %v3777 = vrot.slane %v3691, %v3776
        %v3778 = vsel %vm3381, %v3777, %v3773
        %v3779 = vlaneseq
        %v3780 = vshrl.u32 %v3779, 7
        %v3781 = vsub.s32 %v3383, %v3780
        %v3782 = vrot.slane %v3694, %v3781
        %v3783 = vsel %vm3388, %v3782, %v3778
        %v3784 = vlaneseq
        %v3785 = vshrl.u32 %v3784, 7
        %v3786 = vsub.s32 %v3390, %v3785
        %v3787 = vrot.slane %v3697, %v3786
        %v3788 = vsel %vm3395, %v3787, %v3783
        %v3789 = vlaneseq
        %v3790 = vshrl.u32 %v3789, 7
        %v3791 = vsub.s32 %v3397, %v3790
        %v3792 = vrot.slane %v3700, %v3791
        %v3793 = vsel %vm3402, %v3792, %v3788
        %v3794 = vlaneseq
        %v3795 = vshrl.u32 %v3794, 7
        %v3796 = vsub.s32 %v3404, %v3795
        %v3797 = vrot.slane %v3703, %v3796
        %v3798 = vsel %vm3409, %v3797, %v3793
        %3800 = vst [vmem:[%s443 + $0x2] sm:$0x1] %v3798
        %v3801 = vmul.f32 %v3174, %v444
        %v3802 = vmul.f32 %v3175, %v445
        %v3803 = vmul.f32 %v3176, %v446
        %v3804 = vmul.f32 %v3177, %v447
        %v3805 = vmul.f32 %v3178, %v448
        %v3806 = vmul.f32 %v3179, %v449
        %v3807 = vmul.f32 %v3180, %v450
        %v3808 = vmul.f32 %v3181, %v451
        %v3809 = vmul.f32 %v3182, %v452
        %v3810 = vmul.f32 %v3183, %v453
        %v3811 = vmul.f32 %v3184, %v454
        %v3812 = vmul.f32 %v3185, %v455
        %v3813 = vmul.f32 %v3186, %v456
        %v3814 = vmul.f32 %v3187, %v457
        %v3815 = vmul.f32 %v3188, %v458
        %v3816 = vmul.f32 %v3189, %v459
        %v3817 = vsel %vm544, %v3801, 0.0
        %3818 = vadd.xlane.f32.xlu0 %v3817
        %v3819 = vpop.xlane.xlu0 %3818
        %v3820 = vsel %vm544, %v3802, 0.0
        %3821 = vadd.xlane.f32.xlu0 %v3820
        %v3822 = vpop.xlane.xlu0 %3821
        %v3823 = vsel %vm544, %v3803, 0.0
        %3824 = vadd.xlane.f32.xlu0 %v3823
        %v3825 = vpop.xlane.xlu0 %3824
        %v3826 = vsel %vm544, %v3804, 0.0
        %3827 = vadd.xlane.f32.xlu0 %v3826
        %v3828 = vpop.xlane.xlu0 %3827
        %v3829 = vsel %vm544, %v3805, 0.0
        %3830 = vadd.xlane.f32.xlu0 %v3829
        %v3831 = vpop.xlane.xlu0 %3830
        %v3832 = vsel %vm544, %v3806, 0.0
        %3833 = vadd.xlane.f32.xlu0 %v3832
        %v3834 = vpop.xlane.xlu0 %3833
        %v3835 = vsel %vm544, %v3807, 0.0
        %3836 = vadd.xlane.f32.xlu0 %v3835
        %v3837 = vpop.xlane.xlu0 %3836
        %v3838 = vsel %vm544, %v3808, 0.0
        %3839 = vadd.xlane.f32.xlu0 %v3838
        %v3840 = vpop.xlane.xlu0 %3839
        %v3841 = vsel %vm544, %v3809, 0.0
        %3842 = vadd.xlane.f32.xlu0 %v3841
        %v3843 = vpop.xlane.xlu0 %3842
        %v3844 = vsel %vm544, %v3810, 0.0
        %3845 = vadd.xlane.f32.xlu0 %v3844
        %v3846 = vpop.xlane.xlu0 %3845
        %v3847 = vsel %vm544, %v3811, 0.0
        %3848 = vadd.xlane.f32.xlu0 %v3847
        %v3849 = vpop.xlane.xlu0 %3848
        %v3850 = vsel %vm544, %v3812, 0.0
        %3851 = vadd.xlane.f32.xlu0 %v3850
        %v3852 = vpop.xlane.xlu0 %3851
        %v3853 = vsel %vm544, %v3813, 0.0
        %3854 = vadd.xlane.f32.xlu0 %v3853
        %v3855 = vpop.xlane.xlu0 %3854
        %v3856 = vsel %vm544, %v3814, 0.0
        %3857 = vadd.xlane.f32.xlu0 %v3856
        %v3858 = vpop.xlane.xlu0 %3857
        %v3859 = vsel %vm544, %v3815, 0.0
        %3860 = vadd.xlane.f32.xlu0 %v3859
        %v3861 = vpop.xlane.xlu0 %3860
        %v3862 = vsel %vm544, %v3816, 0.0
        %3863 = vadd.xlane.f32.xlu0 %v3862
        %v3864 = vpop.xlane.xlu0 %3863
        %v3881 = vlaneseq
        %v3882 = vshrl.u32 %v3881, 7
        %v3883 = vsub.s32 %v486, %v3882
        %v3884 = vrot.slane %v3819, %v3883
        %v3885 = vlaneseq
        %v3886 = vshrl.u32 %v3885, 7
        %v3887 = vsub.s32 %v3306, %v3886
        %v3888 = vrot.slane %v3822, %v3887
        %v3889 = vsel %vm3311, %v3888, %v3884
        %v3890 = vlaneseq
        %v3891 = vshrl.u32 %v3890, 7
        %v3892 = vsub.s32 %v3313, %v3891
        %v3893 = vrot.slane %v3825, %v3892
        %v3894 = vsel %vm3318, %v3893, %v3889
        %v3895 = vlaneseq
        %v3896 = vshrl.u32 %v3895, 7
        %v3897 = vsub.s32 %v3320, %v3896
        %v3898 = vrot.slane %v3828, %v3897
        %v3899 = vsel %vm3325, %v3898, %v3894
        %v3900 = vlaneseq
        %v3901 = vshrl.u32 %v3900, 7
        %v3902 = vsub.s32 %v3327, %v3901
        %v3903 = vrot.slane %v3831, %v3902
        %v3904 = vsel %vm3332, %v3903, %v3899
        %v3905 = vlaneseq
        %v3906 = vshrl.u32 %v3905, 7
        %v3907 = vsub.s32 %v3334, %v3906
        %v3908 = vrot.slane %v3834, %v3907
        %v3909 = vsel %vm3339, %v3908, %v3904
        %v3910 = vlaneseq
        %v3911 = vshrl.u32 %v3910, 7
        %v3912 = vsub.s32 %v3341, %v3911
        %v3913 = vrot.slane %v3837, %v3912
        %v3914 = vsel %vm3346, %v3913, %v3909
        %v3915 = vlaneseq
        %v3916 = vshrl.u32 %v3915, 7
        %v3917 = vsub.s32 %v3348, %v3916
        %v3918 = vrot.slane %v3840, %v3917
        %v3919 = vsel %vm3353, %v3918, %v3914
        %v3920 = vlaneseq
        %v3921 = vshrl.u32 %v3920, 7
        %v3922 = vsub.s32 %v3355, %v3921
        %v3923 = vrot.slane %v3843, %v3922
        %v3924 = vsel %vm3360, %v3923, %v3919
        %v3925 = vlaneseq
        %v3926 = vshrl.u32 %v3925, 7
        %v3927 = vsub.s32 %v3362, %v3926
        %v3928 = vrot.slane %v3846, %v3927
        %v3929 = vsel %vm3367, %v3928, %v3924
        %v3930 = vlaneseq
        %v3931 = vshrl.u32 %v3930, 7
        %v3932 = vsub.s32 %v3369, %v3931
        %v3933 = vrot.slane %v3849, %v3932
        %v3934 = vsel %vm3374, %v3933, %v3929
        %v3935 = vlaneseq
        %v3936 = vshrl.u32 %v3935, 7
        %v3937 = vsub.s32 %v3376, %v3936
        %v3938 = vrot.slane %v3852, %v3937
        %v3939 = vsel %vm3381, %v3938, %v3934
        %v3940 = vlaneseq
        %v3941 = vshrl.u32 %v3940, 7
        %v3942 = vsub.s32 %v3383, %v3941
        %v3943 = vrot.slane %v3855, %v3942
        %v3944 = vsel %vm3388, %v3943, %v3939
        %v3945 = vlaneseq
        %v3946 = vshrl.u32 %v3945, 7
        %v3947 = vsub.s32 %v3390, %v3946
        %v3948 = vrot.slane %v3858, %v3947
        %v3949 = vsel %vm3395, %v3948, %v3944
        %v3950 = vlaneseq
        %v3951 = vshrl.u32 %v3950, 7
        %v3952 = vsub.s32 %v3397, %v3951
        %v3953 = vrot.slane %v3861, %v3952
        %v3954 = vsel %vm3402, %v3953, %v3949
        %v3955 = vlaneseq
        %v3956 = vshrl.u32 %v3955, 7
        %v3957 = vsub.s32 %v3404, %v3956
        %v3958 = vrot.slane %v3864, %v3957
        %v3959 = vsel %vm3409, %v3958, %v3954
        %3961 = vst [vmem:[%s443 + $0x3] sm:$0x1] %v3959
        %p3962 = scmp.lt.s32.totalorder %s14, 1
        %s3963 = scalar_select %p3962, %s14, 1
        %s3964 = smul.addr %s3963, 4
        %s3965 = scalar_lea.vmem %s3, %s3964
        // Predicated region
        $region74: #{volume_render.1} parent=68 // pred_check
          %p3966 = pneg %p110
        $region75: #{volume_render.1} parent=68 // pred_check_branch
          %3968 = sbr.rel (%p3966) target = $region77
        $region76: #{volume_render.1} parent=68 // pred_region
          _
        $region77: #{volume_render.1} parent=68 // pred_fallthru
          _
      $region69: #{volume_render.1} parent=5 // pred_fallthru
        _
      %p3969 = scmp.le.s32.totalorder 2, %s9
      // Predicated region
      $region78: #{volume_render.1} parent=5 // pred_check
        %p3970 = pneg %p3969
      $region79: #{volume_render.1} parent=5 // pred_check_branch
        %3972 = sbr.rel (%p3970) target = $region81
      $region80: #{volume_render.1} parent=5 // pred_region
        %s3973 = ssub.s32 %s9, 2
        // Predicated region
        $region82: #{volume_render.1} parent=80 // pred_check
          %p3974 = pneg %p116
        $region83: #{volume_render.1} parent=80 // pred_check_branch
          %3976 = sbr.rel (%p3974) target = $region85
        $region84: #{volume_render.1} parent=80 // pred_region
          %p3977 = scmp.lt.s32.totalorder %s15, 1
          %s3978 = scalar_select %p3977, %s15, 1
          %s3979 = smul.addr %s3978, 4
          %s3980 = scalar_lea.vmem %s3, %s3979
        $region85: #{volume_render.1} parent=80 // pred_fallthru
          _
      $region81: #{volume_render.1} parent=5 // pred_fallthru
        _
    $region6: #{volume_render.1} parent=1 // loop_footer
      %s13 = sadd.s32 1, %s9
    $region7: #{volume_render.1} parent=1 // loop_footer_branch
      %8 = sbr.rel target = $region3
    $region8: #{volume_render.1} parent=1 // loop_exit
      _

</llo_original>
